<compile_context>
chip_gen: v6e
topology: v6e:2x2x1
jax: 0.10.0
libtpu: 0.0.40
codegen_flags: <defaults>
</compile_context>

<pallas_src>
import jax
import jax.numpy as jnp
from jax.experimental import pallas as pl
from jax.experimental.pallas import tpu as pltpu


def _sigmoid_via_tanh(x):
    # sigmoid(x) == 0.5 * (tanh(0.5 * x) + 1): cheaper + more robust than exp/divide.
    return 0.5 * jnp.tanh(0.5 * x) + 0.5


# Active taps of the masked 3x3 vertical conv, in the zero-padded (top + left/
# right) frame: ky in {0, 1} (row above + current row), kx in {0, 1, 2}.
# Packed-weight index is t = ky * 3 + kx (see pack_vertical_weights).
_V_TAPS = ((0, 0), (0, 1), (0, 2), (1, 0), (1, 1), (1, 2))


# ----------------------------------------------------------------------------
# Fused kernel: whole GatedMaskedConv block for one batch element.
# ----------------------------------------------------------------------------
def gated_masked_conv_kernel(v_ref, h_ref, wv_ref, bv_ref, whx_ref, bhx_ref,
                             wh1_ref, bh1_ref, out_ref, vp_ref, hp_ref):
    # v_ref  : (1, H, W, C)   vertical stack, unpadded NHWC, f32
    # h_ref  : (1, H, W, C)   horizontal stack, unpadded NHWC, f32
    # wv_ref : (6, C, 2C)     bf16 packed masked-3x3 taps, index ky*3+kx
    # bv_ref : (1, 2C)        f32
    # whx_ref: (4C, 2C)       bf16 rows = [h left tap | h center tap | v->h 1x1]
    # bhx_ref: (1, 2C)        f32, bh + bv2h folded
    # wh1_ref: (C, C)         bf16 output 1x1
    # bh1_ref: (1, C)         f32
    # out_ref: (1, H, W, 2C)  f32; lanes [:C] = v_out, lanes [C:] = h_out
    # vp_ref : (H+1, W+2, C)  f32 scratch: zero halo (top + left/right) around v
    # hp_ref : (H, W+1, C)    f32 scratch: zero halo (left) around h
    H, W, C = v_ref.shape[1], v_ref.shape[2], v_ref.shape[3]
    HW = H * W
    f32, bf16 = jnp.float32, jnp.bfloat16

    v3 = v_ref[...].reshape(H, W, C)
    h3 = h_ref[...].reshape(H, W, C)

    # ---- stage halo-padded copies in VMEM (replaces wrapper-side jnp.pad) ---
    vp_ref[...] = jnp.zeros_like(vp_ref)          # clears the 1-pixel halo
    vp_ref[1:, 1:W + 1, :] = v3
    hp_ref[...] = jnp.zeros_like(hp_ref)
    hp_ref[:, 1:, :] = h3

    # ---- vertical masked 3x3: six per-tap (HW,C)x(C,2C) MXU matmuls ---------
    v_feat = jnp.broadcast_to(bv_ref[...], (HW, 2 * C))
    for t, (ky, kx) in enumerate(_V_TAPS):
        tap = vp_ref[ky:ky + H, kx:kx + W, :].reshape(HW, C).astype(bf16)
        v_feat = v_feat + jnp.dot(tap, wv_ref[t], preferred_element_type=f32)

    v_out = jnp.tanh(v_feat[:, :C]) * _sigmoid_via_tanh(v_feat[:, C:])

    # ---- horizontal masked 1x3 fused with the v->h 1x1: one K=4C matmul -----
    # v_feat (including its bias, as in the PyTorch graph) is part of the
    # fused input; bh + bv2h are folded into bhx.
    h_left = hp_ref[:, 0:W, :].reshape(HW, C).astype(bf16)      # h[y, x-1]
    h_center = h3.reshape(HW, C).astype(bf16)                   # h[y, x]
    hx = jnp.concatenate([h_left, h_center, v_feat.astype(bf16)], axis=-1)
    h_feat = jnp.dot(hx, whx_ref[...], preferred_element_type=f32) + bhx_ref[...]

    h_act = jnp.tanh(h_feat[:, :C]) * _sigmoid_via_tanh(h_feat[:, C:])

    # ---- output 1x1 conv + residual -----------------------------------------
    h_out = (jnp.dot(h_act.astype(bf16), wh1_ref[...], preferred_element_type=f32)
             + bh1_ref[...] + h3.reshape(HW, C))

    # ---- single lane-dense (2C = 128) packed store ---------------------------
    packed = jnp.concatenate([v_out, h_out], axis=-1)
    out_ref[...] = packed.reshape(1, H, W, 2 * C).astype(out_ref.dtype)


# ----------------------------------------------------------------------------
# Weight-packing helpers (enforce the packing contract the kernel relies on).
# ----------------------------------------------------------------------------
def pack_vertical_weights(wv_full):
    """(3, 3, C, 2C) HWIO masked weights -> (6, C, 2C) bf16, tap index ky*3+kx."""
    kh, kw, c_in, c_out = wv_full.shape
    assert (kh, kw, c_out) == (3, 3, 2 * c_in), wv_full.shape
    return wv_full[0:2].reshape(6, c_in, c_out).astype(jnp.bfloat16)


def pack_horizontal_weights(wh_full, wv2h, bh, bv2h):
    """Fuse the masked 1x3 conv (left+center taps) with the v->h 1x1 conv.

    Returns (whx, bhx): whx is (4C, 2C) bf16 with rows [left tap | center tap |
    wv2h] -- this row order MUST match the kernel's concat([h_left, h_center,
    v_feat]) column order -- and bhx = bh + bv2h (f32).
    """
    kh, kw, c_in, c_out = wh_full.shape
    assert (kh, kw, c_out) == (1, 3, 2 * c_in), wh_full.shape
    assert wv2h.shape == (2 * c_in, 2 * c_in), wv2h.shape
    whx = jnp.concatenate([wh_full[0, 0], wh_full[0, 1], wv2h], axis=0)
    return whx.astype(jnp.bfloat16), (bh + bv2h).astype(jnp.float32)


# ----------------------------------------------------------------------------
# Wrapper: unpadded NHWC in, NHWC out (keep NHWC between stacked blocks).
# ----------------------------------------------------------------------------
@jax.jit
def gated_masked_conv_forward(v_nhwc, h_nhwc, wv_packed, bv, whx_packed, bhx,
                              wh1, bh1):
    N, H, W, C = v_nhwc.shape
    out = pl.pallas_call(
        gated_masked_conv_kernel,
        out_shape=jax.ShapeDtypeStruct((N, H, W, 2 * C), jnp.float32),
        grid=(N,),
        in_specs=[
            pl.BlockSpec((1, H, W, C), lambda n: (n, 0, 0, 0)),
            pl.BlockSpec((1, H, W, C), lambda n: (n, 0, 0, 0)),
            pl.BlockSpec((6, C, 2 * C), lambda n: (0, 0, 0)),
            pl.BlockSpec((1, 2 * C), lambda n: (0, 0)),
            pl.BlockSpec((4 * C, 2 * C), lambda n: (0, 0)),
            pl.BlockSpec((1, 2 * C), lambda n: (0, 0)),
            pl.BlockSpec((C, C), lambda n: (0, 0)),
            pl.BlockSpec((1, C), lambda n: (0, 0)),
        ],
        out_specs=pl.BlockSpec((1, H, W, 2 * C), lambda n: (n, 0, 0, 0)),
        scratch_shapes=[pltpu.VMEM((H + 1, W + 2, C), jnp.float32),
                        pltpu.VMEM((H, W + 1, C), jnp.float32)],
        compiler_params=pltpu.CompilerParams(dimension_semantics=("parallel",)),
    )(v_nhwc, h_nhwc, wv_packed, bv, whx_packed, bhx, wh1, bh1)
    # v_out in lanes [:C], h_out in lanes [C:].  When stacking GatedMaskedConv
    # blocks, feed the packed (N, H, W, 2C) tensor straight to the next block
    # and split only at the network boundary.
    return out[..., :C], out[..., C:]


# ----------------------------------------------------------------------------
# Pure-JAX f32 reference (lax.conv with the full masked kernels), NHWC.
# ----------------------------------------------------------------------------
def reference_forward(v, h, wv_full, bv, wh_full, bh, wv2h, bv2h, wh1, bh1):
    hi = jax.lax.Precision.HIGHEST
    dn = ("NHWC", "HWIO", "NHWC")
    C = v.shape[-1]
    v_feat = jax.lax.conv_general_dilated(v, wv_full, (1, 1), ((1, 1), (1, 1)),
                                          dimension_numbers=dn, precision=hi) + bv
    v_out = jnp.tanh(v_feat[..., :C]) * jax.nn.sigmoid(v_feat[..., C:])
    h_feat = jax.lax.conv_general_dilated(h, wh_full, (1, 1), ((0, 0), (1, 1)),
                                          dimension_numbers=dn, precision=hi) + bh
    h_feat = h_feat + jnp.einsum("nhwc,cd->nhwd", v_feat, wv2h, precision=hi) + bv2h
    h_act = jnp.tanh(h_feat[..., :C]) * jax.nn.sigmoid(h_feat[..., C:])
    h_out = jnp.einsum("nhwc,cd->nhwd", h_act, wh1, precision=hi) + bh1 + h
    return v_out, h_out


if __name__ == "__main__":
    key = jax.random.PRNGKey(0)
    ks = jax.random.split(key, 10)

    # Small shapes; C=64 so that 2C = 128 keeps the packed output lane-dense,
    # N=2 gives two units of "parallel" grid work (both v7x TensorCores busy).
    N, C, H, W = 2, 64, 16, 16

    v_stack = jax.random.normal(ks[0], (N, H, W, C), jnp.float32)   # NHWC
    h_stack = jax.random.normal(ks[1], (N, H, W, C), jnp.float32)

    def winit(k, shape, fan_in):
        return (1.0 / jnp.sqrt(float(fan_in))) * jax.random.normal(k, shape, jnp.float32)

    # Vertical masked 3x3 conv, C -> 2C.  Mask zeroes the row below center
    # (equivalent to `conv.weight.data *= mask` applied once).
    v_mask = jnp.array([[1., 1., 1.], [1., 1., 1.], [0., 0., 0.]], jnp.float32)[:, :, None, None]
    wv_full = winit(ks[2], (3, 3, C, 2 * C), 9 * C) * v_mask
    bv = winit(ks[3], (1, 2 * C), 9 * C)

    # Horizontal masked 1x3 conv, C -> 2C.  Mask zeroes the tap right of center.
    h_mask = jnp.array([[1., 1., 0.]], jnp.float32)[:, :, None, None]
    wh_full = winit(ks[4], (1, 3, C, 2 * C), 3 * C) * h_mask
    bh = winit(ks[5], (1, 2 * C), 3 * C)

    # 1x1 convs ((in, out) channel-matmul convention).
    wv2h = winit(ks[6], (2 * C, 2 * C), 2 * C)
    bv2h = winit(ks[7], (1, 2 * C), 2 * C)
    wh1 = winit(ks[8], (C, C), C)
    bh1 = winit(ks[9], (1, C), C)

    # Pack (and bf16-cast) the weights for the fused kernel.
    wv_packed = pack_vertical_weights(wv_full)
    whx_packed, bhx = pack_horizontal_weights(wh_full, wv2h, bh, bv2h)
    wh1_bf = wh1.astype(jnp.bfloat16)

    v_out, h_out = gated_masked_conv_forward(
        v_stack, h_stack, wv_packed, bv, whx_packed, bhx, wh1_bf, bh1)
    v_out, h_out = jax.block_until_ready((v_out, h_out))

    v_expect, h_expect = reference_forward(
        v_stack, h_stack, wv_full, bv, wh_full, bh, wv2h, bv2h, wh1, bh1)

    assert v_out.shape == (N, H, W, C) and h_out.shape == (N, H, W, C)
    err_v = float(jnp.max(jnp.abs(v_out - v_expect)))
    err_h = float(jnp.max(jnp.abs(h_out - h_expect)))
    # bf16 matmul inputs vs. an all-f32 HIGHEST-precision reference: allow 2e-2.
    assert err_v < 2e-2 and err_h < 2e-2, (err_v, err_h)
    print("KERNEL_OK")
</pallas_src>

<mosaic_0001>
module attributes {stable_mosaic.version = 11 : i64} {
  func.func @gated_masked_conv_kernel(%arg0: i32, %arg1: memref<1x16x16x64xf32, #tpu.memory_space<vmem>>, %arg2: memref<1x16x16x64xf32, #tpu.memory_space<vmem>>, %arg3: memref<6x64x128xbf16, #tpu.memory_space<vmem>>, %arg4: memref<1x128xf32, #tpu.memory_space<vmem>>, %arg5: memref<256x128xbf16, #tpu.memory_space<vmem>>, %arg6: memref<1x128xf32, #tpu.memory_space<vmem>>, %arg7: memref<64x64xbf16, #tpu.memory_space<vmem>>, %arg8: memref<1x64xf32, #tpu.memory_space<vmem>>, %arg9: memref<1x16x16x128xf32, #tpu.memory_space<vmem>>, %arg10: memref<17x18x64xf32, #tpu.memory_space<vmem>>, %arg11: memref<16x17x64xf32, #tpu.memory_space<vmem>>) attributes {dimension_semantics = [#tpu.dimension_semantics<parallel>], iteration_bounds = array<i64: 2>, scalar_prefetch = 0 : i64, scratch_operands = 2 : i64, tpu.core_type = #tpu.core_type<tc>, window_params = [{transform_indices = @transform_0, window_bounds = array<i64: 1, 16, 16, 64>}, {transform_indices = @transform_1, window_bounds = array<i64: 1, 16, 16, 64>}, {pipeline_mode = #tpu.pipeline_mode<synchronous>, transform_indices = @transform_2, window_bounds = array<i64: 6, 64, 128>}, {pipeline_mode = #tpu.pipeline_mode<synchronous>, transform_indices = @transform_3, window_bounds = array<i64: 1, 128>}, {pipeline_mode = #tpu.pipeline_mode<synchronous>, transform_indices = @transform_4, window_bounds = array<i64: 256, 128>}, {pipeline_mode = #tpu.pipeline_mode<synchronous>, transform_indices = @transform_5, window_bounds = array<i64: 1, 128>}, {pipeline_mode = #tpu.pipeline_mode<synchronous>, transform_indices = @transform_6, window_bounds = array<i64: 64, 64>}, {pipeline_mode = #tpu.pipeline_mode<synchronous>, transform_indices = @transform_7, window_bounds = array<i64: 1, 64>}, {transform_indices = @transform_8, window_bounds = array<i64: 1, 16, 16, 128>}]} {
    %c0 = arith.constant 0 : index
    %c0_0 = arith.constant 0 : index
    %c0_1 = arith.constant 0 : index
    %c0_2 = arith.constant 0 : index
    %0 = vector.load %arg1[%c0, %c0_0, %c0_1, %c0_2] : memref<1x16x16x64xf32, #tpu.memory_space<vmem>>, vector<1x16x16x64xf32>
    %1 = vector.shape_cast %0 : vector<1x16x16x64xf32> to vector<16x16x64xf32>
    %c0_3 = arith.constant 0 : index
    %c0_4 = arith.constant 0 : index
    %c0_5 = arith.constant 0 : index
    %c0_6 = arith.constant 0 : index
    %2 = vector.load %arg2[%c0_3, %c0_4, %c0_5, %c0_6] : memref<1x16x16x64xf32, #tpu.memory_space<vmem>>, vector<1x16x16x64xf32>
    %3 = vector.shape_cast %2 : vector<1x16x16x64xf32> to vector<16x16x64xf32>
    %cst = arith.constant 0.000000e+00 : f32
    %4 = vector.broadcast %cst : f32 to vector<17x18x64xf32>
    %c0_7 = arith.constant 0 : index
    %c0_8 = arith.constant 0 : index
    %c0_9 = arith.constant 0 : index
    %5 = vector.load %arg10[%c0_7, %c0_8, %c0_9] : memref<17x18x64xf32, #tpu.memory_space<vmem>>, vector<17x18x64xf32>
    tpu.vector_store %arg10[%c0_7, %c0_8, %c0_9], %4 {strides = array<i32>} : memref<17x18x64xf32, #tpu.memory_space<vmem>>, vector<17x18x64xf32>,
    %c1 = arith.constant 1 : index
    %c1_10 = arith.constant 1 : index
    %c0_11 = arith.constant 0 : index
    %6 = vector.load %arg10[%c1, %c1_10, %c0_11] : memref<17x18x64xf32, #tpu.memory_space<vmem>>, vector<16x16x64xf32>
    tpu.vector_store %arg10[%c1, %c1_10, %c0_11], %1 {strides = array<i32>} : memref<17x18x64xf32, #tpu.memory_space<vmem>>, vector<16x16x64xf32>,
    %cst_12 = arith.constant 0.000000e+00 : f32
    %7 = vector.broadcast %cst_12 : f32 to vector<16x17x64xf32>
    %c0_13 = arith.constant 0 : index
    %c0_14 = arith.constant 0 : index
    %c0_15 = arith.constant 0 : index
    %8 = vector.load %arg11[%c0_13, %c0_14, %c0_15] : memref<16x17x64xf32, #tpu.memory_space<vmem>>, vector<16x17x64xf32>
    tpu.vector_store %arg11[%c0_13, %c0_14, %c0_15], %7 {strides = array<i32>} : memref<16x17x64xf32, #tpu.memory_space<vmem>>, vector<16x17x64xf32>,
    %c0_16 = arith.constant 0 : index
    %c1_17 = arith.constant 1 : index
    %c0_18 = arith.constant 0 : index
    %9 = vector.load %arg11[%c0_16, %c1_17, %c0_18] : memref<16x17x64xf32, #tpu.memory_space<vmem>>, vector<16x16x64xf32>
    tpu.vector_store %arg11[%c0_16, %c1_17, %c0_18], %3 {strides = array<i32>} : memref<16x17x64xf32, #tpu.memory_space<vmem>>, vector<16x16x64xf32>,
    %c0_19 = arith.constant 0 : index
    %c0_20 = arith.constant 0 : index
    %10 = vector.load %arg4[%c0_19, %c0_20] : memref<1x128xf32, #tpu.memory_space<vmem>>, vector<1x128xf32>
    %11 = vector.shape_cast %10 : vector<1x128xf32> to vector<1x128xf32>
    %12 = vector.broadcast %11 : vector<1x128xf32> to vector<256x128xf32>
    %c0_21 = arith.constant 0 : index
    %c0_22 = arith.constant 0 : index
    %c0_23 = arith.constant 0 : index
    %13 = vector.load %arg10[%c0_21, %c0_22, %c0_23] : memref<17x18x64xf32, #tpu.memory_space<vmem>>, vector<16x16x64xf32>
    %14 = vector.shape_cast %13 : vector<16x16x64xf32> to vector<256x64xf32>
    %15 = arith.truncf %14 : vector<256x64xf32> to vector<256x64xbf16>
    %c0_24 = arith.constant 0 : index
    %c0_25 = arith.constant 0 : index
    %c0_26 = arith.constant 0 : index
    %16 = vector.load %arg3[%c0_24, %c0_25, %c0_26] : memref<6x64x128xbf16, #tpu.memory_space<vmem>>, vector<1x64x128xbf16>
    %17 = vector.shape_cast %16 : vector<1x64x128xbf16> to vector<64x128xbf16>
    %cst_27 = arith.constant dense<0.000000e+00> : vector<256x128xf32>
    %18 = tpu.matmul %15, %17, %cst_27 {dimension_numbers = #tpu.dot_dimension_numbers<[1], [0], [0], [1], [0, 0, 1, 1], [], []>} : vector<256x64xbf16>, vector<64x128xbf16>, vector<256x128xf32> -> vector<256x128xf32>
    %19 = arith.addf %12, %18 : vector<256x128xf32>
    %c0_28 = arith.constant 0 : index
    %c1_29 = arith.constant 1 : index
    %c0_30 = arith.constant 0 : index
    %20 = vector.load %arg10[%c0_28, %c1_29, %c0_30] : memref<17x18x64xf32, #tpu.memory_space<vmem>>, vector<16x16x64xf32>
    %21 = vector.shape_cast %20 : vector<16x16x64xf32> to vector<256x64xf32>
    %22 = arith.truncf %21 : vector<256x64xf32> to vector<256x64xbf16>
    %c1_31 = arith.constant 1 : index
    %c0_32 = arith.constant 0 : index
    %c0_33 = arith.constant 0 : index
    %23 = vector.load %arg3[%c1_31, %c0_32, %c0_33] : memref<6x64x128xbf16, #tpu.memory_space<vmem>>, vector<1x64x128xbf16>
    %24 = vector.shape_cast %23 : vector<1x64x128xbf16> to vector<64x128xbf16>
    %cst_34 = arith.constant dense<0.000000e+00> : vector<256x128xf32>
    %25 = tpu.matmul %22, %24, %cst_34 {dimension_numbers = #tpu.dot_dimension_numbers<[1], [0], [0], [1], [0, 0, 1, 1], [], []>} : vector<256x64xbf16>, vector<64x128xbf16>, vector<256x128xf32> -> vector<256x128xf32>
    %26 = arith.addf %19, %25 : vector<256x128xf32>
    %c0_35 = arith.constant 0 : index
    %c2 = arith.constant 2 : index
    %c0_36 = arith.constant 0 : index
    %27 = vector.load %arg10[%c0_35, %c2, %c0_36] : memref<17x18x64xf32, #tpu.memory_space<vmem>>, vector<16x16x64xf32>
    %28 = vector.shape_cast %27 : vector<16x16x64xf32> to vector<256x64xf32>
    %29 = arith.truncf %28 : vector<256x64xf32> to vector<256x64xbf16>
    %c2_37 = arith.constant 2 : index
    %c0_38 = arith.constant 0 : index
    %c0_39 = arith.constant 0 : index
    %30 = vector.load %arg3[%c2_37, %c0_38, %c0_39] : memref<6x64x128xbf16, #tpu.memory_space<vmem>>, vector<1x64x128xbf16>
    %31 = vector.shape_cast %30 : vector<1x64x128xbf16> to vector<64x128xbf16>
    %cst_40 = arith.constant dense<0.000000e+00> : vector<256x128xf32>
    %32 = tpu.matmul %29, %31, %cst_40 {dimension_numbers = #tpu.dot_dimension_numbers<[1], [0], [0], [1], [0, 0, 1, 1], [], []>} : vector<256x64xbf16>, vector<64x128xbf16>, vector<256x128xf32> -> vector<256x128xf32>
    %33 = arith.addf %26, %32 : vector<256x128xf32>
    %c1_41 = arith.constant 1 : index
    %c0_42 = arith.constant 0 : index
    %c0_43 = arith.constant 0 : index
    %34 = vector.load %arg10[%c1_41, %c0_42, %c0_43] : memref<17x18x64xf32, #tpu.memory_space<vmem>>, vector<16x16x64xf32>
    %35 = vector.shape_cast %34 : vector<16x16x64xf32> to vector<256x64xf32>
    %36 = arith.truncf %35 : vector<256x64xf32> to vector<256x64xbf16>
    %c3 = arith.constant 3 : index
    %c0_44 = arith.constant 0 : index
    %c0_45 = arith.constant 0 : index
    %37 = vector.load %arg3[%c3, %c0_44, %c0_45] : memref<6x64x128xbf16, #tpu.memory_space<vmem>>, vector<1x64x128xbf16>
    %38 = vector.shape_cast %37 : vector<1x64x128xbf16> to vector<64x128xbf16>
    %cst_46 = arith.constant dense<0.000000e+00> : vector<256x128xf32>
    %39 = tpu.matmul %36, %38, %cst_46 {dimension_numbers = #tpu.dot_dimension_numbers<[1], [0], [0], [1], [0, 0, 1, 1], [], []>} : vector<256x64xbf16>, vector<64x128xbf16>, vector<256x128xf32> -> vector<256x128xf32>
    %40 = arith.addf %33, %39 : vector<256x128xf32>
    %c1_47 = arith.constant 1 : index
    %c1_48 = arith.constant 1 : index
    %c0_49 = arith.constant 0 : index
    %41 = vector.load %arg10[%c1_47, %c1_48, %c0_49] : memref<17x18x64xf32, #tpu.memory_space<vmem>>, vector<16x16x64xf32>
    %42 = vector.shape_cast %41 : vector<16x16x64xf32> to vector<256x64xf32>
    %43 = arith.truncf %42 : vector<256x64xf32> to vector<256x64xbf16>
    %c4 = arith.constant 4 : index
    %c0_50 = arith.constant 0 : index
    %c0_51 = arith.constant 0 : index
    %44 = vector.load %arg3[%c4, %c0_50, %c0_51] : memref<6x64x128xbf16, #tpu.memory_space<vmem>>, vector<1x64x128xbf16>
    %45 = vector.shape_cast %44 : vector<1x64x128xbf16> to vector<64x128xbf16>
    %cst_52 = arith.constant dense<0.000000e+00> : vector<256x128xf32>
    %46 = tpu.matmul %43, %45, %cst_52 {dimension_numbers = #tpu.dot_dimension_numbers<[1], [0], [0], [1], [0, 0, 1, 1], [], []>} : vector<256x64xbf16>, vector<64x128xbf16>, vector<256x128xf32> -> vector<256x128xf32>
    %47 = arith.addf %40, %46 : vector<256x128xf32>
    %c1_53 = arith.constant 1 : index
    %c2_54 = arith.constant 2 : index
    %c0_55 = arith.constant 0 : index
    %48 = vector.load %arg10[%c1_53, %c2_54, %c0_55] : memref<17x18x64xf32, #tpu.memory_space<vmem>>, vector<16x16x64xf32>
    %49 = vector.shape_cast %48 : vector<16x16x64xf32> to vector<256x64xf32>
    %50 = arith.truncf %49 : vector<256x64xf32> to vector<256x64xbf16>
    %c5 = arith.constant 5 : index
    %c0_56 = arith.constant 0 : index
    %c0_57 = arith.constant 0 : index
    %51 = vector.load %arg3[%c5, %c0_56, %c0_57] : memref<6x64x128xbf16, #tpu.memory_space<vmem>>, vector<1x64x128xbf16>
    %52 = vector.shape_cast %51 : vector<1x64x128xbf16> to vector<64x128xbf16>
    %cst_58 = arith.constant dense<0.000000e+00> : vector<256x128xf32>
    %53 = tpu.matmul %50, %52, %cst_58 {dimension_numbers = #tpu.dot_dimension_numbers<[1], [0], [0], [1], [0, 0, 1, 1], [], []>} : vector<256x64xbf16>, vector<64x128xbf16>, vector<256x128xf32> -> vector<256x128xf32>
    %54 = arith.addf %47, %53 : vector<256x128xf32>
    %55 = vector.extract_strided_slice %54 {offsets = [0, 0], sizes = [256, 64], strides = [1, 1]} : vector<256x128xf32> to vector<256x64xf32>
    %56 = math.tanh %55 : vector<256x64xf32>
    %57 = vector.extract_strided_slice %54 {offsets = [0, 64], sizes = [256, 64], strides = [1, 1]} : vector<256x128xf32> to vector<256x64xf32>
    %cst_59 = arith.constant 5.000000e-01 : f32
    %58 = vector.broadcast %cst_59 : f32 to vector<256x64xf32>
    %59 = arith.mulf %58, %57 : vector<256x64xf32>
    %60 = math.tanh %59 : vector<256x64xf32>
    %cst_60 = arith.constant 5.000000e-01 : f32
    %61 = vector.broadcast %cst_60 : f32 to vector<256x64xf32>
    %62 = arith.mulf %61, %60 : vector<256x64xf32>
    %cst_61 = arith.constant 5.000000e-01 : f32
    %63 = vector.broadcast %cst_61 : f32 to vector<256x64xf32>
    %64 = arith.addf %62, %63 : vector<256x64xf32>
    %65 = arith.mulf %56, %64 : vector<256x64xf32>
    %c0_62 = arith.constant 0 : index
    %c0_63 = arith.constant 0 : index
    %c0_64 = arith.constant 0 : index
    %66 = vector.load %arg11[%c0_62, %c0_63, %c0_64] : memref<16x17x64xf32, #tpu.memory_space<vmem>>, vector<16x16x64xf32>
    %67 = vector.shape_cast %66 : vector<16x16x64xf32> to vector<256x64xf32>
    %68 = arith.truncf %67 : vector<256x64xf32> to vector<256x64xbf16>
    %69 = vector.shape_cast %3 : vector<16x16x64xf32> to vector<256x64xf32>
    %70 = arith.truncf %69 : vector<256x64xf32> to vector<256x64xbf16>
    %71 = arith.truncf %54 : vector<256x128xf32> to vector<256x128xbf16>
    %72 = tpu.concatenate %68, %70, %71 in 1 : vector<256x64xbf16>, vector<256x64xbf16>, vector<256x128xbf16> -> vector<256x256xbf16>
    %c0_65 = arith.constant 0 : index
    %c0_66 = arith.constant 0 : index
    %73 = vector.load %arg5[%c0_65, %c0_66] : memref<256x128xbf16, #tpu.memory_space<vmem>>, vector<256x128xbf16>
    %cst_67 = arith.constant dense<0.000000e+00> : vector<256x128xf32>
    %74 = tpu.matmul %72, %73, %cst_67 {dimension_numbers = #tpu.dot_dimension_numbers<[1], [0], [0], [1], [0, 0, 1, 1], [], []>} : vector<256x256xbf16>, vector<256x128xbf16>, vector<256x128xf32> -> vector<256x128xf32>
    %c0_68 = arith.constant 0 : index
    %c0_69 = arith.constant 0 : index
    %75 = vector.load %arg6[%c0_68, %c0_69] : memref<1x128xf32, #tpu.memory_space<vmem>>, vector<1x128xf32>
    %76 = vector.broadcast %75 : vector<1x128xf32> to vector<256x128xf32>
    %77 = arith.addf %74, %76 : vector<256x128xf32>
    %78 = vector.extract_strided_slice %77 {offsets = [0, 0], sizes = [256, 64], strides = [1, 1]} : vector<256x128xf32> to vector<256x64xf32>
    %79 = math.tanh %78 : vector<256x64xf32>
    %80 = vector.extract_strided_slice %77 {offsets = [0, 64], sizes = [256, 64], strides = [1, 1]} : vector<256x128xf32> to vector<256x64xf32>
    %cst_70 = arith.constant 5.000000e-01 : f32
    %81 = vector.broadcast %cst_70 : f32 to vector<256x64xf32>
    %82 = arith.mulf %81, %80 : vector<256x64xf32>
    %83 = math.tanh %82 : vector<256x64xf32>
    %cst_71 = arith.constant 5.000000e-01 : f32
    %84 = vector.broadcast %cst_71 : f32 to vector<256x64xf32>
    %85 = arith.mulf %84, %83 : vector<256x64xf32>
    %cst_72 = arith.constant 5.000000e-01 : f32
    %86 = vector.broadcast %cst_72 : f32 to vector<256x64xf32>
    %87 = arith.addf %85, %86 : vector<256x64xf32>
    %88 = arith.mulf %79, %87 : vector<256x64xf32>
    %89 = arith.truncf %88 : vector<256x64xf32> to vector<256x64xbf16>
    %c0_73 = arith.constant 0 : index
    %c0_74 = arith.constant 0 : index
    %90 = vector.load %arg7[%c0_73, %c0_74] : memref<64x64xbf16, #tpu.memory_space<vmem>>, vector<64x64xbf16>
    %cst_75 = arith.constant dense<0.000000e+00> : vector<256x64xf32>
    %91 = tpu.matmul %89, %90, %cst_75 {dimension_numbers = #tpu.dot_dimension_numbers<[1], [0], [0], [1], [0, 0, 1, 1], [], []>} : vector<256x64xbf16>, vector<64x64xbf16>, vector<256x64xf32> -> vector<256x64xf32>
    %c0_76 = arith.constant 0 : index
    %c0_77 = arith.constant 0 : index
    %92 = vector.load %arg8[%c0_76, %c0_77] : memref<1x64xf32, #tpu.memory_space<vmem>>, vector<1x64xf32>
    %93 = vector.broadcast %92 : vector<1x64xf32> to vector<256x64xf32>
    %94 = arith.addf %91, %93 : vector<256x64xf32>
    %95 = vector.shape_cast %3 : vector<16x16x64xf32> to vector<256x64xf32>
    %96 = arith.addf %94, %95 : vector<256x64xf32>
    %97 = tpu.concatenate %65, %96 in 1 : vector<256x64xf32>, vector<256x64xf32> -> vector<256x128xf32>
    %98 = vector.shape_cast %97 : vector<256x128xf32> to vector<1x16x16x128xf32>
    %c0_78 = arith.constant 0 : index
    %c0_79 = arith.constant 0 : index
    %c0_80 = arith.constant 0 : index
    %c0_81 = arith.constant 0 : index
    %99 = vector.load %arg9[%c0_78, %c0_79, %c0_80, %c0_81] : memref<1x16x16x128xf32, #tpu.memory_space<vmem>>, vector<1x16x16x128xf32>
    tpu.vector_store %arg9[%c0_78, %c0_79, %c0_80, %c0_81], %98 {strides = array<i32>} : memref<1x16x16x128xf32, #tpu.memory_space<vmem>>, vector<1x16x16x128xf32>,
    return
  }
  func.func @transform_0(%arg0: i32) -> (i32, i32, i32, i32) {
    %c0_i32 = arith.constant 0 : i32
    %c0_i32_0 = arith.constant 0 : i32
    %c0_i32_1 = arith.constant 0 : i32
    %c0_i32_2 = arith.constant 0 : i32
    return %arg0, %c0_i32, %c0_i32_0, %c0_i32_1 : i32, i32, i32, i32
  }
  func.func @transform_1(%arg0: i32) -> (i32, i32, i32, i32) {
    %c0_i32 = arith.constant 0 : i32
    %c0_i32_0 = arith.constant 0 : i32
    %c0_i32_1 = arith.constant 0 : i32
    %c0_i32_2 = arith.constant 0 : i32
    return %arg0, %c0_i32, %c0_i32_0, %c0_i32_1 : i32, i32, i32, i32
  }
  func.func @transform_2(%arg0: i32) -> (i32, i32, i32) {
    %c0_i32 = arith.constant 0 : i32
    %c0_i32_0 = arith.constant 0 : i32
    %c0_i32_1 = arith.constant 0 : i32
    %c0_i32_2 = arith.constant 0 : i32
    return %c0_i32, %c0_i32_0, %c0_i32_1 : i32, i32, i32
  }
  func.func @transform_3(%arg0: i32) -> (i32, i32) {
    %c0_i32 = arith.constant 0 : i32
    %c0_i32_0 = arith.constant 0 : i32
    %c0_i32_1 = arith.constant 0 : i32
    return %c0_i32, %c0_i32_0 : i32, i32
  }
  func.func @transform_4(%arg0: i32) -> (i32, i32) {
    %c0_i32 = arith.constant 0 : i32
    %c0_i32_0 = arith.constant 0 : i32
    %c0_i32_1 = arith.constant 0 : i32
    return %c0_i32, %c0_i32_0 : i32, i32
  }
  func.func @transform_5(%arg0: i32) -> (i32, i32) {
    %c0_i32 = arith.constant 0 : i32
    %c0_i32_0 = arith.constant 0 : i32
    %c0_i32_1 = arith.constant 0 : i32
    return %c0_i32, %c0_i32_0 : i32, i32
  }
  func.func @transform_6(%arg0: i32) -> (i32, i32) {
    %c0_i32 = arith.constant 0 : i32
    %c0_i32_0 = arith.constant 0 : i32
    %c0_i32_1 = arith.constant 0 : i32
    return %c0_i32, %c0_i32_0 : i32, i32
  }
  func.func @transform_7(%arg0: i32) -> (i32, i32) {
    %c0_i32 = arith.constant 0 : i32
    %c0_i32_0 = arith.constant 0 : i32
    %c0_i32_1 = arith.constant 0 : i32
    return %c0_i32, %c0_i32_0 : i32, i32
  }
  func.func @transform_8(%arg0: i32) -> (i32, i32, i32, i32) {
    %c0_i32 = arith.constant 0 : i32
    %c0_i32_0 = arith.constant 0 : i32
    %c0_i32_1 = arith.constant 0 : i32
    %c0_i32_2 = arith.constant 0 : i32
    return %arg0, %c0_i32, %c0_i32_0, %c0_i32_1 : i32, i32, i32, i32
  }
}

</mosaic_0001>

<llo_original>
// kernel: gated_masked_conv_forward.1
$region0: #{gated_masked_conv_forward.1}
  #allocation0 [shape = 'u32[]', space=smem, size = 0x4, offset = 0x4, fixed_abs, tag = 'smem constant byte address 0x4 - core index']
  #allocation1 [shape = 'u32[144,128]{1,0:T(1,128)}', space=vmem, size = 0x12000, scoped, tag = 'internal scratch']
  #allocation2 [shape = 'f32[17,18,64]{2,1,0:T(8,128)}', space=vmem, size = 0x33000, scoped, tag = 'scratch operand']
  #allocation3 [shape = 'f32[16,17,64]{2,1,0:T(8,128)}', space=vmem, size = 0x30000, scoped, tag = 'scratch operand']
  %s0 = inlined_call_operand.hbm [shape: f32[2,16,16,64], index: 0, kind: input, shape index: {}]
  %s1 = inlined_call_operand.hbm [shape: f32[2,16,16,64], index: 1, kind: input, shape index: {}]
  %s2 = inlined_call_operand.hbm [shape: bf16[6,64,128], index: 2, kind: input, shape index: {}]
  %s3 = inlined_call_operand.vmem [shape: f32[1,128], index: 3, kind: input, shape index: {}]
  %s4 = inlined_call_operand.hbm [shape: bf16[256,128], index: 4, kind: input, shape index: {}]
  %s5 = inlined_call_operand.vmem [shape: f32[1,128], index: 5, kind: input, shape index: {}]
  %s6 = inlined_call_operand.hbm [shape: bf16[64,64], index: 6, kind: input, shape index: {}]
  %s7 = inlined_call_operand.vmem [shape: f32[1,64], index: 7, kind: input, shape index: {}]
  %s8 = inlined_call_operand.vmem [shape: f32[2,16,16,128], index: 8, kind: output, shape index: {}]
  %s9 = sld [smem:[#allocation0]]
  $region85: #{gated_masked_conv_forward.1} parent=0
    _
  %s11 = ssub.s32 1, %s9
  %s12 = scalar_select 0, %s11, %s9
  $region1: #{gated_masked_conv_forward.1} parent=0
    #allocation4 [shape = 'u8[262144]{0}', space=vmem, size = 0x40000, scoped, tag = 'input window, operand 0']
    #allocation5 [shape = 's32[2]{0}', space=sflag, size = 0x8, scoped, tag = 'scoped memory for gated_masked_conv_forward.1']
    #allocation6 [shape = 'u8[262144]{0}', space=vmem, size = 0x40000, scoped, tag = 'input window, operand 1']
    #allocation7 [shape = 's32[2]{0}', space=sflag, size = 0x8, scoped, tag = 'scoped memory for gated_masked_conv_forward.1']
    #allocation8 [shape = 'u8[98304]{0}', space=vmem, size = 0x18000, scoped, tag = 'input window, operand 2, single buffered']
    #allocation9 [shape = 'u8[65536]{0}', space=vmem, size = 0x10000, scoped, tag = 'input window, operand 4, single buffered']
    #allocation10 [shape = 's32[1]{0}', space=sflag, size = 0x4, scoped, tag = 'scoped memory for gated_masked_conv_forward.1']
    #allocation11 [shape = 'u8[16384]{0}', space=vmem, size = 0x4000, scoped, tag = 'input window, operand 6, single buffered']
    %13 = vsyncpa [#allocation5], 0
    %s14 = scalar_lea.sflag [#allocation5], 1
    %15 = vsyncpa %s14, 0
    %16 = vsyncpa [#allocation7], 0
    %s17 = scalar_lea.sflag [#allocation7], 1
    %18 = vsyncpa %s17, 0
    %19 = vsyncpa [#allocation10], 0
    loop: start=0, step=1, limit=4
    $region2: #{gated_masked_conv_forward.1} parent=1 // loop_pre_header
      _
    $region3: #{gated_masked_conv_forward.1} parent=1 // loop_header
      %s21 = sphi 0, %s25
      %p22 = scmp.ge.s32.totalorder %s21, 4
      %s31 = sphi 0, %s33
      %s34 = sphi 0, %s31
      %s35 = sphi 0, %s34
      %s51 = sphi 0, %s35
      %s57 = sphi 0, %s59
      %s60 = sphi 0, %s57
      %s61 = sphi 0, %s60
      %s77 = sphi 0, %s61
      %s81 = sphi 0, %s81
      %s83 = sphi 0, %s81
      %s84 = sphi 0, %s83
      %s98 = sphi 0, %s84
      %s102 = sphi 0, %s102
      %s104 = sphi 0, %s102
      %s105 = sphi 0, %s104
      %s119 = sphi 0, %s105
      %s123 = sphi 0, %s123
      %s125 = sphi 0, %s123
      %s126 = sphi 0, %s125
      %s140 = sphi 0, %s126
      %s144 = sphi 0, %s144
      %s146 = sphi 0, %s144
      %s147 = sphi 0, %s146
      %s161 = sphi 0, %s147
      %s165 = sphi 0, %s165
      %s167 = sphi 0, %s165
      %s168 = sphi 0, %s167
      %s182 = sphi 0, %s168
      %s186 = sphi 0, %s186
      %s188 = sphi 0, %s186
      %s189 = sphi 0, %s188
      %s203 = sphi 0, %s189
      %s209 = sphi 0, %s211
      %s212 = sphi 0, %s209
      %s213 = sphi 0, %s212
      %s229 = sphi 0, %s213
    $region4: #{gated_masked_conv_forward.1} parent=1 // loop_header_branch
      %24 = sbr.rel (%p22) target = $region8
    $region5: #{gated_masked_conv_forward.1} parent=1 // loop_body
      %s26 = ssub.s32 %s21, 1
      %s27 = ssub.s32 %s21, 2
      %s28 = sadd.s32 %s21, 1
      %s29 = ssub.s32 %s21, %s28
      %p30 = scmp.eq.s32.totalorder %s29, 0
      %s32 = sadd.s32 %s31, 1
      %s33 = scalar_select %p30, %s31, %s32
      %p36 = pneg %p30
      %p37 = scmp.eq.s32.totalorder %s21, 1
      %p38 = por %p36, %p37
      %p39 = scmp.ne.s32.totalorder %s31, %s34
      %p40 = scmp.eq.s32.totalorder %s21, 0
      %p41 = por %p39, %p40
      %p42 = scmp.ne.s32.totalorder %s31, %s34
      %p43 = scmp.eq.s32.totalorder %s26, 1
      %p44 = por %p42, %p43
      %p45 = scmp.ne.s32.totalorder %s34, %s35
      %p46 = scmp.eq.s32.totalorder %s26, 0
      %p47 = por %p45, %p46
      %p48 = scmp.ne.s32.totalorder %s34, %s35
      %p49 = scmp.eq.s32.totalorder %s27, 1
      %p50 = por %p48, %p49
      %p52 = scmp.ne.s32.totalorder %s35, %s51
      %p53 = scmp.eq.s32.totalorder %s27, 0
      %p54 = por %p52, %p53
      %s55 = ssub.s32 %s21, %s28
      %p56 = scmp.eq.s32.totalorder %s55, 0
      %s58 = sadd.s32 %s57, 1
      %s59 = scalar_select %p56, %s57, %s58
      %p62 = pneg %p56
      %p63 = scmp.eq.s32.totalorder %s21, 1
      %p64 = por %p62, %p63
      %p65 = scmp.ne.s32.totalorder %s57, %s60
      %p66 = scmp.eq.s32.totalorder %s21, 0
      %p67 = por %p65, %p66
      %p68 = scmp.ne.s32.totalorder %s57, %s60
      %p69 = scmp.eq.s32.totalorder %s26, 1
      %p70 = por %p68, %p69
      %p71 = scmp.ne.s32.totalorder %s60, %s61
      %p72 = scmp.eq.s32.totalorder %s26, 0
      %p73 = por %p71, %p72
      %p74 = scmp.ne.s32.totalorder %s60, %s61
      %p75 = scmp.eq.s32.totalorder %s27, 1
      %p76 = por %p74, %p75
      %p78 = scmp.ne.s32.totalorder %s61, %s77
      %p79 = scmp.eq.s32.totalorder %s27, 0
      %p80 = por %p78, %p79
      %s82 = sadd.s32 %s81, 1
      %p85 = scmp.eq.s32.totalorder %s21, 1
      %p86 = scmp.ne.s32.totalorder %s81, %s83
      %p87 = scmp.eq.s32.totalorder %s21, 0
      %p88 = por %p86, %p87
      %p89 = scmp.ne.s32.totalorder %s81, %s83
      %p90 = scmp.eq.s32.totalorder %s26, 1
      %p91 = por %p89, %p90
      %p92 = scmp.ne.s32.totalorder %s83, %s84
      %p93 = scmp.eq.s32.totalorder %s26, 0
      %p94 = por %p92, %p93
      %p95 = scmp.ne.s32.totalorder %s83, %s84
      %p96 = scmp.eq.s32.totalorder %s27, 1
      %p97 = por %p95, %p96
      %p99 = scmp.ne.s32.totalorder %s84, %s98
      %p100 = scmp.eq.s32.totalorder %s27, 0
      %p101 = por %p99, %p100
      %s103 = sadd.s32 %s102, 1
      %p106 = scmp.eq.s32.totalorder %s21, 1
      %p107 = scmp.ne.s32.totalorder %s102, %s104
      %p108 = scmp.eq.s32.totalorder %s21, 0
      %p109 = por %p107, %p108
      %p110 = scmp.ne.s32.totalorder %s102, %s104
      %p111 = scmp.eq.s32.totalorder %s26, 1
      %p112 = por %p110, %p111
      %p113 = scmp.ne.s32.totalorder %s104, %s105
      %p114 = scmp.eq.s32.totalorder %s26, 0
      %p115 = por %p113, %p114
      %p116 = scmp.ne.s32.totalorder %s104, %s105
      %p117 = scmp.eq.s32.totalorder %s27, 1
      %p118 = por %p116, %p117
      %p120 = scmp.ne.s32.totalorder %s105, %s119
      %p121 = scmp.eq.s32.totalorder %s27, 0
      %p122 = por %p120, %p121
      %s124 = sadd.s32 %s123, 1
      %p127 = scmp.eq.s32.totalorder %s21, 1
      %p128 = scmp.ne.s32.totalorder %s123, %s125
      %p129 = scmp.eq.s32.totalorder %s21, 0
      %p130 = por %p128, %p129
      %p131 = scmp.ne.s32.totalorder %s123, %s125
      %p132 = scmp.eq.s32.totalorder %s26, 1
      %p133 = por %p131, %p132
      %p134 = scmp.ne.s32.totalorder %s125, %s126
      %p135 = scmp.eq.s32.totalorder %s26, 0
      %p136 = por %p134, %p135
      %p137 = scmp.ne.s32.totalorder %s125, %s126
      %p138 = scmp.eq.s32.totalorder %s27, 1
      %p139 = por %p137, %p138
      %p141 = scmp.ne.s32.totalorder %s126, %s140
      %p142 = scmp.eq.s32.totalorder %s27, 0
      %p143 = por %p141, %p142
      %s145 = sadd.s32 %s144, 1
      %p148 = scmp.eq.s32.totalorder %s21, 1
      %p149 = scmp.ne.s32.totalorder %s144, %s146
      %p150 = scmp.eq.s32.totalorder %s21, 0
      %p151 = por %p149, %p150
      %p152 = scmp.ne.s32.totalorder %s144, %s146
      %p153 = scmp.eq.s32.totalorder %s26, 1
      %p154 = por %p152, %p153
      %p155 = scmp.ne.s32.totalorder %s146, %s147
      %p156 = scmp.eq.s32.totalorder %s26, 0
      %p157 = por %p155, %p156
      %p158 = scmp.ne.s32.totalorder %s146, %s147
      %p159 = scmp.eq.s32.totalorder %s27, 1
      %p160 = por %p158, %p159
      %p162 = scmp.ne.s32.totalorder %s147, %s161
      %p163 = scmp.eq.s32.totalorder %s27, 0
      %p164 = por %p162, %p163
      %s166 = sadd.s32 %s165, 1
      %p169 = scmp.eq.s32.totalorder %s21, 1
      %p170 = scmp.ne.s32.totalorder %s165, %s167
      %p171 = scmp.eq.s32.totalorder %s21, 0
      %p172 = por %p170, %p171
      %p173 = scmp.ne.s32.totalorder %s165, %s167
      %p174 = scmp.eq.s32.totalorder %s26, 1
      %p175 = por %p173, %p174
      %p176 = scmp.ne.s32.totalorder %s167, %s168
      %p177 = scmp.eq.s32.totalorder %s26, 0
      %p178 = por %p176, %p177
      %p179 = scmp.ne.s32.totalorder %s167, %s168
      %p180 = scmp.eq.s32.totalorder %s27, 1
      %p181 = por %p179, %p180
      %p183 = scmp.ne.s32.totalorder %s168, %s182
      %p184 = scmp.eq.s32.totalorder %s27, 0
      %p185 = por %p183, %p184
      %s187 = sadd.s32 %s186, 1
      %p190 = scmp.eq.s32.totalorder %s21, 1
      %p191 = scmp.ne.s32.totalorder %s186, %s188
      %p192 = scmp.eq.s32.totalorder %s21, 0
      %p193 = por %p191, %p192
      %p194 = scmp.ne.s32.totalorder %s186, %s188
      %p195 = scmp.eq.s32.totalorder %s26, 1
      %p196 = por %p194, %p195
      %p197 = scmp.ne.s32.totalorder %s188, %s189
      %p198 = scmp.eq.s32.totalorder %s26, 0
      %p199 = por %p197, %p198
      %p200 = scmp.ne.s32.totalorder %s188, %s189
      %p201 = scmp.eq.s32.totalorder %s27, 1
      %p202 = por %p200, %p201
      %p204 = scmp.ne.s32.totalorder %s189, %s203
      %p205 = scmp.eq.s32.totalorder %s27, 0
      %p206 = por %p204, %p205
      %s207 = ssub.s32 %s21, %s28
      %p208 = scmp.eq.s32.totalorder %s207, 0
      %s210 = sadd.s32 %s209, 1
      %s211 = scalar_select %p208, %s209, %s210
      %p214 = pneg %p208
      %p215 = scmp.eq.s32.totalorder %s21, 1
      %p216 = por %p214, %p215
      %p217 = scmp.ne.s32.totalorder %s209, %s212
      %p218 = scmp.eq.s32.totalorder %s21, 0
      %p219 = por %p217, %p218
      %p220 = scmp.ne.s32.totalorder %s209, %s212
      %p221 = scmp.eq.s32.totalorder %s26, 1
      %p222 = por %p220, %p221
      %p223 = scmp.ne.s32.totalorder %s212, %s213
      %p224 = scmp.eq.s32.totalorder %s26, 0
      %p225 = por %p223, %p224
      %p226 = scmp.ne.s32.totalorder %s212, %s213
      %p227 = scmp.eq.s32.totalorder %s27, 1
      %p228 = por %p226, %p227
      %p230 = scmp.ne.s32.totalorder %s213, %s229
      %p231 = scmp.eq.s32.totalorder %s27, 0
      %p232 = por %p230, %p231
      %p233 = scmp.le.s32.totalorder 1, %s21
      %p234 = scmp.lt.s32.totalorder %s21, 3
      %p235 = pnand %p233, %p234
      %p236 = pneg %p235
      // Predicated region
      $region9: #{gated_masked_conv_forward.1} parent=5 // pred_check
        _
      $region10: #{gated_masked_conv_forward.1} parent=5 // pred_check_branch
        %238 = sbr.rel (%p235) target = $region12
      $region11: #{gated_masked_conv_forward.1} parent=5 // pred_region
        %s239 = ssub.s32 %s21, 1
        // Predicated region
        $region13: #{gated_masked_conv_forward.1} parent=11 // pred_check
          %p240 = pneg %p94
        $region14: #{gated_masked_conv_forward.1} parent=11 // pred_check_branch
          %242 = sbr.rel (%p240) target = $region16
        $region15: #{gated_masked_conv_forward.1} parent=11 // pred_region
          %s244 = ssub.s32 3072, 3072
          %245 = vsyncadd [#allocation7], %s244
          %s246 = sshll.u32 [#allocation8], 4
          %s247 = int_to_ptr.vmem [resolvable:$true] %s246
          %252 = dma.hbm_to_vmem [thread:$0]  %s2, 3072, %s247, [#allocation7], 64, 64, 4
        $region16: #{gated_masked_conv_forward.1} parent=11 // pred_fallthru
          _
        // Predicated region
        $region17: #{gated_masked_conv_forward.1} parent=11 // pred_check
          %p253 = pneg %p115
        $region18: #{gated_masked_conv_forward.1} parent=11 // pred_check_branch
          %255 = sbr.rel (%p253) target = $region20
        $region19: #{gated_masked_conv_forward.1} parent=11 // pred_region
          _
        $region20: #{gated_masked_conv_forward.1} parent=11 // pred_fallthru
          _
        // Predicated region
        $region21: #{gated_masked_conv_forward.1} parent=11 // pred_check
          %p256 = pneg %p136
        $region22: #{gated_masked_conv_forward.1} parent=11 // pred_check_branch
          %258 = sbr.rel (%p256) target = $region24
        $region23: #{gated_masked_conv_forward.1} parent=11 // pred_region
          %s260 = ssub.s32 2048, 2048
          %261 = vsyncadd [#allocation10], %s260
          %s262 = sshll.u32 [#allocation9], 4
          %s263 = int_to_ptr.vmem [resolvable:$true] %s262
          %268 = dma.hbm_to_vmem [thread:$0]  %s4, 2048, %s263, [#allocation10], 64, 64, 4
        $region24: #{gated_masked_conv_forward.1} parent=11 // pred_fallthru
          _
        // Predicated region
        $region25: #{gated_masked_conv_forward.1} parent=11 // pred_check
          %p269 = pneg %p157
        $region26: #{gated_masked_conv_forward.1} parent=11 // pred_check_branch
          %271 = sbr.rel (%p269) target = $region28
        $region27: #{gated_masked_conv_forward.1} parent=11 // pred_region
          _
        $region28: #{gated_masked_conv_forward.1} parent=11 // pred_fallthru
          _
        // Predicated region
        $region29: #{gated_masked_conv_forward.1} parent=11 // pred_check
          %p272 = pneg %p178
        $region30: #{gated_masked_conv_forward.1} parent=11 // pred_check_branch
          %274 = sbr.rel (%p272) target = $region32
        $region31: #{gated_masked_conv_forward.1} parent=11 // pred_region
          %s276 = ssub.s32 512, 512
          %277 = vsyncadd [#allocation10], %s276
          %s278 = sshll.u32 [#allocation11], 4
          %s279 = int_to_ptr.vmem [resolvable:$true] %s278
          %284 = dma.hbm_to_vmem [thread:$0]  %s6, 512, %s279, [#allocation10], 64, 64, 4
        $region32: #{gated_masked_conv_forward.1} parent=11 // pred_fallthru
          _
        // Predicated region
        $region33: #{gated_masked_conv_forward.1} parent=11 // pred_check
          %p285 = pneg %p199
        $region34: #{gated_masked_conv_forward.1} parent=11 // pred_check_branch
          %287 = sbr.rel (%p285) target = $region36
        $region35: #{gated_masked_conv_forward.1} parent=11 // pred_region
          _
        $region36: #{gated_masked_conv_forward.1} parent=11 // pred_fallthru
          _
      $region12: #{gated_masked_conv_forward.1} parent=5 // pred_fallthru
        _
      %p288 = scmp.lt.s32.totalorder %s21, 2
      // Predicated region
      $region37: #{gated_masked_conv_forward.1} parent=5 // pred_check
        %p289 = pneg %p288
      $region38: #{gated_masked_conv_forward.1} parent=5 // pred_check_branch
        %291 = sbr.rel (%p289) target = $region40
      $region39: #{gated_masked_conv_forward.1} parent=5 // pred_region
        // Predicated region
        $region41: #{gated_masked_conv_forward.1} parent=39 // pred_check
          %p292 = pneg %p41
        $region42: #{gated_masked_conv_forward.1} parent=39 // pred_check_branch
          %294 = sbr.rel (%p292) target = $region44
        $region43: #{gated_masked_conv_forward.1} parent=39 // pred_region
          %s295 = sand.u32 %s31, 1
          %s296 = scalar_lea.sflag [#allocation5], %s295
          %s297 = sand.u32 %s31, 1
          %s298 = smul.addr %s297, 256
          %s299 = scalar_lea.vmem [#allocation4], %s298
          %s301 = ssub.s32 4096, 4096
          %302 = vsyncadd %s296, %s301
          %s303 = smul.addr %s21, 32
          %s304 = smul.addr %s303, 128
          %s305 = scalar_lea.hbm %s0, %s304
          %s306 = sshll.u32 %s299, 4
          %s307 = int_to_ptr.vmem [resolvable:$true] %s306
          %312 = dma.hbm_to_vmem [thread:$0]  %s305, 4096, %s307, %s296, 128, 128, 8
        $region44: #{gated_masked_conv_forward.1} parent=39 // pred_fallthru
          _
        // Predicated region
        $region45: #{gated_masked_conv_forward.1} parent=39 // pred_check
          %p313 = pneg %p67
        $region46: #{gated_masked_conv_forward.1} parent=39 // pred_check_branch
          %315 = sbr.rel (%p313) target = $region48
        $region47: #{gated_masked_conv_forward.1} parent=39 // pred_region
          %s316 = sand.u32 %s21, 1
          %s317 = scalar_lea.sflag [#allocation7], %s316
          %s318 = sand.u32 %s57, 1
          %s319 = smul.addr %s318, 256
          %s320 = scalar_lea.vmem [#allocation6], %s319
          %s322 = ssub.s32 4096, 4096
          %323 = vsyncadd %s317, %s322
          %s324 = smul.addr %s21, 32
          %s325 = smul.addr %s324, 128
          %s326 = scalar_lea.hbm %s1, %s325
          %s327 = sshll.u32 %s320, 4
          %s328 = int_to_ptr.vmem [resolvable:$true] %s327
          %333 = dma.hbm_to_vmem [thread:$0]  %s326, 4096, %s328, %s317, 128, 128, 8
        $region48: #{gated_masked_conv_forward.1} parent=39 // pred_fallthru
          _
      $region40: #{gated_masked_conv_forward.1} parent=5 // pred_fallthru
        _
      %p334 = scmp.le.s32.totalorder 1, %s21
      %p335 = scmp.lt.s32.totalorder %s21, 3
      %p336 = pnand %p334, %p335
      %p337 = pneg %p336
      // Predicated region
      $region49: #{gated_masked_conv_forward.1} parent=5 // pred_check
        _
      $region50: #{gated_masked_conv_forward.1} parent=5 // pred_check_branch
        %339 = sbr.rel (%p336) target = $region52
      $region51: #{gated_masked_conv_forward.1} parent=5 // pred_region
        %s340 = ssub.s32 %s21, 1
        %s341 = sand.u32 %s34, 1
        %s342 = scalar_lea.sflag [#allocation5], %s341
        %s343 = sand.u32 %s34, 1
        %s344 = smul.addr %s343, 256
        %s345 = scalar_lea.vmem [#allocation4], %s344
        // Predicated region
        $region53: #{gated_masked_conv_forward.1} parent=51 // pred_check
          %p346 = pneg %p47
        $region54: #{gated_masked_conv_forward.1} parent=51 // pred_check_branch
          %348 = sbr.rel (%p346) target = $region56
        $region55: #{gated_masked_conv_forward.1} parent=51 // pred_region
          %349 = dma.done %s342, 4096
        $region56: #{gated_masked_conv_forward.1} parent=51 // pred_fallthru
          _
        %s350 = sand.u32 %s26, 1
        %s351 = scalar_lea.sflag [#allocation7], %s350
        %s352 = sand.u32 %s60, 1
        %s353 = smul.addr %s352, 256
        %s354 = scalar_lea.vmem [#allocation6], %s353
        // Predicated region
        $region57: #{gated_masked_conv_forward.1} parent=51 // pred_check
          %p355 = pneg %p73
        $region58: #{gated_masked_conv_forward.1} parent=51 // pred_check_branch
          %357 = sbr.rel (%p355) target = $region60
        $region59: #{gated_masked_conv_forward.1} parent=51 // pred_region
          %358 = dma.done %s351, 4096
        $region60: #{gated_masked_conv_forward.1} parent=51 // pred_fallthru
          _
        // Predicated region
        $region61: #{gated_masked_conv_forward.1} parent=51 // pred_check
          %p359 = pneg %p94
        $region62: #{gated_masked_conv_forward.1} parent=51 // pred_check_branch
          %361 = sbr.rel (%p359) target = $region64
        $region63: #{gated_masked_conv_forward.1} parent=51 // pred_region
          %362 = dma.done [#allocation7], 3072
        $region64: #{gated_masked_conv_forward.1} parent=51 // pred_fallthru
          _
        // Predicated region
        $region65: #{gated_masked_conv_forward.1} parent=51 // pred_check
          %p363 = pneg %p136
        $region66: #{gated_masked_conv_forward.1} parent=51 // pred_check_branch
          %365 = sbr.rel (%p363) target = $region68
        $region67: #{gated_masked_conv_forward.1} parent=51 // pred_region
          %366 = dma.done [#allocation10], 2048
        $region68: #{gated_masked_conv_forward.1} parent=51 // pred_fallthru
          _
        // Predicated region
        $region69: #{gated_masked_conv_forward.1} parent=51 // pred_check
          %p367 = pneg %p178
        $region70: #{gated_masked_conv_forward.1} parent=51 // pred_check_branch
          %369 = sbr.rel (%p367) target = $region72
        $region71: #{gated_masked_conv_forward.1} parent=51 // pred_region
          %370 = dma.done [#allocation10], 512
        $region72: #{gated_masked_conv_forward.1} parent=51 // pred_fallthru
          _
        %s371 = sand.u32 %s34, 1
        %s372 = scalar_lea.sflag [#allocation5], %s371
        %s373 = sand.u32 %s34, 1
        %s374 = smul.addr %s373, 256
        %s375 = scalar_lea.vmem [#allocation4], %s374
        %p376 = pneg %p47
        %p377 = pneg %p44
        %s378 = sand.u32 %s26, 1
        %s379 = scalar_lea.sflag [#allocation7], %s378
        %s380 = sand.u32 %s60, 1
        %s381 = smul.addr %s380, 256
        %s382 = scalar_lea.vmem [#allocation6], %s381
        %p383 = pneg %p73
        %p384 = pneg %p70
        %p385 = pneg %p94
        %p386 = pneg %p91
        %p387 = pneg %p115
        %p388 = pneg %p112
        %p389 = pneg %p136
        %p390 = pneg %p133
        %p391 = pneg %p157
        %p392 = pneg %p154
        %p393 = pneg %p178
        %p394 = pneg %p175
        %p395 = pneg %p199
        %p396 = pneg %p196
        %p397 = pneg %p225
        %p398 = pneg %p222
        %p399 = scmp.lt.s32.totalorder %s26, 1
        %s400 = scalar_select %p399, %s26, 1
        %s401 = smul.addr %s400, 32
        %s402 = smul.addr %s401, 8
        %s403 = scalar_lea.vmem %s8, %s402
        %p404 = scmp.lt.s32.totalorder %s26, 1
        %s405 = scalar_select %p404, %s26, 1
        %s406 = smul.addr %s405, 32
        %s407 = smul.addr %s406, 8
        %s408 = scalar_lea.vmem %s8, %s407
        %v410 = vld [vmem:[%s345] sm:$0xff]
        %v411 = vld [vmem:[%s345 + $0x8] sm:$0xff]
        %v412 = vld [vmem:[%s345 + $0x10] sm:$0xff]
        %v413 = vld [vmem:[%s345 + $0x18] sm:$0xff]
        %v414 = vld [vmem:[%s345 + $0x20] sm:$0xff]
        %v415 = vld [vmem:[%s345 + $0x28] sm:$0xff]
        %v416 = vld [vmem:[%s345 + $0x30] sm:$0xff]
        %v417 = vld [vmem:[%s345 + $0x38] sm:$0xff]
        %v418 = vld [vmem:[%s345 + $0x40] sm:$0xff]
        %v419 = vld [vmem:[%s345 + $0x48] sm:$0xff]
        %v420 = vld [vmem:[%s345 + $0x50] sm:$0xff]
        %v421 = vld [vmem:[%s345 + $0x58] sm:$0xff]
        %v422 = vld [vmem:[%s345 + $0x60] sm:$0xff]
        %v423 = vld [vmem:[%s345 + $0x68] sm:$0xff]
        %v424 = vld [vmem:[%s345 + $0x70] sm:$0xff]
        %v425 = vld [vmem:[%s345 + $0x78] sm:$0xff]
        %v426 = vld [vmem:[%s345 + $0x80] sm:$0xff]
        %v427 = vld [vmem:[%s345 + $0x88] sm:$0xff]
        %v428 = vld [vmem:[%s345 + $0x90] sm:$0xff]
        %v429 = vld [vmem:[%s345 + $0x98] sm:$0xff]
        %v430 = vld [vmem:[%s345 + $0xa0] sm:$0xff]
        %v431 = vld [vmem:[%s345 + $0xa8] sm:$0xff]
        %v432 = vld [vmem:[%s345 + $0xb0] sm:$0xff]
        %v433 = vld [vmem:[%s345 + $0xb8] sm:$0xff]
        %v434 = vld [vmem:[%s345 + $0xc0] sm:$0xff]
        %v435 = vld [vmem:[%s345 + $0xc8] sm:$0xff]
        %v436 = vld [vmem:[%s345 + $0xd0] sm:$0xff]
        %v437 = vld [vmem:[%s345 + $0xd8] sm:$0xff]
        %v438 = vld [vmem:[%s345 + $0xe0] sm:$0xff]
        %v439 = vld [vmem:[%s345 + $0xe8] sm:$0xff]
        %v440 = vld [vmem:[%s345 + $0xf0] sm:$0xff]
        %v441 = vld [vmem:[%s345 + $0xf8] sm:$0xff]
        %v442 = vld [vmem:[%s354] sm:$0xff]
        %v443 = vld [vmem:[%s354 + $0x8] sm:$0xff]
        %v444 = vld [vmem:[%s354 + $0x10] sm:$0xff]
        %v445 = vld [vmem:[%s354 + $0x18] sm:$0xff]
        %v446 = vld [vmem:[%s354 + $0x20] sm:$0xff]
        %v447 = vld [vmem:[%s354 + $0x28] sm:$0xff]
        %v448 = vld [vmem:[%s354 + $0x30] sm:$0xff]
        %v449 = vld [vmem:[%s354 + $0x38] sm:$0xff]
        %v450 = vld [vmem:[%s354 + $0x40] sm:$0xff]
        %v451 = vld [vmem:[%s354 + $0x48] sm:$0xff]
        %v452 = vld [vmem:[%s354 + $0x50] sm:$0xff]
        %v453 = vld [vmem:[%s354 + $0x58] sm:$0xff]
        %v454 = vld [vmem:[%s354 + $0x60] sm:$0xff]
        %v455 = vld [vmem:[%s354 + $0x68] sm:$0xff]
        %v456 = vld [vmem:[%s354 + $0x70] sm:$0xff]
        %v457 = vld [vmem:[%s354 + $0x78] sm:$0xff]
        %v458 = vld [vmem:[%s354 + $0x80] sm:$0xff]
        %v459 = vld [vmem:[%s354 + $0x88] sm:$0xff]
        %v460 = vld [vmem:[%s354 + $0x90] sm:$0xff]
        %v461 = vld [vmem:[%s354 + $0x98] sm:$0xff]
        %v462 = vld [vmem:[%s354 + $0xa0] sm:$0xff]
        %v463 = vld [vmem:[%s354 + $0xa8] sm:$0xff]
        %v464 = vld [vmem:[%s354 + $0xb0] sm:$0xff]
        %v465 = vld [vmem:[%s354 + $0xb8] sm:$0xff]
        %v466 = vld [vmem:[%s354 + $0xc0] sm:$0xff]
        %v467 = vld [vmem:[%s354 + $0xc8] sm:$0xff]
        %v468 = vld [vmem:[%s354 + $0xd0] sm:$0xff]
        %v469 = vld [vmem:[%s354 + $0xd8] sm:$0xff]
        %v470 = vld [vmem:[%s354 + $0xe0] sm:$0xff]
        %v471 = vld [vmem:[%s354 + $0xe8] sm:$0xff]
        %v472 = vld [vmem:[%s354 + $0xf0] sm:$0xff]
        %v473 = vld [vmem:[%s354 + $0xf8] sm:$0xff]
        %vm474 = vcmask 523264
        %475 = vst.msk [vmem:[#allocation2] sm:$0xff] %vm474, 0.0
        %476 = vst.msk [vmem:[#allocation2 + $0x8] sm:$0xff] %vm474, 0.0
        %vm477 = vcmask 517120
        %478 = vst.msk [vmem:[#allocation2 + $0x10] sm:$0x3] %vm477, 0.0
        %479 = vst.msk [vmem:[#allocation2 + $0x18] sm:$0xff] %vm474, 0.0
        %480 = vst.msk [vmem:[#allocation2 + $0x20] sm:$0xff] %vm474, 0.0
        %481 = vst.msk [vmem:[#allocation2 + $0x28] sm:$0x3] %vm477, 0.0
        %482 = vst.msk [vmem:[#allocation2 + $0x30] sm:$0xff] %vm474, 0.0
        %483 = vst.msk [vmem:[#allocation2 + $0x38] sm:$0xff] %vm474, 0.0
        %484 = vst.msk [vmem:[#allocation2 + $0x40] sm:$0x3] %vm477, 0.0
        %485 = vst.msk [vmem:[#allocation2 + $0x48] sm:$0xff] %vm474, 0.0
        %486 = vst.msk [vmem:[#allocation2 + $0x50] sm:$0xff] %vm474, 0.0
        %487 = vst.msk [vmem:[#allocation2 + $0x58] sm:$0x3] %vm477, 0.0
        %488 = vst.msk [vmem:[#allocation2 + $0x60] sm:$0xff] %vm474, 0.0
        %489 = vst.msk [vmem:[#allocation2 + $0x68] sm:$0xff] %vm474, 0.0
        %490 = vst.msk [vmem:[#allocation2 + $0x70] sm:$0x3] %vm477, 0.0
        %491 = vst.msk [vmem:[#allocation2 + $0x78] sm:$0xff] %vm474, 0.0
        %492 = vst.msk [vmem:[#allocation2 + $0x80] sm:$0xff] %vm474, 0.0
        %493 = vst.msk [vmem:[#allocation2 + $0x88] sm:$0x3] %vm477, 0.0
        %494 = vst.msk [vmem:[#allocation2 + $0x90] sm:$0xff] %vm474, 0.0
        %495 = vst.msk [vmem:[#allocation2 + $0x98] sm:$0xff] %vm474, 0.0
        %496 = vst.msk [vmem:[#allocation2 + $0xa0] sm:$0x3] %vm477, 0.0
        %497 = vst.msk [vmem:[#allocation2 + $0xa8] sm:$0xff] %vm474, 0.0
        %498 = vst.msk [vmem:[#allocation2 + $0xb0] sm:$0xff] %vm474, 0.0
        %499 = vst.msk [vmem:[#allocation2 + $0xb8] sm:$0x3] %vm477, 0.0
        %500 = vst.msk [vmem:[#allocation2 + $0xc0] sm:$0xff] %vm474, 0.0
        %501 = vst.msk [vmem:[#allocation2 + $0xc8] sm:$0xff] %vm474, 0.0
        %502 = vst.msk [vmem:[#allocation2 + $0xd0] sm:$0x3] %vm477, 0.0
        %503 = vst.msk [vmem:[#allocation2 + $0xd8] sm:$0xff] %vm474, 0.0
        %504 = vst.msk [vmem:[#allocation2 + $0xe0] sm:$0xff] %vm474, 0.0
        %505 = vst.msk [vmem:[#allocation2 + $0xe8] sm:$0x3] %vm477, 0.0
        %506 = vst.msk [vmem:[#allocation2 + $0xf0] sm:$0xff] %vm474, 0.0
        %507 = vst.msk [vmem:[#allocation2 + $0xf8] sm:$0xff] %vm474, 0.0
        %508 = vst.msk [vmem:[#allocation2 + $0x100] sm:$0x3] %vm477, 0.0
        %509 = vst.msk [vmem:[#allocation2 + $0x108] sm:$0xff] %vm474, 0.0
        %510 = vst.msk [vmem:[#allocation2 + $0x110] sm:$0xff] %vm474, 0.0
        %511 = vst.msk [vmem:[#allocation2 + $0x118] sm:$0x3] %vm477, 0.0
        %512 = vst.msk [vmem:[#allocation2 + $0x120] sm:$0xff] %vm474, 0.0
        %513 = vst.msk [vmem:[#allocation2 + $0x128] sm:$0xff] %vm474, 0.0
        %514 = vst.msk [vmem:[#allocation2 + $0x130] sm:$0x3] %vm477, 0.0
        %515 = vst.msk [vmem:[#allocation2 + $0x138] sm:$0xff] %vm474, 0.0
        %516 = vst.msk [vmem:[#allocation2 + $0x140] sm:$0xff] %vm474, 0.0
        %517 = vst.msk [vmem:[#allocation2 + $0x148] sm:$0x3] %vm477, 0.0
        %518 = vst.msk [vmem:[#allocation2 + $0x150] sm:$0xff] %vm474, 0.0
        %519 = vst.msk [vmem:[#allocation2 + $0x158] sm:$0xff] %vm474, 0.0
        %520 = vst.msk [vmem:[#allocation2 + $0x160] sm:$0x3] %vm477, 0.0
        %521 = vst.msk [vmem:[#allocation2 + $0x168] sm:$0xff] %vm474, 0.0
        %522 = vst.msk [vmem:[#allocation2 + $0x170] sm:$0xff] %vm474, 0.0
        %523 = vst.msk [vmem:[#allocation2 + $0x178] sm:$0x3] %vm477, 0.0
        %524 = vst.msk [vmem:[#allocation2 + $0x180] sm:$0xff] %vm474, 0.0
        %525 = vst.msk [vmem:[#allocation2 + $0x188] sm:$0xff] %vm474, 0.0
        %526 = vst.msk [vmem:[#allocation2 + $0x190] sm:$0x3] %vm477, 0.0
        %s527 = scalar_lea.vmem [#allocation2], 24
        %528 = vst.msk [vmem:[%s527 + $0x1] sm:$0xff] %vm474, %v410
        %529 = vst.msk [vmem:[%s527 + $0x9] sm:$0xff] %vm474, %v411
        %530 = vst.msk [vmem:[%s527 + $0x19] sm:$0xff] %vm474, %v412
        %531 = vst.msk [vmem:[%s527 + $0x21] sm:$0xff] %vm474, %v413
        %532 = vst.msk [vmem:[%s527 + $0x31] sm:$0xff] %vm474, %v414
        %533 = vst.msk [vmem:[%s527 + $0x39] sm:$0xff] %vm474, %v415
        %534 = vst.msk [vmem:[%s527 + $0x49] sm:$0xff] %vm474, %v416
        %535 = vst.msk [vmem:[%s527 + $0x51] sm:$0xff] %vm474, %v417
        %536 = vst.msk [vmem:[%s527 + $0x61] sm:$0xff] %vm474, %v418
        %537 = vst.msk [vmem:[%s527 + $0x69] sm:$0xff] %vm474, %v419
        %538 = vst.msk [vmem:[%s527 + $0x79] sm:$0xff] %vm474, %v420
        %539 = vst.msk [vmem:[%s527 + $0x81] sm:$0xff] %vm474, %v421
        %540 = vst.msk [vmem:[%s527 + $0x91] sm:$0xff] %vm474, %v422
        %541 = vst.msk [vmem:[%s527 + $0x99] sm:$0xff] %vm474, %v423
        %542 = vst.msk [vmem:[%s527 + $0xa9] sm:$0xff] %vm474, %v424
        %543 = vst.msk [vmem:[%s527 + $0xb1] sm:$0xff] %vm474, %v425
        %544 = vst.msk [vmem:[%s527 + $0xc1] sm:$0xff] %vm474, %v426
        %545 = vst.msk [vmem:[%s527 + $0xc9] sm:$0xff] %vm474, %v427
        %546 = vst.msk [vmem:[%s527 + $0xd9] sm:$0xff] %vm474, %v428
        %547 = vst.msk [vmem:[%s527 + $0xe1] sm:$0xff] %vm474, %v429
        %548 = vst.msk [vmem:[%s527 + $0xf1] sm:$0xff] %vm474, %v430
        %549 = vst.msk [vmem:[%s527 + $0xf9] sm:$0xff] %vm474, %v431
        %550 = vst.msk [vmem:[%s527 + $0x109] sm:$0xff] %vm474, %v432
        %551 = vst.msk [vmem:[%s527 + $0x111] sm:$0xff] %vm474, %v433
        %552 = vst.msk [vmem:[%s527 + $0x121] sm:$0xff] %vm474, %v434
        %553 = vst.msk [vmem:[%s527 + $0x129] sm:$0xff] %vm474, %v435
        %554 = vst.msk [vmem:[%s527 + $0x139] sm:$0xff] %vm474, %v436
        %555 = vst.msk [vmem:[%s527 + $0x141] sm:$0xff] %vm474, %v437
        %556 = vst.msk [vmem:[%s527 + $0x151] sm:$0xff] %vm474, %v438
        %557 = vst.msk [vmem:[%s527 + $0x159] sm:$0xff] %vm474, %v439
        %558 = vst.msk [vmem:[%s527 + $0x169] sm:$0xff] %vm474, %v440
        %559 = vst.msk [vmem:[%s527 + $0x171] sm:$0xff] %vm474, %v441
        %560 = vst.msk [vmem:[#allocation3] sm:$0xff] %vm474, 0.0
        %561 = vst.msk [vmem:[#allocation3 + $0x8] sm:$0xff] %vm474, 0.0
        %vm562 = vcmask 516096
        %563 = vst.msk [vmem:[#allocation3 + $0x10] sm:$0x1] %vm562, 0.0
        %564 = vst.msk [vmem:[#allocation3 + $0x18] sm:$0xff] %vm474, 0.0
        %565 = vst.msk [vmem:[#allocation3 + $0x20] sm:$0xff] %vm474, 0.0
        %566 = vst.msk [vmem:[#allocation3 + $0x28] sm:$0x1] %vm562, 0.0
        %567 = vst.msk [vmem:[#allocation3 + $0x30] sm:$0xff] %vm474, 0.0
        %568 = vst.msk [vmem:[#allocation3 + $0x38] sm:$0xff] %vm474, 0.0
        %569 = vst.msk [vmem:[#allocation3 + $0x40] sm:$0x1] %vm562, 0.0
        %570 = vst.msk [vmem:[#allocation3 + $0x48] sm:$0xff] %vm474, 0.0
        %571 = vst.msk [vmem:[#allocation3 + $0x50] sm:$0xff] %vm474, 0.0
        %572 = vst.msk [vmem:[#allocation3 + $0x58] sm:$0x1] %vm562, 0.0
        %573 = vst.msk [vmem:[#allocation3 + $0x60] sm:$0xff] %vm474, 0.0
        %574 = vst.msk [vmem:[#allocation3 + $0x68] sm:$0xff] %vm474, 0.0
        %575 = vst.msk [vmem:[#allocation3 + $0x70] sm:$0x1] %vm562, 0.0
        %576 = vst.msk [vmem:[#allocation3 + $0x78] sm:$0xff] %vm474, 0.0
        %577 = vst.msk [vmem:[#allocation3 + $0x80] sm:$0xff] %vm474, 0.0
        %578 = vst.msk [vmem:[#allocation3 + $0x88] sm:$0x1] %vm562, 0.0
        %579 = vst.msk [vmem:[#allocation3 + $0x90] sm:$0xff] %vm474, 0.0
        %580 = vst.msk [vmem:[#allocation3 + $0x98] sm:$0xff] %vm474, 0.0
        %581 = vst.msk [vmem:[#allocation3 + $0xa0] sm:$0x1] %vm562, 0.0
        %582 = vst.msk [vmem:[#allocation3 + $0xa8] sm:$0xff] %vm474, 0.0
        %583 = vst.msk [vmem:[#allocation3 + $0xb0] sm:$0xff] %vm474, 0.0
        %584 = vst.msk [vmem:[#allocation3 + $0xb8] sm:$0x1] %vm562, 0.0
        %585 = vst.msk [vmem:[#allocation3 + $0xc0] sm:$0xff] %vm474, 0.0
        %586 = vst.msk [vmem:[#allocation3 + $0xc8] sm:$0xff] %vm474, 0.0
        %587 = vst.msk [vmem:[#allocation3 + $0xd0] sm:$0x1] %vm562, 0.0
        %588 = vst.msk [vmem:[#allocation3 + $0xd8] sm:$0xff] %vm474, 0.0
        %589 = vst.msk [vmem:[#allocation3 + $0xe0] sm:$0xff] %vm474, 0.0
        %590 = vst.msk [vmem:[#allocation3 + $0xe8] sm:$0x1] %vm562, 0.0
        %591 = vst.msk [vmem:[#allocation3 + $0xf0] sm:$0xff] %vm474, 0.0
        %592 = vst.msk [vmem:[#allocation3 + $0xf8] sm:$0xff] %vm474, 0.0
        %593 = vst.msk [vmem:[#allocation3 + $0x100] sm:$0x1] %vm562, 0.0
        %594 = vst.msk [vmem:[#allocation3 + $0x108] sm:$0xff] %vm474, 0.0
        %595 = vst.msk [vmem:[#allocation3 + $0x110] sm:$0xff] %vm474, 0.0
        %596 = vst.msk [vmem:[#allocation3 + $0x118] sm:$0x1] %vm562, 0.0
        %597 = vst.msk [vmem:[#allocation3 + $0x120] sm:$0xff] %vm474, 0.0
        %598 = vst.msk [vmem:[#allocation3 + $0x128] sm:$0xff] %vm474, 0.0
        %599 = vst.msk [vmem:[#allocation3 + $0x130] sm:$0x1] %vm562, 0.0
        %600 = vst.msk [vmem:[#allocation3 + $0x138] sm:$0xff] %vm474, 0.0
        %601 = vst.msk [vmem:[#allocation3 + $0x140] sm:$0xff] %vm474, 0.0
        %602 = vst.msk [vmem:[#allocation3 + $0x148] sm:$0x1] %vm562, 0.0
        %603 = vst.msk [vmem:[#allocation3 + $0x150] sm:$0xff] %vm474, 0.0
        %604 = vst.msk [vmem:[#allocation3 + $0x158] sm:$0xff] %vm474, 0.0
        %605 = vst.msk [vmem:[#allocation3 + $0x160] sm:$0x1] %vm562, 0.0
        %606 = vst.msk [vmem:[#allocation3 + $0x168] sm:$0xff] %vm474, 0.0
        %607 = vst.msk [vmem:[#allocation3 + $0x170] sm:$0xff] %vm474, 0.0
        %608 = vst.msk [vmem:[#allocation3 + $0x178] sm:$0x1] %vm562, 0.0
        %609 = vst.msk [vmem:[#allocation3 + $0x1] sm:$0xff] %vm474, %v442
        %610 = vst.msk [vmem:[#allocation3 + $0x9] sm:$0xff] %vm474, %v443
        %611 = vst.msk [vmem:[#allocation3 + $0x19] sm:$0xff] %vm474, %v444
        %612 = vst.msk [vmem:[#allocation3 + $0x21] sm:$0xff] %vm474, %v445
        %613 = vst.msk [vmem:[#allocation3 + $0x31] sm:$0xff] %vm474, %v446
        %614 = vst.msk [vmem:[#allocation3 + $0x39] sm:$0xff] %vm474, %v447
        %615 = vst.msk [vmem:[#allocation3 + $0x49] sm:$0xff] %vm474, %v448
        %616 = vst.msk [vmem:[#allocation3 + $0x51] sm:$0xff] %vm474, %v449
        %617 = vst.msk [vmem:[#allocation3 + $0x61] sm:$0xff] %vm474, %v450
        %618 = vst.msk [vmem:[#allocation3 + $0x69] sm:$0xff] %vm474, %v451
        %619 = vst.msk [vmem:[#allocation3 + $0x79] sm:$0xff] %vm474, %v452
        %620 = vst.msk [vmem:[#allocation3 + $0x81] sm:$0xff] %vm474, %v453
        %621 = vst.msk [vmem:[#allocation3 + $0x91] sm:$0xff] %vm474, %v454
        %622 = vst.msk [vmem:[#allocation3 + $0x99] sm:$0xff] %vm474, %v455
        %623 = vst.msk [vmem:[#allocation3 + $0xa9] sm:$0xff] %vm474, %v456
        %624 = vst.msk [vmem:[#allocation3 + $0xb1] sm:$0xff] %vm474, %v457
        %625 = vst.msk [vmem:[#allocation3 + $0xc1] sm:$0xff] %vm474, %v458
        %626 = vst.msk [vmem:[#allocation3 + $0xc9] sm:$0xff] %vm474, %v459
        %627 = vst.msk [vmem:[#allocation3 + $0xd9] sm:$0xff] %vm474, %v460
        %628 = vst.msk [vmem:[#allocation3 + $0xe1] sm:$0xff] %vm474, %v461
        %629 = vst.msk [vmem:[#allocation3 + $0xf1] sm:$0xff] %vm474, %v462
        %630 = vst.msk [vmem:[#allocation3 + $0xf9] sm:$0xff] %vm474, %v463
        %631 = vst.msk [vmem:[#allocation3 + $0x109] sm:$0xff] %vm474, %v464
        %632 = vst.msk [vmem:[#allocation3 + $0x111] sm:$0xff] %vm474, %v465
        %633 = vst.msk [vmem:[#allocation3 + $0x121] sm:$0xff] %vm474, %v466
        %634 = vst.msk [vmem:[#allocation3 + $0x129] sm:$0xff] %vm474, %v467
        %635 = vst.msk [vmem:[#allocation3 + $0x139] sm:$0xff] %vm474, %v468
        %636 = vst.msk [vmem:[#allocation3 + $0x141] sm:$0xff] %vm474, %v469
        %637 = vst.msk [vmem:[#allocation3 + $0x151] sm:$0xff] %vm474, %v470
        %638 = vst.msk [vmem:[#allocation3 + $0x159] sm:$0xff] %vm474, %v471
        %639 = vst.msk [vmem:[#allocation3 + $0x169] sm:$0xff] %vm474, %v472
        %640 = vst.msk [vmem:[#allocation3 + $0x171] sm:$0xff] %vm474, %v473
        %v641 = vld [vmem:[%s3] sm:$0x1]
        %v643 = vlaneseq
        %v644 = vshrl.u32 %v643, 7
        %v645 = vsub.s32 0, %v644
        %v646 = vrot.slane %v641, %v645
        %v648 = vld [vmem:[#allocation2] sm:$0xff]
        %v649 = vld [vmem:[#allocation2 + $0x8] sm:$0xff]
        %v650 = vld [vmem:[#allocation2 + $0x18] sm:$0xff]
        %v651 = vld [vmem:[#allocation2 + $0x20] sm:$0xff]
        %v652 = vld [vmem:[#allocation2 + $0x30] sm:$0xff]
        %v653 = vld [vmem:[#allocation2 + $0x38] sm:$0xff]
        %v654 = vld [vmem:[#allocation2 + $0x48] sm:$0xff]
        %v655 = vld [vmem:[#allocation2 + $0x50] sm:$0xff]
        %v656 = vld [vmem:[#allocation2 + $0x60] sm:$0xff]
        %v657 = vld [vmem:[#allocation2 + $0x68] sm:$0xff]
        %v658 = vld [vmem:[#allocation2 + $0x78] sm:$0xff]
        %v659 = vld [vmem:[#allocation2 + $0x80] sm:$0xff]
        %v660 = vld [vmem:[#allocation2 + $0x90] sm:$0xff]
        %v661 = vld [vmem:[#allocation2 + $0x98] sm:$0xff]
        %v662 = vld [vmem:[#allocation2 + $0xa8] sm:$0xff]
        %v663 = vld [vmem:[#allocation2 + $0xb0] sm:$0xff]
        %v664 = vld [vmem:[#allocation2 + $0xc0] sm:$0xff]
        %v665 = vld [vmem:[#allocation2 + $0xc8] sm:$0xff]
        %v666 = vld [vmem:[#allocation2 + $0xd8] sm:$0xff]
        %v667 = vld [vmem:[#allocation2 + $0xe0] sm:$0xff]
        %v668 = vld [vmem:[#allocation2 + $0xf0] sm:$0xff]
        %v669 = vld [vmem:[#allocation2 + $0xf8] sm:$0xff]
        %v670 = vld [vmem:[#allocation2 + $0x108] sm:$0xff]
        %v671 = vld [vmem:[#allocation2 + $0x110] sm:$0xff]
        %v672 = vld [vmem:[#allocation2 + $0x120] sm:$0xff]
        %v673 = vld [vmem:[#allocation2 + $0x128] sm:$0xff]
        %v674 = vld [vmem:[#allocation2 + $0x138] sm:$0xff]
        %v675 = vld [vmem:[#allocation2 + $0x140] sm:$0xff]
        %v676 = vld [vmem:[#allocation2 + $0x150] sm:$0xff]
        %v677 = vld [vmem:[#allocation2 + $0x158] sm:$0xff]
        %v678 = vld [vmem:[#allocation2 + $0x168] sm:$0xff]
        %v679 = vld [vmem:[#allocation2 + $0x170] sm:$0xff]
        %v680 = vpack.c.bf16 %v649, %v648
        %v681 = vpack.c.bf16 %v651, %v650
        %v682 = vpack.c.bf16 %v653, %v652
        %v683 = vpack.c.bf16 %v655, %v654
        %v684 = vpack.c.bf16 %v657, %v656
        %v685 = vpack.c.bf16 %v659, %v658
        %v686 = vpack.c.bf16 %v661, %v660
        %v687 = vpack.c.bf16 %v663, %v662
        %v688 = vpack.c.bf16 %v665, %v664
        %v689 = vpack.c.bf16 %v667, %v666
        %v690 = vpack.c.bf16 %v669, %v668
        %v691 = vpack.c.bf16 %v671, %v670
        %v692 = vpack.c.bf16 %v673, %v672
        %v693 = vpack.c.bf16 %v675, %v674
        %v694 = vpack.c.bf16 %v677, %v676
        %v695 = vpack.c.bf16 %v679, %v678
        %v696 = vld [vmem:[#allocation8] sm:$0xf]
        %v697 = vld [vmem:[#allocation8 + $0x4] sm:$0xf]
        %v698 = vld [vmem:[#allocation8 + $0x8] sm:$0xf]
        %v699 = vld [vmem:[#allocation8 + $0xc] sm:$0xf]
        %v700 = vld [vmem:[#allocation8 + $0x10] sm:$0xf]
        %v701 = vld [vmem:[#allocation8 + $0x14] sm:$0xf]
        %v702 = vld [vmem:[#allocation8 + $0x18] sm:$0xf]
        %v703 = vld [vmem:[#allocation8 + $0x1c] sm:$0xf]
        %v712 = vunpack.c.l.b16 %v696
        %v713 = vunpack.c.l.b16 %v697
        %v714 = vunpack.c.l.b16 %v698
        %v715 = vunpack.c.l.b16 %v699
        %v716 = vunpack.c.l.b16 %v700
        %v717 = vunpack.c.l.b16 %v701
        %v718 = vunpack.c.l.b16 %v702
        %v719 = vunpack.c.l.b16 %v703
        %v720 = vpack.c.b16 %v713, %v712
        %v721 = vpack.c.b16 %v715, %v714
        %v722 = vpack.c.b16 %v717, %v716
        %v723 = vpack.c.b16 %v719, %v718
        %v729 = vsel %vm474, %v680, 0
        %v732 = vsel %vm474, %v681, 0
        %v735 = vsel %vm474, %v682, 0
        %v738 = vsel %vm474, %v683, 0
        %v741 = vsel %vm474, %v684, 0
        %v744 = vsel %vm474, %v685, 0
        %v747 = vsel %vm474, %v686, 0
        %v750 = vsel %vm474, %v687, 0
        %v753 = vsel %vm474, %v688, 0
        %v756 = vsel %vm474, %v689, 0
        %v759 = vsel %vm474, %v690, 0
        %v762 = vsel %vm474, %v691, 0
        %v765 = vsel %vm474, %v692, 0
        %v768 = vsel %vm474, %v693, 0
        %v771 = vsel %vm474, %v694, 0
        %v774 = vsel %vm474, %v695, 0
        %776 = vmatprep.subr.bf16.mxu0 0
        %777 = vmatpush1.bf16.msra.mxu0 0
        %778 = vmatprep.subr.bf16.mxu0 0
        %779 = vmatpush1.bf16.msra.mxu0 0
        %780 = vmatprep.subr.bf16.mxu0 0
        %781 = vmatpush1.bf16.msra.mxu0 0
        %782 = vmatprep.subr.bf16.mxu0 0
        %783 = vmatpush1.bf16.msra.mxu0 0
        %784 = vmatprep.subr.bf16.mxu0 0
        %785 = vmatpush1.bf16.msra.mxu0 %v723
        %786 = vmatprep.subr.bf16.mxu0 0
        %787 = vmatpush1.bf16.msra.mxu0 %v722
        %788 = vmatprep.subr.bf16.mxu0 0
        %789 = vmatpush1.bf16.msra.mxu0 %v721
        %790 = vmatprep.subr.bf16.mxu0 0
        %791 = vmatpush1.bf16.msra.mxu0 %v720
        %792 = vmatprep.subr.bf16.mxu0 0
        %793 = vmatpush2.bf16.msra.mxu0 0
        %794 = vmatprep.subr.bf16.mxu0 0
        %795 = vmatpush2.bf16.msra.mxu0 0
        %796 = vmatprep.subr.bf16.mxu0 0
        %797 = vmatpush2.bf16.msra.mxu0 0
        %798 = vmatprep.subr.bf16.mxu0 0
        %799 = vmatpush2.bf16.msra.mxu0 0
        %800 = vmatprep.subr.bf16.mxu0 0
        %801 = vmatpush2.bf16.msra.mxu0 0
        %802 = vmatprep.subr.bf16.mxu0 0
        %803 = vmatpush2.bf16.msra.mxu0 0
        %804 = vmatprep.subr.bf16.mxu0 0
        %805 = vmatpush2.bf16.msra.mxu0 0
        %806 = vmatprep.subr.bf16.mxu0 0
        %807 = vmatpush2.bf16.msra.mxu0 0
        %808 = vmatprep.mubr.bf16.mxu0 0
        %809 = vmatmul.mubr.bf16.gmra.mxu0 %v729
        %v810 = vpop.f32.mrf.mxu0
        %v811 = vadd.f32 0.0, %v810
        %v812 = vpop.f32.mrf.mxu0
        %v813 = vpop.f32.mrf.mxu0
        %v814 = vadd.f32 0.0, %v813
        %v815 = vpop.f32.mrf.mxu0
        %816 = vmatprep.mubr.bf16.mxu0 0
        %817 = vmatmul.mubr.bf16.gmra.mxu0 %v732
        %v818 = vpop.f32.mrf.mxu0
        %v819 = vadd.f32 0.0, %v818
        %v820 = vpop.f32.mrf.mxu0
        %v821 = vpop.f32.mrf.mxu0
        %v822 = vadd.f32 0.0, %v821
        %v823 = vpop.f32.mrf.mxu0
        %824 = vmatprep.mubr.bf16.mxu0 0
        %825 = vmatmul.mubr.bf16.gmra.mxu0 %v735
        %v826 = vpop.f32.mrf.mxu0
        %v827 = vadd.f32 0.0, %v826
        %v828 = vpop.f32.mrf.mxu0
        %v829 = vpop.f32.mrf.mxu0
        %v830 = vadd.f32 0.0, %v829
        %v831 = vpop.f32.mrf.mxu0
        %832 = vmatprep.mubr.bf16.mxu0 0
        %833 = vmatmul.mubr.bf16.gmra.mxu0 %v738
        %v834 = vpop.f32.mrf.mxu0
        %v835 = vadd.f32 0.0, %v834
        %v836 = vpop.f32.mrf.mxu0
        %v837 = vpop.f32.mrf.mxu0
        %v838 = vadd.f32 0.0, %v837
        %v839 = vpop.f32.mrf.mxu0
        %840 = vmatprep.mubr.bf16.mxu0 0
        %841 = vmatmul.mubr.bf16.gmra.mxu0 %v741
        %v842 = vpop.f32.mrf.mxu0
        %v843 = vadd.f32 0.0, %v842
        %v844 = vpop.f32.mrf.mxu0
        %v845 = vpop.f32.mrf.mxu0
        %v846 = vadd.f32 0.0, %v845
        %v847 = vpop.f32.mrf.mxu0
        %848 = vmatprep.mubr.bf16.mxu0 0
        %849 = vmatmul.mubr.bf16.gmra.mxu0 %v744
        %v850 = vpop.f32.mrf.mxu0
        %v851 = vadd.f32 0.0, %v850
        %v852 = vpop.f32.mrf.mxu0
        %v853 = vpop.f32.mrf.mxu0
        %v854 = vadd.f32 0.0, %v853
        %v855 = vpop.f32.mrf.mxu0
        %856 = vmatprep.mubr.bf16.mxu0 0
        %857 = vmatmul.mubr.bf16.gmra.mxu0 %v747
        %v858 = vpop.f32.mrf.mxu0
        %v859 = vadd.f32 0.0, %v858
        %v860 = vpop.f32.mrf.mxu0
        %v861 = vpop.f32.mrf.mxu0
        %v862 = vadd.f32 0.0, %v861
        %v863 = vpop.f32.mrf.mxu0
        %864 = vmatprep.mubr.bf16.mxu0 0
        %865 = vmatmul.mubr.bf16.gmra.mxu0 %v750
        %v866 = vpop.f32.mrf.mxu0
        %v867 = vadd.f32 0.0, %v866
        %v868 = vpop.f32.mrf.mxu0
        %v869 = vpop.f32.mrf.mxu0
        %v870 = vadd.f32 0.0, %v869
        %v871 = vpop.f32.mrf.mxu0
        %872 = vmatprep.mubr.bf16.mxu0 0
        %873 = vmatmul.mubr.bf16.gmra.mxu0 %v753
        %v874 = vpop.f32.mrf.mxu0
        %v875 = vadd.f32 0.0, %v874
        %v876 = vpop.f32.mrf.mxu0
        %v877 = vpop.f32.mrf.mxu0
        %v878 = vadd.f32 0.0, %v877
        %v879 = vpop.f32.mrf.mxu0
        %880 = vmatprep.mubr.bf16.mxu0 0
        %881 = vmatmul.mubr.bf16.gmra.mxu0 %v756
        %v882 = vpop.f32.mrf.mxu0
        %v883 = vadd.f32 0.0, %v882
        %v884 = vpop.f32.mrf.mxu0
        %v885 = vpop.f32.mrf.mxu0
        %v886 = vadd.f32 0.0, %v885
        %v887 = vpop.f32.mrf.mxu0
        %888 = vmatprep.mubr.bf16.mxu0 0
        %889 = vmatmul.mubr.bf16.gmra.mxu0 %v759
        %v890 = vpop.f32.mrf.mxu0
        %v891 = vadd.f32 0.0, %v890
        %v892 = vpop.f32.mrf.mxu0
        %v893 = vpop.f32.mrf.mxu0
        %v894 = vadd.f32 0.0, %v893
        %v895 = vpop.f32.mrf.mxu0
        %896 = vmatprep.mubr.bf16.mxu0 0
        %897 = vmatmul.mubr.bf16.gmra.mxu0 %v762
        %v898 = vpop.f32.mrf.mxu0
        %v899 = vadd.f32 0.0, %v898
        %v900 = vpop.f32.mrf.mxu0
        %v901 = vpop.f32.mrf.mxu0
        %v902 = vadd.f32 0.0, %v901
        %v903 = vpop.f32.mrf.mxu0
        %904 = vmatprep.mubr.bf16.mxu0 0
        %905 = vmatmul.mubr.bf16.gmra.mxu0 %v765
        %v906 = vpop.f32.mrf.mxu0
        %v907 = vadd.f32 0.0, %v906
        %v908 = vpop.f32.mrf.mxu0
        %v909 = vpop.f32.mrf.mxu0
        %v910 = vadd.f32 0.0, %v909
        %v911 = vpop.f32.mrf.mxu0
        %912 = vmatprep.mubr.bf16.mxu0 0
        %913 = vmatmul.mubr.bf16.gmra.mxu0 %v768
        %v914 = vpop.f32.mrf.mxu0
        %v915 = vadd.f32 0.0, %v914
        %v916 = vpop.f32.mrf.mxu0
        %v917 = vpop.f32.mrf.mxu0
        %v918 = vadd.f32 0.0, %v917
        %v919 = vpop.f32.mrf.mxu0
        %920 = vmatprep.mubr.bf16.mxu0 0
        %921 = vmatmul.mubr.bf16.gmra.mxu0 %v771
        %v922 = vpop.f32.mrf.mxu0
        %v923 = vadd.f32 0.0, %v922
        %v924 = vpop.f32.mrf.mxu0
        %v925 = vpop.f32.mrf.mxu0
        %v926 = vadd.f32 0.0, %v925
        %v927 = vpop.f32.mrf.mxu0
        %928 = vmatprep.mubr.bf16.mxu0 0
        %929 = vmatmul.mubr.bf16.gmra.mxu0 %v774
        %v930 = vpop.f32.mrf.mxu0
        %v931 = vadd.f32 0.0, %v930
        %v932 = vpop.f32.mrf.mxu0
        %v933 = vpop.f32.mrf.mxu0
        %v934 = vadd.f32 0.0, %v933
        %v935 = vpop.f32.mrf.mxu0
        %936 = vdwg.mxu0
        %v937 = vadd.f32 %v646, %v811
        %v938 = vadd.f32 %v646, %v814
        %v939 = vadd.f32 %v646, %v819
        %v940 = vadd.f32 %v646, %v822
        %v941 = vadd.f32 %v646, %v827
        %v942 = vadd.f32 %v646, %v830
        %v943 = vadd.f32 %v646, %v835
        %v944 = vadd.f32 %v646, %v838
        %v945 = vadd.f32 %v646, %v843
        %v946 = vadd.f32 %v646, %v846
        %v947 = vadd.f32 %v646, %v851
        %v948 = vadd.f32 %v646, %v854
        %v949 = vadd.f32 %v646, %v859
        %v950 = vadd.f32 %v646, %v862
        %v951 = vadd.f32 %v646, %v867
        %v952 = vadd.f32 %v646, %v870
        %v953 = vadd.f32 %v646, %v875
        %v954 = vadd.f32 %v646, %v878
        %v955 = vadd.f32 %v646, %v883
        %v956 = vadd.f32 %v646, %v886
        %v957 = vadd.f32 %v646, %v891
        %v958 = vadd.f32 %v646, %v894
        %v959 = vadd.f32 %v646, %v899
        %v960 = vadd.f32 %v646, %v902
        %v961 = vadd.f32 %v646, %v907
        %v962 = vadd.f32 %v646, %v910
        %v963 = vadd.f32 %v646, %v915
        %v964 = vadd.f32 %v646, %v918
        %v965 = vadd.f32 %v646, %v923
        %v966 = vadd.f32 %v646, %v926
        %v967 = vadd.f32 %v646, %v931
        %v968 = vadd.f32 %v646, %v934
        %v969 = vld [vmem:[#allocation2 + $0x1] sm:$0xff]
        %v970 = vld [vmem:[#allocation2 + $0x9] sm:$0xff]
        %v971 = vld [vmem:[#allocation2 + $0x19] sm:$0xff]
        %v972 = vld [vmem:[#allocation2 + $0x21] sm:$0xff]
        %v973 = vld [vmem:[#allocation2 + $0x31] sm:$0xff]
        %v974 = vld [vmem:[#allocation2 + $0x39] sm:$0xff]
        %v975 = vld [vmem:[#allocation2 + $0x49] sm:$0xff]
        %v976 = vld [vmem:[#allocation2 + $0x51] sm:$0xff]
        %v977 = vld [vmem:[#allocation2 + $0x61] sm:$0xff]
        %v978 = vld [vmem:[#allocation2 + $0x69] sm:$0xff]
        %v979 = vld [vmem:[#allocation2 + $0x79] sm:$0xff]
        %v980 = vld [vmem:[#allocation2 + $0x81] sm:$0xff]
        %v981 = vld [vmem:[#allocation2 + $0x91] sm:$0xff]
        %v982 = vld [vmem:[#allocation2 + $0x99] sm:$0xff]
        %v983 = vld [vmem:[#allocation2 + $0xa9] sm:$0xff]
        %v984 = vld [vmem:[#allocation2 + $0xb1] sm:$0xff]
        %v985 = vld [vmem:[#allocation2 + $0xc1] sm:$0xff]
        %v986 = vld [vmem:[#allocation2 + $0xc9] sm:$0xff]
        %v987 = vld [vmem:[#allocation2 + $0xd9] sm:$0xff]
        %v988 = vld [vmem:[#allocation2 + $0xe1] sm:$0xff]
        %v989 = vld [vmem:[#allocation2 + $0xf1] sm:$0xff]
        %v990 = vld [vmem:[#allocation2 + $0xf9] sm:$0xff]
        %v991 = vld [vmem:[#allocation2 + $0x109] sm:$0xff]
        %v992 = vld [vmem:[#allocation2 + $0x111] sm:$0xff]
        %v993 = vld [vmem:[#allocation2 + $0x121] sm:$0xff]
        %v994 = vld [vmem:[#allocation2 + $0x129] sm:$0xff]
        %v995 = vld [vmem:[#allocation2 + $0x139] sm:$0xff]
        %v996 = vld [vmem:[#allocation2 + $0x141] sm:$0xff]
        %v997 = vld [vmem:[#allocation2 + $0x151] sm:$0xff]
        %v998 = vld [vmem:[#allocation2 + $0x159] sm:$0xff]
        %v999 = vld [vmem:[#allocation2 + $0x169] sm:$0xff]
        %v1000 = vld [vmem:[#allocation2 + $0x171] sm:$0xff]
        %v1001 = vpack.c.bf16 %v970, %v969
        %v1002 = vpack.c.bf16 %v972, %v971
        %v1003 = vpack.c.bf16 %v974, %v973
        %v1004 = vpack.c.bf16 %v976, %v975
        %v1005 = vpack.c.bf16 %v978, %v977
        %v1006 = vpack.c.bf16 %v980, %v979
        %v1007 = vpack.c.bf16 %v982, %v981
        %v1008 = vpack.c.bf16 %v984, %v983
        %v1009 = vpack.c.bf16 %v986, %v985
        %v1010 = vpack.c.bf16 %v988, %v987
        %v1011 = vpack.c.bf16 %v990, %v989
        %v1012 = vpack.c.bf16 %v992, %v991
        %v1013 = vpack.c.bf16 %v994, %v993
        %v1014 = vpack.c.bf16 %v996, %v995
        %v1015 = vpack.c.bf16 %v998, %v997
        %v1016 = vpack.c.bf16 %v1000, %v999
        %s1017 = scalar_lea.vmem [#allocation8], 32
        %v1018 = vld [vmem:[%s1017] sm:$0xf]
        %v1019 = vld [vmem:[%s1017 + $0x4] sm:$0xf]
        %v1020 = vld [vmem:[%s1017 + $0x8] sm:$0xf]
        %v1021 = vld [vmem:[%s1017 + $0xc] sm:$0xf]
        %v1022 = vld [vmem:[%s1017 + $0x10] sm:$0xf]
        %v1023 = vld [vmem:[%s1017 + $0x14] sm:$0xf]
        %v1024 = vld [vmem:[%s1017 + $0x18] sm:$0xf]
        %v1025 = vld [vmem:[%s1017 + $0x1c] sm:$0xf]
        %v1034 = vunpack.c.l.b16 %v1018
        %v1035 = vunpack.c.l.b16 %v1019
        %v1036 = vunpack.c.l.b16 %v1020
        %v1037 = vunpack.c.l.b16 %v1021
        %v1038 = vunpack.c.l.b16 %v1022
        %v1039 = vunpack.c.l.b16 %v1023
        %v1040 = vunpack.c.l.b16 %v1024
        %v1041 = vunpack.c.l.b16 %v1025
        %v1042 = vpack.c.b16 %v1035, %v1034
        %v1043 = vpack.c.b16 %v1037, %v1036
        %v1044 = vpack.c.b16 %v1039, %v1038
        %v1045 = vpack.c.b16 %v1041, %v1040
        %v1051 = vsel %vm474, %v1001, 0
        %v1054 = vsel %vm474, %v1002, 0
        %v1057 = vsel %vm474, %v1003, 0
        %v1060 = vsel %vm474, %v1004, 0
        %v1063 = vsel %vm474, %v1005, 0
        %v1066 = vsel %vm474, %v1006, 0
        %v1069 = vsel %vm474, %v1007, 0
        %v1072 = vsel %vm474, %v1008, 0
        %v1075 = vsel %vm474, %v1009, 0
        %v1078 = vsel %vm474, %v1010, 0
        %v1081 = vsel %vm474, %v1011, 0
        %v1084 = vsel %vm474, %v1012, 0
        %v1087 = vsel %vm474, %v1013, 0
        %v1090 = vsel %vm474, %v1014, 0
        %v1093 = vsel %vm474, %v1015, 0
        %v1096 = vsel %vm474, %v1016, 0
        %1098 = vmatprep.subr.bf16.mxu0 0
        %1099 = vmatpush1.bf16.msra.mxu0 0
        %1100 = vmatprep.subr.bf16.mxu0 0
        %1101 = vmatpush1.bf16.msra.mxu0 0
        %1102 = vmatprep.subr.bf16.mxu0 0
        %1103 = vmatpush1.bf16.msra.mxu0 0
        %1104 = vmatprep.subr.bf16.mxu0 0
        %1105 = vmatpush1.bf16.msra.mxu0 0
        %1106 = vmatprep.subr.bf16.mxu0 0
        %1107 = vmatpush1.bf16.msra.mxu0 %v1045
        %1108 = vmatprep.subr.bf16.mxu0 0
        %1109 = vmatpush1.bf16.msra.mxu0 %v1044
        %1110 = vmatprep.subr.bf16.mxu0 0
        %1111 = vmatpush1.bf16.msra.mxu0 %v1043
        %1112 = vmatprep.subr.bf16.mxu0 0
        %1113 = vmatpush1.bf16.msra.mxu0 %v1042
        %1114 = vmatprep.subr.bf16.mxu0 0
        %1115 = vmatpush2.bf16.msra.mxu0 0
        %1116 = vmatprep.subr.bf16.mxu0 0
        %1117 = vmatpush2.bf16.msra.mxu0 0
        %1118 = vmatprep.subr.bf16.mxu0 0
        %1119 = vmatpush2.bf16.msra.mxu0 0
        %1120 = vmatprep.subr.bf16.mxu0 0
        %1121 = vmatpush2.bf16.msra.mxu0 0
        %1122 = vmatprep.subr.bf16.mxu0 0
        %1123 = vmatpush2.bf16.msra.mxu0 0
        %1124 = vmatprep.subr.bf16.mxu0 0
        %1125 = vmatpush2.bf16.msra.mxu0 0
        %1126 = vmatprep.subr.bf16.mxu0 0
        %1127 = vmatpush2.bf16.msra.mxu0 0
        %1128 = vmatprep.subr.bf16.mxu0 0
        %1129 = vmatpush2.bf16.msra.mxu0 0
        %1130 = vmatprep.mubr.bf16.mxu0 0
        %1131 = vmatmul.mubr.bf16.gmra.mxu0 %v1051
        %v1132 = vpop.f32.mrf.mxu0
        %v1133 = vadd.f32 0.0, %v1132
        %v1134 = vpop.f32.mrf.mxu0
        %v1135 = vpop.f32.mrf.mxu0
        %v1136 = vadd.f32 0.0, %v1135
        %v1137 = vpop.f32.mrf.mxu0
        %1138 = vmatprep.mubr.bf16.mxu0 0
        %1139 = vmatmul.mubr.bf16.gmra.mxu0 %v1054
        %v1140 = vpop.f32.mrf.mxu0
        %v1141 = vadd.f32 0.0, %v1140
        %v1142 = vpop.f32.mrf.mxu0
        %v1143 = vpop.f32.mrf.mxu0
        %v1144 = vadd.f32 0.0, %v1143
        %v1145 = vpop.f32.mrf.mxu0
        %1146 = vmatprep.mubr.bf16.mxu0 0
        %1147 = vmatmul.mubr.bf16.gmra.mxu0 %v1057
        %v1148 = vpop.f32.mrf.mxu0
        %v1149 = vadd.f32 0.0, %v1148
        %v1150 = vpop.f32.mrf.mxu0
        %v1151 = vpop.f32.mrf.mxu0
        %v1152 = vadd.f32 0.0, %v1151
        %v1153 = vpop.f32.mrf.mxu0
        %1154 = vmatprep.mubr.bf16.mxu0 0
        %1155 = vmatmul.mubr.bf16.gmra.mxu0 %v1060
        %v1156 = vpop.f32.mrf.mxu0
        %v1157 = vadd.f32 0.0, %v1156
        %v1158 = vpop.f32.mrf.mxu0
        %v1159 = vpop.f32.mrf.mxu0
        %v1160 = vadd.f32 0.0, %v1159
        %v1161 = vpop.f32.mrf.mxu0
        %1162 = vmatprep.mubr.bf16.mxu0 0
        %1163 = vmatmul.mubr.bf16.gmra.mxu0 %v1063
        %v1164 = vpop.f32.mrf.mxu0
        %v1165 = vadd.f32 0.0, %v1164
        %v1166 = vpop.f32.mrf.mxu0
        %v1167 = vpop.f32.mrf.mxu0
        %v1168 = vadd.f32 0.0, %v1167
        %v1169 = vpop.f32.mrf.mxu0
        %1170 = vmatprep.mubr.bf16.mxu0 0
        %1171 = vmatmul.mubr.bf16.gmra.mxu0 %v1066
        %v1172 = vpop.f32.mrf.mxu0
        %v1173 = vadd.f32 0.0, %v1172
        %v1174 = vpop.f32.mrf.mxu0
        %v1175 = vpop.f32.mrf.mxu0
        %v1176 = vadd.f32 0.0, %v1175
        %v1177 = vpop.f32.mrf.mxu0
        %1178 = vmatprep.mubr.bf16.mxu0 0
        %1179 = vmatmul.mubr.bf16.gmra.mxu0 %v1069
        %v1180 = vpop.f32.mrf.mxu0
        %v1181 = vadd.f32 0.0, %v1180
        %v1182 = vpop.f32.mrf.mxu0
        %v1183 = vpop.f32.mrf.mxu0
        %v1184 = vadd.f32 0.0, %v1183
        %v1185 = vpop.f32.mrf.mxu0
        %1186 = vmatprep.mubr.bf16.mxu0 0
        %1187 = vmatmul.mubr.bf16.gmra.mxu0 %v1072
        %v1188 = vpop.f32.mrf.mxu0
        %v1189 = vadd.f32 0.0, %v1188
        %v1190 = vpop.f32.mrf.mxu0
        %v1191 = vpop.f32.mrf.mxu0
        %v1192 = vadd.f32 0.0, %v1191
        %v1193 = vpop.f32.mrf.mxu0
        %1194 = vmatprep.mubr.bf16.mxu0 0
        %1195 = vmatmul.mubr.bf16.gmra.mxu0 %v1075
        %v1196 = vpop.f32.mrf.mxu0
        %v1197 = vadd.f32 0.0, %v1196
        %v1198 = vpop.f32.mrf.mxu0
        %v1199 = vpop.f32.mrf.mxu0
        %v1200 = vadd.f32 0.0, %v1199
        %v1201 = vpop.f32.mrf.mxu0
        %1202 = vmatprep.mubr.bf16.mxu0 0
        %1203 = vmatmul.mubr.bf16.gmra.mxu0 %v1078
        %v1204 = vpop.f32.mrf.mxu0
        %v1205 = vadd.f32 0.0, %v1204
        %v1206 = vpop.f32.mrf.mxu0
        %v1207 = vpop.f32.mrf.mxu0
        %v1208 = vadd.f32 0.0, %v1207
        %v1209 = vpop.f32.mrf.mxu0
        %1210 = vmatprep.mubr.bf16.mxu0 0
        %1211 = vmatmul.mubr.bf16.gmra.mxu0 %v1081
        %v1212 = vpop.f32.mrf.mxu0
        %v1213 = vadd.f32 0.0, %v1212
        %v1214 = vpop.f32.mrf.mxu0
        %v1215 = vpop.f32.mrf.mxu0
        %v1216 = vadd.f32 0.0, %v1215
        %v1217 = vpop.f32.mrf.mxu0
        %1218 = vmatprep.mubr.bf16.mxu0 0
        %1219 = vmatmul.mubr.bf16.gmra.mxu0 %v1084
        %v1220 = vpop.f32.mrf.mxu0
        %v1221 = vadd.f32 0.0, %v1220
        %v1222 = vpop.f32.mrf.mxu0
        %v1223 = vpop.f32.mrf.mxu0
        %v1224 = vadd.f32 0.0, %v1223
        %v1225 = vpop.f32.mrf.mxu0
        %1226 = vmatprep.mubr.bf16.mxu0 0
        %1227 = vmatmul.mubr.bf16.gmra.mxu0 %v1087
        %v1228 = vpop.f32.mrf.mxu0
        %v1229 = vadd.f32 0.0, %v1228
        %v1230 = vpop.f32.mrf.mxu0
        %v1231 = vpop.f32.mrf.mxu0
        %v1232 = vadd.f32 0.0, %v1231
        %v1233 = vpop.f32.mrf.mxu0
        %1234 = vmatprep.mubr.bf16.mxu0 0
        %1235 = vmatmul.mubr.bf16.gmra.mxu0 %v1090
        %v1236 = vpop.f32.mrf.mxu0
        %v1237 = vadd.f32 0.0, %v1236
        %v1238 = vpop.f32.mrf.mxu0
        %v1239 = vpop.f32.mrf.mxu0
        %v1240 = vadd.f32 0.0, %v1239
        %v1241 = vpop.f32.mrf.mxu0
        %1242 = vmatprep.mubr.bf16.mxu0 0
        %1243 = vmatmul.mubr.bf16.gmra.mxu0 %v1093
        %v1244 = vpop.f32.mrf.mxu0
        %v1245 = vadd.f32 0.0, %v1244
        %v1246 = vpop.f32.mrf.mxu0
        %v1247 = vpop.f32.mrf.mxu0
        %v1248 = vadd.f32 0.0, %v1247
        %v1249 = vpop.f32.mrf.mxu0
        %1250 = vmatprep.mubr.bf16.mxu0 0
        %1251 = vmatmul.mubr.bf16.gmra.mxu0 %v1096
        %v1252 = vpop.f32.mrf.mxu0
        %v1253 = vadd.f32 0.0, %v1252
        %v1254 = vpop.f32.mrf.mxu0
        %v1255 = vpop.f32.mrf.mxu0
        %v1256 = vadd.f32 0.0, %v1255
        %v1257 = vpop.f32.mrf.mxu0
        %1258 = vdwg.mxu0
        %v1259 = vadd.f32 %v937, %v1133
        %v1260 = vadd.f32 %v938, %v1136
        %v1261 = vadd.f32 %v939, %v1141
        %v1262 = vadd.f32 %v940, %v1144
        %v1263 = vadd.f32 %v941, %v1149
        %v1264 = vadd.f32 %v942, %v1152
        %v1265 = vadd.f32 %v943, %v1157
        %v1266 = vadd.f32 %v944, %v1160
        %v1267 = vadd.f32 %v945, %v1165
        %v1268 = vadd.f32 %v946, %v1168
        %v1269 = vadd.f32 %v947, %v1173
        %v1270 = vadd.f32 %v948, %v1176
        %v1271 = vadd.f32 %v949, %v1181
        %v1272 = vadd.f32 %v950, %v1184
        %v1273 = vadd.f32 %v951, %v1189
        %v1274 = vadd.f32 %v952, %v1192
        %v1275 = vadd.f32 %v953, %v1197
        %v1276 = vadd.f32 %v954, %v1200
        %v1277 = vadd.f32 %v955, %v1205
        %v1278 = vadd.f32 %v956, %v1208
        %v1279 = vadd.f32 %v957, %v1213
        %v1280 = vadd.f32 %v958, %v1216
        %v1281 = vadd.f32 %v959, %v1221
        %v1282 = vadd.f32 %v960, %v1224
        %v1283 = vadd.f32 %v961, %v1229
        %v1284 = vadd.f32 %v962, %v1232
        %v1285 = vadd.f32 %v963, %v1237
        %v1286 = vadd.f32 %v964, %v1240
        %v1287 = vadd.f32 %v965, %v1245
        %v1288 = vadd.f32 %v966, %v1248
        %v1289 = vadd.f32 %v967, %v1253
        %v1290 = vadd.f32 %v968, %v1256
        %v1291 = vld [vmem:[#allocation2 + $0x2] sm:$0xff]
        %v1292 = vld [vmem:[#allocation2 + $0xa] sm:$0xff]
        %v1293 = vld [vmem:[#allocation2 + $0x1a] sm:$0xff]
        %v1294 = vld [vmem:[#allocation2 + $0x22] sm:$0xff]
        %v1295 = vld [vmem:[#allocation2 + $0x32] sm:$0xff]
        %v1296 = vld [vmem:[#allocation2 + $0x3a] sm:$0xff]
        %v1297 = vld [vmem:[#allocation2 + $0x4a] sm:$0xff]
        %v1298 = vld [vmem:[#allocation2 + $0x52] sm:$0xff]
        %v1299 = vld [vmem:[#allocation2 + $0x62] sm:$0xff]
        %v1300 = vld [vmem:[#allocation2 + $0x6a] sm:$0xff]
        %v1301 = vld [vmem:[#allocation2 + $0x7a] sm:$0xff]
        %v1302 = vld [vmem:[#allocation2 + $0x82] sm:$0xff]
        %v1303 = vld [vmem:[#allocation2 + $0x92] sm:$0xff]
        %v1304 = vld [vmem:[#allocation2 + $0x9a] sm:$0xff]
        %v1305 = vld [vmem:[#allocation2 + $0xaa] sm:$0xff]
        %v1306 = vld [vmem:[#allocation2 + $0xb2] sm:$0xff]
        %v1307 = vld [vmem:[#allocation2 + $0xc2] sm:$0xff]
        %v1308 = vld [vmem:[#allocation2 + $0xca] sm:$0xff]
        %v1309 = vld [vmem:[#allocation2 + $0xda] sm:$0xff]
        %v1310 = vld [vmem:[#allocation2 + $0xe2] sm:$0xff]
        %v1311 = vld [vmem:[#allocation2 + $0xf2] sm:$0xff]
        %v1312 = vld [vmem:[#allocation2 + $0xfa] sm:$0xff]
        %v1313 = vld [vmem:[#allocation2 + $0x10a] sm:$0xff]
        %v1314 = vld [vmem:[#allocation2 + $0x112] sm:$0xff]
        %v1315 = vld [vmem:[#allocation2 + $0x122] sm:$0xff]
        %v1316 = vld [vmem:[#allocation2 + $0x12a] sm:$0xff]
        %v1317 = vld [vmem:[#allocation2 + $0x13a] sm:$0xff]
        %v1318 = vld [vmem:[#allocation2 + $0x142] sm:$0xff]
        %v1319 = vld [vmem:[#allocation2 + $0x152] sm:$0xff]
        %v1320 = vld [vmem:[#allocation2 + $0x15a] sm:$0xff]
        %v1321 = vld [vmem:[#allocation2 + $0x16a] sm:$0xff]
        %v1322 = vld [vmem:[#allocation2 + $0x172] sm:$0xff]
        %v1323 = vpack.c.bf16 %v1292, %v1291
        %v1324 = vpack.c.bf16 %v1294, %v1293
        %v1325 = vpack.c.bf16 %v1296, %v1295
        %v1326 = vpack.c.bf16 %v1298, %v1297
        %v1327 = vpack.c.bf16 %v1300, %v1299
        %v1328 = vpack.c.bf16 %v1302, %v1301
        %v1329 = vpack.c.bf16 %v1304, %v1303
        %v1330 = vpack.c.bf16 %v1306, %v1305
        %v1331 = vpack.c.bf16 %v1308, %v1307
        %v1332 = vpack.c.bf16 %v1310, %v1309
        %v1333 = vpack.c.bf16 %v1312, %v1311
        %v1334 = vpack.c.bf16 %v1314, %v1313
        %v1335 = vpack.c.bf16 %v1316, %v1315
        %v1336 = vpack.c.bf16 %v1318, %v1317
        %v1337 = vpack.c.bf16 %v1320, %v1319
        %v1338 = vpack.c.bf16 %v1322, %v1321
        %s1339 = scalar_lea.vmem [#allocation8], 64
        %v1340 = vld [vmem:[%s1339] sm:$0xf]
        %v1341 = vld [vmem:[%s1339 + $0x4] sm:$0xf]
        %v1342 = vld [vmem:[%s1339 + $0x8] sm:$0xf]
        %v1343 = vld [vmem:[%s1339 + $0xc] sm:$0xf]
        %v1344 = vld [vmem:[%s1339 + $0x10] sm:$0xf]
        %v1345 = vld [vmem:[%s1339 + $0x14] sm:$0xf]
        %v1346 = vld [vmem:[%s1339 + $0x18] sm:$0xf]
        %v1347 = vld [vmem:[%s1339 + $0x1c] sm:$0xf]
        %v1356 = vunpack.c.l.b16 %v1340
        %v1357 = vunpack.c.l.b16 %v1341
        %v1358 = vunpack.c.l.b16 %v1342
        %v1359 = vunpack.c.l.b16 %v1343
        %v1360 = vunpack.c.l.b16 %v1344
        %v1361 = vunpack.c.l.b16 %v1345
        %v1362 = vunpack.c.l.b16 %v1346
        %v1363 = vunpack.c.l.b16 %v1347
        %v1364 = vpack.c.b16 %v1357, %v1356
        %v1365 = vpack.c.b16 %v1359, %v1358
        %v1366 = vpack.c.b16 %v1361, %v1360
        %v1367 = vpack.c.b16 %v1363, %v1362
        %v1373 = vsel %vm474, %v1323, 0
        %v1376 = vsel %vm474, %v1324, 0
        %v1379 = vsel %vm474, %v1325, 0
        %v1382 = vsel %vm474, %v1326, 0
        %v1385 = vsel %vm474, %v1327, 0
        %v1388 = vsel %vm474, %v1328, 0
        %v1391 = vsel %vm474, %v1329, 0
        %v1394 = vsel %vm474, %v1330, 0
        %v1397 = vsel %vm474, %v1331, 0
        %v1400 = vsel %vm474, %v1332, 0
        %v1403 = vsel %vm474, %v1333, 0
        %v1406 = vsel %vm474, %v1334, 0
        %v1409 = vsel %vm474, %v1335, 0
        %v1412 = vsel %vm474, %v1336, 0
        %v1415 = vsel %vm474, %v1337, 0
        %v1418 = vsel %vm474, %v1338, 0
        %1420 = vmatprep.subr.bf16.mxu0 0
        %1421 = vmatpush1.bf16.msra.mxu0 0
        %1422 = vmatprep.subr.bf16.mxu0 0
        %1423 = vmatpush1.bf16.msra.mxu0 0
        %1424 = vmatprep.subr.bf16.mxu0 0
        %1425 = vmatpush1.bf16.msra.mxu0 0
        %1426 = vmatprep.subr.bf16.mxu0 0
        %1427 = vmatpush1.bf16.msra.mxu0 0
        %1428 = vmatprep.subr.bf16.mxu0 0
        %1429 = vmatpush1.bf16.msra.mxu0 %v1367
        %1430 = vmatprep.subr.bf16.mxu0 0
        %1431 = vmatpush1.bf16.msra.mxu0 %v1366
        %1432 = vmatprep.subr.bf16.mxu0 0
        %1433 = vmatpush1.bf16.msra.mxu0 %v1365
        %1434 = vmatprep.subr.bf16.mxu0 0
        %1435 = vmatpush1.bf16.msra.mxu0 %v1364
        %1436 = vmatprep.subr.bf16.mxu0 0
        %1437 = vmatpush2.bf16.msra.mxu0 0
        %1438 = vmatprep.subr.bf16.mxu0 0
        %1439 = vmatpush2.bf16.msra.mxu0 0
        %1440 = vmatprep.subr.bf16.mxu0 0
        %1441 = vmatpush2.bf16.msra.mxu0 0
        %1442 = vmatprep.subr.bf16.mxu0 0
        %1443 = vmatpush2.bf16.msra.mxu0 0
        %1444 = vmatprep.subr.bf16.mxu0 0
        %1445 = vmatpush2.bf16.msra.mxu0 0
        %1446 = vmatprep.subr.bf16.mxu0 0
        %1447 = vmatpush2.bf16.msra.mxu0 0
        %1448 = vmatprep.subr.bf16.mxu0 0
        %1449 = vmatpush2.bf16.msra.mxu0 0
        %1450 = vmatprep.subr.bf16.mxu0 0
        %1451 = vmatpush2.bf16.msra.mxu0 0
        %1452 = vmatprep.mubr.bf16.mxu0 0
        %1453 = vmatmul.mubr.bf16.gmra.mxu0 %v1373
        %v1454 = vpop.f32.mrf.mxu0
        %v1455 = vadd.f32 0.0, %v1454
        %v1456 = vpop.f32.mrf.mxu0
        %v1457 = vpop.f32.mrf.mxu0
        %v1458 = vadd.f32 0.0, %v1457
        %v1459 = vpop.f32.mrf.mxu0
        %1460 = vmatprep.mubr.bf16.mxu0 0
        %1461 = vmatmul.mubr.bf16.gmra.mxu0 %v1376
        %v1462 = vpop.f32.mrf.mxu0
        %v1463 = vadd.f32 0.0, %v1462
        %v1464 = vpop.f32.mrf.mxu0
        %v1465 = vpop.f32.mrf.mxu0
        %v1466 = vadd.f32 0.0, %v1465
        %v1467 = vpop.f32.mrf.mxu0
        %1468 = vmatprep.mubr.bf16.mxu0 0
        %1469 = vmatmul.mubr.bf16.gmra.mxu0 %v1379
        %v1470 = vpop.f32.mrf.mxu0
        %v1471 = vadd.f32 0.0, %v1470
        %v1472 = vpop.f32.mrf.mxu0
        %v1473 = vpop.f32.mrf.mxu0
        %v1474 = vadd.f32 0.0, %v1473
        %v1475 = vpop.f32.mrf.mxu0
        %1476 = vmatprep.mubr.bf16.mxu0 0
        %1477 = vmatmul.mubr.bf16.gmra.mxu0 %v1382
        %v1478 = vpop.f32.mrf.mxu0
        %v1479 = vadd.f32 0.0, %v1478
        %v1480 = vpop.f32.mrf.mxu0
        %v1481 = vpop.f32.mrf.mxu0
        %v1482 = vadd.f32 0.0, %v1481
        %v1483 = vpop.f32.mrf.mxu0
        %1484 = vmatprep.mubr.bf16.mxu0 0
        %1485 = vmatmul.mubr.bf16.gmra.mxu0 %v1385
        %v1486 = vpop.f32.mrf.mxu0
        %v1487 = vadd.f32 0.0, %v1486
        %v1488 = vpop.f32.mrf.mxu0
        %v1489 = vpop.f32.mrf.mxu0
        %v1490 = vadd.f32 0.0, %v1489
        %v1491 = vpop.f32.mrf.mxu0
        %1492 = vmatprep.mubr.bf16.mxu0 0
        %1493 = vmatmul.mubr.bf16.gmra.mxu0 %v1388
        %v1494 = vpop.f32.mrf.mxu0
        %v1495 = vadd.f32 0.0, %v1494
        %v1496 = vpop.f32.mrf.mxu0
        %v1497 = vpop.f32.mrf.mxu0
        %v1498 = vadd.f32 0.0, %v1497
        %v1499 = vpop.f32.mrf.mxu0
        %1500 = vmatprep.mubr.bf16.mxu0 0
        %1501 = vmatmul.mubr.bf16.gmra.mxu0 %v1391
        %v1502 = vpop.f32.mrf.mxu0
        %v1503 = vadd.f32 0.0, %v1502
        %v1504 = vpop.f32.mrf.mxu0
        %v1505 = vpop.f32.mrf.mxu0
        %v1506 = vadd.f32 0.0, %v1505
        %v1507 = vpop.f32.mrf.mxu0
        %1508 = vmatprep.mubr.bf16.mxu0 0
        %1509 = vmatmul.mubr.bf16.gmra.mxu0 %v1394
        %v1510 = vpop.f32.mrf.mxu0
        %v1511 = vadd.f32 0.0, %v1510
        %v1512 = vpop.f32.mrf.mxu0
        %v1513 = vpop.f32.mrf.mxu0
        %v1514 = vadd.f32 0.0, %v1513
        %v1515 = vpop.f32.mrf.mxu0
        %1516 = vmatprep.mubr.bf16.mxu0 0
        %1517 = vmatmul.mubr.bf16.gmra.mxu0 %v1397
        %v1518 = vpop.f32.mrf.mxu0
        %v1519 = vadd.f32 0.0, %v1518
        %v1520 = vpop.f32.mrf.mxu0
        %v1521 = vpop.f32.mrf.mxu0
        %v1522 = vadd.f32 0.0, %v1521
        %v1523 = vpop.f32.mrf.mxu0
        %1524 = vmatprep.mubr.bf16.mxu0 0
        %1525 = vmatmul.mubr.bf16.gmra.mxu0 %v1400
        %v1526 = vpop.f32.mrf.mxu0
        %v1527 = vadd.f32 0.0, %v1526
        %v1528 = vpop.f32.mrf.mxu0
        %v1529 = vpop.f32.mrf.mxu0
        %v1530 = vadd.f32 0.0, %v1529
        %v1531 = vpop.f32.mrf.mxu0
        %1532 = vmatprep.mubr.bf16.mxu0 0
        %1533 = vmatmul.mubr.bf16.gmra.mxu0 %v1403
        %v1534 = vpop.f32.mrf.mxu0
        %v1535 = vadd.f32 0.0, %v1534
        %v1536 = vpop.f32.mrf.mxu0
        %v1537 = vpop.f32.mrf.mxu0
        %v1538 = vadd.f32 0.0, %v1537
        %v1539 = vpop.f32.mrf.mxu0
        %1540 = vmatprep.mubr.bf16.mxu0 0
        %1541 = vmatmul.mubr.bf16.gmra.mxu0 %v1406
        %v1542 = vpop.f32.mrf.mxu0
        %v1543 = vadd.f32 0.0, %v1542
        %v1544 = vpop.f32.mrf.mxu0
        %v1545 = vpop.f32.mrf.mxu0
        %v1546 = vadd.f32 0.0, %v1545
        %v1547 = vpop.f32.mrf.mxu0
        %1548 = vmatprep.mubr.bf16.mxu0 0
        %1549 = vmatmul.mubr.bf16.gmra.mxu0 %v1409
        %v1550 = vpop.f32.mrf.mxu0
        %v1551 = vadd.f32 0.0, %v1550
        %v1552 = vpop.f32.mrf.mxu0
        %v1553 = vpop.f32.mrf.mxu0
        %v1554 = vadd.f32 0.0, %v1553
        %v1555 = vpop.f32.mrf.mxu0
        %1556 = vmatprep.mubr.bf16.mxu0 0
        %1557 = vmatmul.mubr.bf16.gmra.mxu0 %v1412
        %v1558 = vpop.f32.mrf.mxu0
        %v1559 = vadd.f32 0.0, %v1558
        %v1560 = vpop.f32.mrf.mxu0
        %v1561 = vpop.f32.mrf.mxu0
        %v1562 = vadd.f32 0.0, %v1561
        %v1563 = vpop.f32.mrf.mxu0
        %1564 = vmatprep.mubr.bf16.mxu0 0
        %1565 = vmatmul.mubr.bf16.gmra.mxu0 %v1415
        %v1566 = vpop.f32.mrf.mxu0
        %v1567 = vadd.f32 0.0, %v1566
        %v1568 = vpop.f32.mrf.mxu0
        %v1569 = vpop.f32.mrf.mxu0
        %v1570 = vadd.f32 0.0, %v1569
        %v1571 = vpop.f32.mrf.mxu0
        %1572 = vmatprep.mubr.bf16.mxu0 0
        %1573 = vmatmul.mubr.bf16.gmra.mxu0 %v1418
        %v1574 = vpop.f32.mrf.mxu0
        %v1575 = vadd.f32 0.0, %v1574
        %v1576 = vpop.f32.mrf.mxu0
        %v1577 = vpop.f32.mrf.mxu0
        %v1578 = vadd.f32 0.0, %v1577
        %v1579 = vpop.f32.mrf.mxu0
        %1580 = vdwg.mxu0
        %v1581 = vadd.f32 %v1259, %v1455
        %v1582 = vadd.f32 %v1260, %v1458
        %v1583 = vadd.f32 %v1261, %v1463
        %v1584 = vadd.f32 %v1262, %v1466
        %v1585 = vadd.f32 %v1263, %v1471
        %v1586 = vadd.f32 %v1264, %v1474
        %v1587 = vadd.f32 %v1265, %v1479
        %v1588 = vadd.f32 %v1266, %v1482
        %v1589 = vadd.f32 %v1267, %v1487
        %v1590 = vadd.f32 %v1268, %v1490
        %v1591 = vadd.f32 %v1269, %v1495
        %v1592 = vadd.f32 %v1270, %v1498
        %v1593 = vadd.f32 %v1271, %v1503
        %v1594 = vadd.f32 %v1272, %v1506
        %v1595 = vadd.f32 %v1273, %v1511
        %v1596 = vadd.f32 %v1274, %v1514
        %v1597 = vadd.f32 %v1275, %v1519
        %v1598 = vadd.f32 %v1276, %v1522
        %v1599 = vadd.f32 %v1277, %v1527
        %v1600 = vadd.f32 %v1278, %v1530
        %v1601 = vadd.f32 %v1279, %v1535
        %v1602 = vadd.f32 %v1280, %v1538
        %v1603 = vadd.f32 %v1281, %v1543
        %v1604 = vadd.f32 %v1282, %v1546
        %v1605 = vadd.f32 %v1283, %v1551
        %v1606 = vadd.f32 %v1284, %v1554
        %v1607 = vadd.f32 %v1285, %v1559
        %v1608 = vadd.f32 %v1286, %v1562
        %v1609 = vadd.f32 %v1287, %v1567
        %v1610 = vadd.f32 %v1288, %v1570
        %v1611 = vadd.f32 %v1289, %v1575
        %v1612 = vadd.f32 %v1290, %v1578
        %v1613 = vld [vmem:[%s527] sm:$0xff]
        %v1614 = vld [vmem:[%s527 + $0x8] sm:$0xff]
        %v1615 = vld [vmem:[%s527 + $0x18] sm:$0xff]
        %v1616 = vld [vmem:[%s527 + $0x20] sm:$0xff]
        %v1617 = vld [vmem:[%s527 + $0x30] sm:$0xff]
        %v1618 = vld [vmem:[%s527 + $0x38] sm:$0xff]
        %v1619 = vld [vmem:[%s527 + $0x48] sm:$0xff]
        %v1620 = vld [vmem:[%s527 + $0x50] sm:$0xff]
        %v1621 = vld [vmem:[%s527 + $0x60] sm:$0xff]
        %v1622 = vld [vmem:[%s527 + $0x68] sm:$0xff]
        %v1623 = vld [vmem:[%s527 + $0x78] sm:$0xff]
        %v1624 = vld [vmem:[%s527 + $0x80] sm:$0xff]
        %v1625 = vld [vmem:[%s527 + $0x90] sm:$0xff]
        %v1626 = vld [vmem:[%s527 + $0x98] sm:$0xff]
        %v1627 = vld [vmem:[%s527 + $0xa8] sm:$0xff]
        %v1628 = vld [vmem:[%s527 + $0xb0] sm:$0xff]
        %v1629 = vld [vmem:[%s527 + $0xc0] sm:$0xff]
        %v1630 = vld [vmem:[%s527 + $0xc8] sm:$0xff]
        %v1631 = vld [vmem:[%s527 + $0xd8] sm:$0xff]
        %v1632 = vld [vmem:[%s527 + $0xe0] sm:$0xff]
        %v1633 = vld [vmem:[%s527 + $0xf0] sm:$0xff]
        %v1634 = vld [vmem:[%s527 + $0xf8] sm:$0xff]
        %v1635 = vld [vmem:[%s527 + $0x108] sm:$0xff]
        %v1636 = vld [vmem:[%s527 + $0x110] sm:$0xff]
        %v1637 = vld [vmem:[%s527 + $0x120] sm:$0xff]
        %v1638 = vld [vmem:[%s527 + $0x128] sm:$0xff]
        %v1639 = vld [vmem:[%s527 + $0x138] sm:$0xff]
        %v1640 = vld [vmem:[%s527 + $0x140] sm:$0xff]
        %v1641 = vld [vmem:[%s527 + $0x150] sm:$0xff]
        %v1642 = vld [vmem:[%s527 + $0x158] sm:$0xff]
        %v1643 = vld [vmem:[%s527 + $0x168] sm:$0xff]
        %v1644 = vld [vmem:[%s527 + $0x170] sm:$0xff]
        %v1645 = vpack.c.bf16 %v1614, %v1613
        %v1646 = vpack.c.bf16 %v1616, %v1615
        %v1647 = vpack.c.bf16 %v1618, %v1617
        %v1648 = vpack.c.bf16 %v1620, %v1619
        %v1649 = vpack.c.bf16 %v1622, %v1621
        %v1650 = vpack.c.bf16 %v1624, %v1623
        %v1651 = vpack.c.bf16 %v1626, %v1625
        %v1652 = vpack.c.bf16 %v1628, %v1627
        %v1653 = vpack.c.bf16 %v1630, %v1629
        %v1654 = vpack.c.bf16 %v1632, %v1631
        %v1655 = vpack.c.bf16 %v1634, %v1633
        %v1656 = vpack.c.bf16 %v1636, %v1635
        %v1657 = vpack.c.bf16 %v1638, %v1637
        %v1658 = vpack.c.bf16 %v1640, %v1639
        %v1659 = vpack.c.bf16 %v1642, %v1641
        %v1660 = vpack.c.bf16 %v1644, %v1643
        %s1661 = scalar_lea.vmem [#allocation8], 96
        %v1662 = vld [vmem:[%s1661] sm:$0xf]
        %v1663 = vld [vmem:[%s1661 + $0x4] sm:$0xf]
        %v1664 = vld [vmem:[%s1661 + $0x8] sm:$0xf]
        %v1665 = vld [vmem:[%s1661 + $0xc] sm:$0xf]
        %v1666 = vld [vmem:[%s1661 + $0x10] sm:$0xf]
        %v1667 = vld [vmem:[%s1661 + $0x14] sm:$0xf]
        %v1668 = vld [vmem:[%s1661 + $0x18] sm:$0xf]
        %v1669 = vld [vmem:[%s1661 + $0x1c] sm:$0xf]
        %v1678 = vunpack.c.l.b16 %v1662
        %v1679 = vunpack.c.l.b16 %v1663
        %v1680 = vunpack.c.l.b16 %v1664
        %v1681 = vunpack.c.l.b16 %v1665
        %v1682 = vunpack.c.l.b16 %v1666
        %v1683 = vunpack.c.l.b16 %v1667
        %v1684 = vunpack.c.l.b16 %v1668
        %v1685 = vunpack.c.l.b16 %v1669
        %v1686 = vpack.c.b16 %v1679, %v1678
        %v1687 = vpack.c.b16 %v1681, %v1680
        %v1688 = vpack.c.b16 %v1683, %v1682
        %v1689 = vpack.c.b16 %v1685, %v1684
        %v1695 = vsel %vm474, %v1645, 0
        %v1698 = vsel %vm474, %v1646, 0
        %v1701 = vsel %vm474, %v1647, 0
        %v1704 = vsel %vm474, %v1648, 0
        %v1707 = vsel %vm474, %v1649, 0
        %v1710 = vsel %vm474, %v1650, 0
        %v1713 = vsel %vm474, %v1651, 0
        %v1716 = vsel %vm474, %v1652, 0
        %v1719 = vsel %vm474, %v1653, 0
        %v1722 = vsel %vm474, %v1654, 0
        %v1725 = vsel %vm474, %v1655, 0
        %v1728 = vsel %vm474, %v1656, 0
        %v1731 = vsel %vm474, %v1657, 0
        %v1734 = vsel %vm474, %v1658, 0
        %v1737 = vsel %vm474, %v1659, 0
        %v1740 = vsel %vm474, %v1660, 0
        %1742 = vmatprep.subr.bf16.mxu0 0
        %1743 = vmatpush1.bf16.msra.mxu0 0
        %1744 = vmatprep.subr.bf16.mxu0 0
        %1745 = vmatpush1.bf16.msra.mxu0 0
        %1746 = vmatprep.subr.bf16.mxu0 0
        %1747 = vmatpush1.bf16.msra.mxu0 0
        %1748 = vmatprep.subr.bf16.mxu0 0
        %1749 = vmatpush1.bf16.msra.mxu0 0
        %1750 = vmatprep.subr.bf16.mxu0 0
        %1751 = vmatpush1.bf16.msra.mxu0 %v1689
        %1752 = vmatprep.subr.bf16.mxu0 0
        %1753 = vmatpush1.bf16.msra.mxu0 %v1688
        %1754 = vmatprep.subr.bf16.mxu0 0
        %1755 = vmatpush1.bf16.msra.mxu0 %v1687
        %1756 = vmatprep.subr.bf16.mxu0 0
        %1757 = vmatpush1.bf16.msra.mxu0 %v1686
        %1758 = vmatprep.subr.bf16.mxu0 0
        %1759 = vmatpush2.bf16.msra.mxu0 0
        %1760 = vmatprep.subr.bf16.mxu0 0
        %1761 = vmatpush2.bf16.msra.mxu0 0
        %1762 = vmatprep.subr.bf16.mxu0 0
        %1763 = vmatpush2.bf16.msra.mxu0 0
        %1764 = vmatprep.subr.bf16.mxu0 0
        %1765 = vmatpush2.bf16.msra.mxu0 0
        %1766 = vmatprep.subr.bf16.mxu0 0
        %1767 = vmatpush2.bf16.msra.mxu0 0
        %1768 = vmatprep.subr.bf16.mxu0 0
        %1769 = vmatpush2.bf16.msra.mxu0 0
        %1770 = vmatprep.subr.bf16.mxu0 0
        %1771 = vmatpush2.bf16.msra.mxu0 0
        %1772 = vmatprep.subr.bf16.mxu0 0
        %1773 = vmatpush2.bf16.msra.mxu0 0
        %1774 = vmatprep.mubr.bf16.mxu0 0
        %1775 = vmatmul.mubr.bf16.gmra.mxu0 %v1695
        %v1776 = vpop.f32.mrf.mxu0
        %v1777 = vadd.f32 0.0, %v1776
        %v1778 = vpop.f32.mrf.mxu0
        %v1779 = vpop.f32.mrf.mxu0
        %v1780 = vadd.f32 0.0, %v1779
        %v1781 = vpop.f32.mrf.mxu0
        %1782 = vmatprep.mubr.bf16.mxu0 0
        %1783 = vmatmul.mubr.bf16.gmra.mxu0 %v1698
        %v1784 = vpop.f32.mrf.mxu0
        %v1785 = vadd.f32 0.0, %v1784
        %v1786 = vpop.f32.mrf.mxu0
        %v1787 = vpop.f32.mrf.mxu0
        %v1788 = vadd.f32 0.0, %v1787
        %v1789 = vpop.f32.mrf.mxu0
        %1790 = vmatprep.mubr.bf16.mxu0 0
        %1791 = vmatmul.mubr.bf16.gmra.mxu0 %v1701
        %v1792 = vpop.f32.mrf.mxu0
        %v1793 = vadd.f32 0.0, %v1792
        %v1794 = vpop.f32.mrf.mxu0
        %v1795 = vpop.f32.mrf.mxu0
        %v1796 = vadd.f32 0.0, %v1795
        %v1797 = vpop.f32.mrf.mxu0
        %1798 = vmatprep.mubr.bf16.mxu0 0
        %1799 = vmatmul.mubr.bf16.gmra.mxu0 %v1704
        %v1800 = vpop.f32.mrf.mxu0
        %v1801 = vadd.f32 0.0, %v1800
        %v1802 = vpop.f32.mrf.mxu0
        %v1803 = vpop.f32.mrf.mxu0
        %v1804 = vadd.f32 0.0, %v1803
        %v1805 = vpop.f32.mrf.mxu0
        %1806 = vmatprep.mubr.bf16.mxu0 0
        %1807 = vmatmul.mubr.bf16.gmra.mxu0 %v1707
        %v1808 = vpop.f32.mrf.mxu0
        %v1809 = vadd.f32 0.0, %v1808
        %v1810 = vpop.f32.mrf.mxu0
        %v1811 = vpop.f32.mrf.mxu0
        %v1812 = vadd.f32 0.0, %v1811
        %v1813 = vpop.f32.mrf.mxu0
        %1814 = vmatprep.mubr.bf16.mxu0 0
        %1815 = vmatmul.mubr.bf16.gmra.mxu0 %v1710
        %v1816 = vpop.f32.mrf.mxu0
        %v1817 = vadd.f32 0.0, %v1816
        %v1818 = vpop.f32.mrf.mxu0
        %v1819 = vpop.f32.mrf.mxu0
        %v1820 = vadd.f32 0.0, %v1819
        %v1821 = vpop.f32.mrf.mxu0
        %1822 = vmatprep.mubr.bf16.mxu0 0
        %1823 = vmatmul.mubr.bf16.gmra.mxu0 %v1713
        %v1824 = vpop.f32.mrf.mxu0
        %v1825 = vadd.f32 0.0, %v1824
        %v1826 = vpop.f32.mrf.mxu0
        %v1827 = vpop.f32.mrf.mxu0
        %v1828 = vadd.f32 0.0, %v1827
        %v1829 = vpop.f32.mrf.mxu0
        %1830 = vmatprep.mubr.bf16.mxu0 0
        %1831 = vmatmul.mubr.bf16.gmra.mxu0 %v1716
        %v1832 = vpop.f32.mrf.mxu0
        %v1833 = vadd.f32 0.0, %v1832
        %v1834 = vpop.f32.mrf.mxu0
        %v1835 = vpop.f32.mrf.mxu0
        %v1836 = vadd.f32 0.0, %v1835
        %v1837 = vpop.f32.mrf.mxu0
        %1838 = vmatprep.mubr.bf16.mxu0 0
        %1839 = vmatmul.mubr.bf16.gmra.mxu0 %v1719
        %v1840 = vpop.f32.mrf.mxu0
        %v1841 = vadd.f32 0.0, %v1840
        %v1842 = vpop.f32.mrf.mxu0
        %v1843 = vpop.f32.mrf.mxu0
        %v1844 = vadd.f32 0.0, %v1843
        %v1845 = vpop.f32.mrf.mxu0
        %1846 = vmatprep.mubr.bf16.mxu0 0
        %1847 = vmatmul.mubr.bf16.gmra.mxu0 %v1722
        %v1848 = vpop.f32.mrf.mxu0
        %v1849 = vadd.f32 0.0, %v1848
        %v1850 = vpop.f32.mrf.mxu0
        %v1851 = vpop.f32.mrf.mxu0
        %v1852 = vadd.f32 0.0, %v1851
        %v1853 = vpop.f32.mrf.mxu0
        %1854 = vmatprep.mubr.bf16.mxu0 0
        %1855 = vmatmul.mubr.bf16.gmra.mxu0 %v1725
        %v1856 = vpop.f32.mrf.mxu0
        %v1857 = vadd.f32 0.0, %v1856
        %v1858 = vpop.f32.mrf.mxu0
        %v1859 = vpop.f32.mrf.mxu0
        %v1860 = vadd.f32 0.0, %v1859
        %v1861 = vpop.f32.mrf.mxu0
        %1862 = vmatprep.mubr.bf16.mxu0 0
        %1863 = vmatmul.mubr.bf16.gmra.mxu0 %v1728
        %v1864 = vpop.f32.mrf.mxu0
        %v1865 = vadd.f32 0.0, %v1864
        %v1866 = vpop.f32.mrf.mxu0
        %v1867 = vpop.f32.mrf.mxu0
        %v1868 = vadd.f32 0.0, %v1867
        %v1869 = vpop.f32.mrf.mxu0
        %1870 = vmatprep.mubr.bf16.mxu0 0
        %1871 = vmatmul.mubr.bf16.gmra.mxu0 %v1731
        %v1872 = vpop.f32.mrf.mxu0
        %v1873 = vadd.f32 0.0, %v1872
        %v1874 = vpop.f32.mrf.mxu0
        %v1875 = vpop.f32.mrf.mxu0
        %v1876 = vadd.f32 0.0, %v1875
        %v1877 = vpop.f32.mrf.mxu0
        %1878 = vmatprep.mubr.bf16.mxu0 0
        %1879 = vmatmul.mubr.bf16.gmra.mxu0 %v1734
        %v1880 = vpop.f32.mrf.mxu0
        %v1881 = vadd.f32 0.0, %v1880
        %v1882 = vpop.f32.mrf.mxu0
        %v1883 = vpop.f32.mrf.mxu0
        %v1884 = vadd.f32 0.0, %v1883
        %v1885 = vpop.f32.mrf.mxu0
        %1886 = vmatprep.mubr.bf16.mxu0 0
        %1887 = vmatmul.mubr.bf16.gmra.mxu0 %v1737
        %v1888 = vpop.f32.mrf.mxu0
        %v1889 = vadd.f32 0.0, %v1888
        %v1890 = vpop.f32.mrf.mxu0
        %v1891 = vpop.f32.mrf.mxu0
        %v1892 = vadd.f32 0.0, %v1891
        %v1893 = vpop.f32.mrf.mxu0
        %1894 = vmatprep.mubr.bf16.mxu0 0
        %1895 = vmatmul.mubr.bf16.gmra.mxu0 %v1740
        %v1896 = vpop.f32.mrf.mxu0
        %v1897 = vadd.f32 0.0, %v1896
        %v1898 = vpop.f32.mrf.mxu0
        %v1899 = vpop.f32.mrf.mxu0
        %v1900 = vadd.f32 0.0, %v1899
        %v1901 = vpop.f32.mrf.mxu0
        %1902 = vdwg.mxu0
        %v1903 = vadd.f32 %v1581, %v1777
        %v1904 = vadd.f32 %v1582, %v1780
        %v1905 = vadd.f32 %v1583, %v1785
        %v1906 = vadd.f32 %v1584, %v1788
        %v1907 = vadd.f32 %v1585, %v1793
        %v1908 = vadd.f32 %v1586, %v1796
        %v1909 = vadd.f32 %v1587, %v1801
        %v1910 = vadd.f32 %v1588, %v1804
        %v1911 = vadd.f32 %v1589, %v1809
        %v1912 = vadd.f32 %v1590, %v1812
        %v1913 = vadd.f32 %v1591, %v1817
        %v1914 = vadd.f32 %v1592, %v1820
        %v1915 = vadd.f32 %v1593, %v1825
        %v1916 = vadd.f32 %v1594, %v1828
        %v1917 = vadd.f32 %v1595, %v1833
        %v1918 = vadd.f32 %v1596, %v1836
        %v1919 = vadd.f32 %v1597, %v1841
        %v1920 = vadd.f32 %v1598, %v1844
        %v1921 = vadd.f32 %v1599, %v1849
        %v1922 = vadd.f32 %v1600, %v1852
        %v1923 = vadd.f32 %v1601, %v1857
        %v1924 = vadd.f32 %v1602, %v1860
        %v1925 = vadd.f32 %v1603, %v1865
        %v1926 = vadd.f32 %v1604, %v1868
        %v1927 = vadd.f32 %v1605, %v1873
        %v1928 = vadd.f32 %v1606, %v1876
        %v1929 = vadd.f32 %v1607, %v1881
        %v1930 = vadd.f32 %v1608, %v1884
        %v1931 = vadd.f32 %v1609, %v1889
        %v1932 = vadd.f32 %v1610, %v1892
        %v1933 = vadd.f32 %v1611, %v1897
        %v1934 = vadd.f32 %v1612, %v1900
        %v1935 = vld [vmem:[%s527 + $0x1] sm:$0xff]
        %v1936 = vld [vmem:[%s527 + $0x9] sm:$0xff]
        %v1937 = vld [vmem:[%s527 + $0x19] sm:$0xff]
        %v1938 = vld [vmem:[%s527 + $0x21] sm:$0xff]
        %v1939 = vld [vmem:[%s527 + $0x31] sm:$0xff]
        %v1940 = vld [vmem:[%s527 + $0x39] sm:$0xff]
        %v1941 = vld [vmem:[%s527 + $0x49] sm:$0xff]
        %v1942 = vld [vmem:[%s527 + $0x51] sm:$0xff]
        %v1943 = vld [vmem:[%s527 + $0x61] sm:$0xff]
        %v1944 = vld [vmem:[%s527 + $0x69] sm:$0xff]
        %v1945 = vld [vmem:[%s527 + $0x79] sm:$0xff]
        %v1946 = vld [vmem:[%s527 + $0x81] sm:$0xff]
        %v1947 = vld [vmem:[%s527 + $0x91] sm:$0xff]
        %v1948 = vld [vmem:[%s527 + $0x99] sm:$0xff]
        %v1949 = vld [vmem:[%s527 + $0xa9] sm:$0xff]
        %v1950 = vld [vmem:[%s527 + $0xb1] sm:$0xff]
        %v1951 = vld [vmem:[%s527 + $0xc1] sm:$0xff]
        %v1952 = vld [vmem:[%s527 + $0xc9] sm:$0xff]
        %v1953 = vld [vmem:[%s527 + $0xd9] sm:$0xff]
        %v1954 = vld [vmem:[%s527 + $0xe1] sm:$0xff]
        %v1955 = vld [vmem:[%s527 + $0xf1] sm:$0xff]
        %v1956 = vld [vmem:[%s527 + $0xf9] sm:$0xff]
        %v1957 = vld [vmem:[%s527 + $0x109] sm:$0xff]
        %v1958 = vld [vmem:[%s527 + $0x111] sm:$0xff]
        %v1959 = vld [vmem:[%s527 + $0x121] sm:$0xff]
        %v1960 = vld [vmem:[%s527 + $0x129] sm:$0xff]
        %v1961 = vld [vmem:[%s527 + $0x139] sm:$0xff]
        %v1962 = vld [vmem:[%s527 + $0x141] sm:$0xff]
        %v1963 = vld [vmem:[%s527 + $0x151] sm:$0xff]
        %v1964 = vld [vmem:[%s527 + $0x159] sm:$0xff]
        %v1965 = vld [vmem:[%s527 + $0x169] sm:$0xff]
        %v1966 = vld [vmem:[%s527 + $0x171] sm:$0xff]
        %v1967 = vpack.c.bf16 %v1936, %v1935
        %v1968 = vpack.c.bf16 %v1938, %v1937
        %v1969 = vpack.c.bf16 %v1940, %v1939
        %v1970 = vpack.c.bf16 %v1942, %v1941
        %v1971 = vpack.c.bf16 %v1944, %v1943
        %v1972 = vpack.c.bf16 %v1946, %v1945
        %v1973 = vpack.c.bf16 %v1948, %v1947
        %v1974 = vpack.c.bf16 %v1950, %v1949
        %v1975 = vpack.c.bf16 %v1952, %v1951
        %v1976 = vpack.c.bf16 %v1954, %v1953
        %v1977 = vpack.c.bf16 %v1956, %v1955
        %v1978 = vpack.c.bf16 %v1958, %v1957
        %v1979 = vpack.c.bf16 %v1960, %v1959
        %v1980 = vpack.c.bf16 %v1962, %v1961
        %v1981 = vpack.c.bf16 %v1964, %v1963
        %v1982 = vpack.c.bf16 %v1966, %v1965
        %s1983 = scalar_lea.vmem [#allocation8], 128
        %v1984 = vld [vmem:[%s1983] sm:$0xf]
        %v1985 = vld [vmem:[%s1983 + $0x4] sm:$0xf]
        %v1986 = vld [vmem:[%s1983 + $0x8] sm:$0xf]
        %v1987 = vld [vmem:[%s1983 + $0xc] sm:$0xf]
        %v1988 = vld [vmem:[%s1983 + $0x10] sm:$0xf]
        %v1989 = vld [vmem:[%s1983 + $0x14] sm:$0xf]
        %v1990 = vld [vmem:[%s1983 + $0x18] sm:$0xf]
        %v1991 = vld [vmem:[%s1983 + $0x1c] sm:$0xf]
        %v2000 = vunpack.c.l.b16 %v1984
        %v2001 = vunpack.c.l.b16 %v1985
        %v2002 = vunpack.c.l.b16 %v1986
        %v2003 = vunpack.c.l.b16 %v1987
        %v2004 = vunpack.c.l.b16 %v1988
        %v2005 = vunpack.c.l.b16 %v1989
        %v2006 = vunpack.c.l.b16 %v1990
        %v2007 = vunpack.c.l.b16 %v1991
        %v2008 = vpack.c.b16 %v2001, %v2000
        %v2009 = vpack.c.b16 %v2003, %v2002
        %v2010 = vpack.c.b16 %v2005, %v2004
        %v2011 = vpack.c.b16 %v2007, %v2006
        %v2017 = vsel %vm474, %v1967, 0
        %v2020 = vsel %vm474, %v1968, 0
        %v2023 = vsel %vm474, %v1969, 0
        %v2026 = vsel %vm474, %v1970, 0
        %v2029 = vsel %vm474, %v1971, 0
        %v2032 = vsel %vm474, %v1972, 0
        %v2035 = vsel %vm474, %v1973, 0
        %v2038 = vsel %vm474, %v1974, 0
        %v2041 = vsel %vm474, %v1975, 0
        %v2044 = vsel %vm474, %v1976, 0
        %v2047 = vsel %vm474, %v1977, 0
        %v2050 = vsel %vm474, %v1978, 0
        %v2053 = vsel %vm474, %v1979, 0
        %v2056 = vsel %vm474, %v1980, 0
        %v2059 = vsel %vm474, %v1981, 0
        %v2062 = vsel %vm474, %v1982, 0
        %2064 = vmatprep.subr.bf16.mxu0 0
        %2065 = vmatpush1.bf16.msra.mxu0 0
        %2066 = vmatprep.subr.bf16.mxu0 0
        %2067 = vmatpush1.bf16.msra.mxu0 0
        %2068 = vmatprep.subr.bf16.mxu0 0
        %2069 = vmatpush1.bf16.msra.mxu0 0
        %2070 = vmatprep.subr.bf16.mxu0 0
        %2071 = vmatpush1.bf16.msra.mxu0 0
        %2072 = vmatprep.subr.bf16.mxu0 0
        %2073 = vmatpush1.bf16.msra.mxu0 %v2011
        %2074 = vmatprep.subr.bf16.mxu0 0
        %2075 = vmatpush1.bf16.msra.mxu0 %v2010
        %2076 = vmatprep.subr.bf16.mxu0 0
        %2077 = vmatpush1.bf16.msra.mxu0 %v2009
        %2078 = vmatprep.subr.bf16.mxu0 0
        %2079 = vmatpush1.bf16.msra.mxu0 %v2008
        %2080 = vmatprep.subr.bf16.mxu0 0
        %2081 = vmatpush2.bf16.msra.mxu0 0
        %2082 = vmatprep.subr.bf16.mxu0 0
        %2083 = vmatpush2.bf16.msra.mxu0 0
        %2084 = vmatprep.subr.bf16.mxu0 0
        %2085 = vmatpush2.bf16.msra.mxu0 0
        %2086 = vmatprep.subr.bf16.mxu0 0
        %2087 = vmatpush2.bf16.msra.mxu0 0
        %2088 = vmatprep.subr.bf16.mxu0 0
        %2089 = vmatpush2.bf16.msra.mxu0 0
        %2090 = vmatprep.subr.bf16.mxu0 0
        %2091 = vmatpush2.bf16.msra.mxu0 0
        %2092 = vmatprep.subr.bf16.mxu0 0
        %2093 = vmatpush2.bf16.msra.mxu0 0
        %2094 = vmatprep.subr.bf16.mxu0 0
        %2095 = vmatpush2.bf16.msra.mxu0 0
        %2096 = vmatprep.mubr.bf16.mxu0 0
        %2097 = vmatmul.mubr.bf16.gmra.mxu0 %v2017
        %v2098 = vpop.f32.mrf.mxu0
        %v2099 = vadd.f32 0.0, %v2098
        %v2100 = vpop.f32.mrf.mxu0
        %v2101 = vpop.f32.mrf.mxu0
        %v2102 = vadd.f32 0.0, %v2101
        %v2103 = vpop.f32.mrf.mxu0
        %2104 = vmatprep.mubr.bf16.mxu0 0
        %2105 = vmatmul.mubr.bf16.gmra.mxu0 %v2020
        %v2106 = vpop.f32.mrf.mxu0
        %v2107 = vadd.f32 0.0, %v2106
        %v2108 = vpop.f32.mrf.mxu0
        %v2109 = vpop.f32.mrf.mxu0
        %v2110 = vadd.f32 0.0, %v2109
        %v2111 = vpop.f32.mrf.mxu0
        %2112 = vmatprep.mubr.bf16.mxu0 0
        %2113 = vmatmul.mubr.bf16.gmra.mxu0 %v2023
        %v2114 = vpop.f32.mrf.mxu0
        %v2115 = vadd.f32 0.0, %v2114
        %v2116 = vpop.f32.mrf.mxu0
        %v2117 = vpop.f32.mrf.mxu0
        %v2118 = vadd.f32 0.0, %v2117
        %v2119 = vpop.f32.mrf.mxu0
        %2120 = vmatprep.mubr.bf16.mxu0 0
        %2121 = vmatmul.mubr.bf16.gmra.mxu0 %v2026
        %v2122 = vpop.f32.mrf.mxu0
        %v2123 = vadd.f32 0.0, %v2122
        %v2124 = vpop.f32.mrf.mxu0
        %v2125 = vpop.f32.mrf.mxu0
        %v2126 = vadd.f32 0.0, %v2125
        %v2127 = vpop.f32.mrf.mxu0
        %2128 = vmatprep.mubr.bf16.mxu0 0
        %2129 = vmatmul.mubr.bf16.gmra.mxu0 %v2029
        %v2130 = vpop.f32.mrf.mxu0
        %v2131 = vadd.f32 0.0, %v2130
        %v2132 = vpop.f32.mrf.mxu0
        %v2133 = vpop.f32.mrf.mxu0
        %v2134 = vadd.f32 0.0, %v2133
        %v2135 = vpop.f32.mrf.mxu0
        %2136 = vmatprep.mubr.bf16.mxu0 0
        %2137 = vmatmul.mubr.bf16.gmra.mxu0 %v2032
        %v2138 = vpop.f32.mrf.mxu0
        %v2139 = vadd.f32 0.0, %v2138
        %v2140 = vpop.f32.mrf.mxu0
        %v2141 = vpop.f32.mrf.mxu0
        %v2142 = vadd.f32 0.0, %v2141
        %v2143 = vpop.f32.mrf.mxu0
        %2144 = vmatprep.mubr.bf16.mxu0 0
        %2145 = vmatmul.mubr.bf16.gmra.mxu0 %v2035
        %v2146 = vpop.f32.mrf.mxu0
        %v2147 = vadd.f32 0.0, %v2146
        %v2148 = vpop.f32.mrf.mxu0
        %v2149 = vpop.f32.mrf.mxu0
        %v2150 = vadd.f32 0.0, %v2149
        %v2151 = vpop.f32.mrf.mxu0
        %2152 = vmatprep.mubr.bf16.mxu0 0
        %2153 = vmatmul.mubr.bf16.gmra.mxu0 %v2038
        %v2154 = vpop.f32.mrf.mxu0
        %v2155 = vadd.f32 0.0, %v2154
        %v2156 = vpop.f32.mrf.mxu0
        %v2157 = vpop.f32.mrf.mxu0
        %v2158 = vadd.f32 0.0, %v2157
        %v2159 = vpop.f32.mrf.mxu0
        %2160 = vmatprep.mubr.bf16.mxu0 0
        %2161 = vmatmul.mubr.bf16.gmra.mxu0 %v2041
        %v2162 = vpop.f32.mrf.mxu0
        %v2163 = vadd.f32 0.0, %v2162
        %v2164 = vpop.f32.mrf.mxu0
        %v2165 = vpop.f32.mrf.mxu0
        %v2166 = vadd.f32 0.0, %v2165
        %v2167 = vpop.f32.mrf.mxu0
        %2168 = vmatprep.mubr.bf16.mxu0 0
        %2169 = vmatmul.mubr.bf16.gmra.mxu0 %v2044
        %v2170 = vpop.f32.mrf.mxu0
        %v2171 = vadd.f32 0.0, %v2170
        %v2172 = vpop.f32.mrf.mxu0
        %v2173 = vpop.f32.mrf.mxu0
        %v2174 = vadd.f32 0.0, %v2173
        %v2175 = vpop.f32.mrf.mxu0
        %2176 = vmatprep.mubr.bf16.mxu0 0
        %2177 = vmatmul.mubr.bf16.gmra.mxu0 %v2047
        %v2178 = vpop.f32.mrf.mxu0
        %v2179 = vadd.f32 0.0, %v2178
        %v2180 = vpop.f32.mrf.mxu0
        %v2181 = vpop.f32.mrf.mxu0
        %v2182 = vadd.f32 0.0, %v2181
        %v2183 = vpop.f32.mrf.mxu0
        %2184 = vmatprep.mubr.bf16.mxu0 0
        %2185 = vmatmul.mubr.bf16.gmra.mxu0 %v2050
        %v2186 = vpop.f32.mrf.mxu0
        %v2187 = vadd.f32 0.0, %v2186
        %v2188 = vpop.f32.mrf.mxu0
        %v2189 = vpop.f32.mrf.mxu0
        %v2190 = vadd.f32 0.0, %v2189
        %v2191 = vpop.f32.mrf.mxu0
        %2192 = vmatprep.mubr.bf16.mxu0 0
        %2193 = vmatmul.mubr.bf16.gmra.mxu0 %v2053
        %v2194 = vpop.f32.mrf.mxu0
        %v2195 = vadd.f32 0.0, %v2194
        %v2196 = vpop.f32.mrf.mxu0
        %v2197 = vpop.f32.mrf.mxu0
        %v2198 = vadd.f32 0.0, %v2197
        %v2199 = vpop.f32.mrf.mxu0
        %2200 = vmatprep.mubr.bf16.mxu0 0
        %2201 = vmatmul.mubr.bf16.gmra.mxu0 %v2056
        %v2202 = vpop.f32.mrf.mxu0
        %v2203 = vadd.f32 0.0, %v2202
        %v2204 = vpop.f32.mrf.mxu0
        %v2205 = vpop.f32.mrf.mxu0
        %v2206 = vadd.f32 0.0, %v2205
        %v2207 = vpop.f32.mrf.mxu0
        %2208 = vmatprep.mubr.bf16.mxu0 0
        %2209 = vmatmul.mubr.bf16.gmra.mxu0 %v2059
        %v2210 = vpop.f32.mrf.mxu0
        %v2211 = vadd.f32 0.0, %v2210
        %v2212 = vpop.f32.mrf.mxu0
        %v2213 = vpop.f32.mrf.mxu0
        %v2214 = vadd.f32 0.0, %v2213
        %v2215 = vpop.f32.mrf.mxu0
        %2216 = vmatprep.mubr.bf16.mxu0 0
        %2217 = vmatmul.mubr.bf16.gmra.mxu0 %v2062
        %v2218 = vpop.f32.mrf.mxu0
        %v2219 = vadd.f32 0.0, %v2218
        %v2220 = vpop.f32.mrf.mxu0
        %v2221 = vpop.f32.mrf.mxu0
        %v2222 = vadd.f32 0.0, %v2221
        %v2223 = vpop.f32.mrf.mxu0
        %2224 = vdwg.mxu0
        %v2225 = vadd.f32 %v1903, %v2099
        %v2226 = vadd.f32 %v1904, %v2102
        %v2227 = vadd.f32 %v1905, %v2107
        %v2228 = vadd.f32 %v1906, %v2110
        %v2229 = vadd.f32 %v1907, %v2115
        %v2230 = vadd.f32 %v1908, %v2118
        %v2231 = vadd.f32 %v1909, %v2123
        %v2232 = vadd.f32 %v1910, %v2126
        %v2233 = vadd.f32 %v1911, %v2131
        %v2234 = vadd.f32 %v1912, %v2134
        %v2235 = vadd.f32 %v1913, %v2139
        %v2236 = vadd.f32 %v1914, %v2142
        %v2237 = vadd.f32 %v1915, %v2147
        %v2238 = vadd.f32 %v1916, %v2150
        %v2239 = vadd.f32 %v1917, %v2155
        %v2240 = vadd.f32 %v1918, %v2158
        %v2241 = vadd.f32 %v1919, %v2163
        %v2242 = vadd.f32 %v1920, %v2166
        %v2243 = vadd.f32 %v1921, %v2171
        %v2244 = vadd.f32 %v1922, %v2174
        %v2245 = vadd.f32 %v1923, %v2179
        %v2246 = vadd.f32 %v1924, %v2182
        %v2247 = vadd.f32 %v1925, %v2187
        %v2248 = vadd.f32 %v1926, %v2190
        %v2249 = vadd.f32 %v1927, %v2195
        %v2250 = vadd.f32 %v1928, %v2198
        %v2251 = vadd.f32 %v1929, %v2203
        %v2252 = vadd.f32 %v1930, %v2206
        %v2253 = vadd.f32 %v1931, %v2211
        %v2254 = vadd.f32 %v1932, %v2214
        %v2255 = vadd.f32 %v1933, %v2219
        %v2256 = vadd.f32 %v1934, %v2222
        %v2257 = vld [vmem:[%s527 + $0x2] sm:$0xff]
        %v2258 = vld [vmem:[%s527 + $0xa] sm:$0xff]
        %v2259 = vld [vmem:[%s527 + $0x1a] sm:$0xff]
        %v2260 = vld [vmem:[%s527 + $0x22] sm:$0xff]
        %v2261 = vld [vmem:[%s527 + $0x32] sm:$0xff]
        %v2262 = vld [vmem:[%s527 + $0x3a] sm:$0xff]
        %v2263 = vld [vmem:[%s527 + $0x4a] sm:$0xff]
        %v2264 = vld [vmem:[%s527 + $0x52] sm:$0xff]
        %v2265 = vld [vmem:[%s527 + $0x62] sm:$0xff]
        %v2266 = vld [vmem:[%s527 + $0x6a] sm:$0xff]
        %v2267 = vld [vmem:[%s527 + $0x7a] sm:$0xff]
        %v2268 = vld [vmem:[%s527 + $0x82] sm:$0xff]
        %v2269 = vld [vmem:[%s527 + $0x92] sm:$0xff]
        %v2270 = vld [vmem:[%s527 + $0x9a] sm:$0xff]
        %v2271 = vld [vmem:[%s527 + $0xaa] sm:$0xff]
        %v2272 = vld [vmem:[%s527 + $0xb2] sm:$0xff]
        %v2273 = vld [vmem:[%s527 + $0xc2] sm:$0xff]
        %v2274 = vld [vmem:[%s527 + $0xca] sm:$0xff]
        %v2275 = vld [vmem:[%s527 + $0xda] sm:$0xff]
        %v2276 = vld [vmem:[%s527 + $0xe2] sm:$0xff]
        %v2277 = vld [vmem:[%s527 + $0xf2] sm:$0xff]
        %v2278 = vld [vmem:[%s527 + $0xfa] sm:$0xff]
        %v2279 = vld [vmem:[%s527 + $0x10a] sm:$0xff]
        %v2280 = vld [vmem:[%s527 + $0x112] sm:$0xff]
        %v2281 = vld [vmem:[%s527 + $0x122] sm:$0xff]
        %v2282 = vld [vmem:[%s527 + $0x12a] sm:$0xff]
        %v2283 = vld [vmem:[%s527 + $0x13a] sm:$0xff]
        %v2284 = vld [vmem:[%s527 + $0x142] sm:$0xff]
        %v2285 = vld [vmem:[%s527 + $0x152] sm:$0xff]
        %v2286 = vld [vmem:[%s527 + $0x15a] sm:$0xff]
        %v2287 = vld [vmem:[%s527 + $0x16a] sm:$0xff]
        %v2288 = vld [vmem:[%s527 + $0x172] sm:$0xff]
        %v2289 = vpack.c.bf16 %v2258, %v2257
        %v2290 = vpack.c.bf16 %v2260, %v2259
        %v2291 = vpack.c.bf16 %v2262, %v2261
        %v2292 = vpack.c.bf16 %v2264, %v2263
        %v2293 = vpack.c.bf16 %v2266, %v2265
        %v2294 = vpack.c.bf16 %v2268, %v2267
        %v2295 = vpack.c.bf16 %v2270, %v2269
        %v2296 = vpack.c.bf16 %v2272, %v2271
        %v2297 = vpack.c.bf16 %v2274, %v2273
        %v2298 = vpack.c.bf16 %v2276, %v2275
        %v2299 = vpack.c.bf16 %v2278, %v2277
        %v2300 = vpack.c.bf16 %v2280, %v2279
        %v2301 = vpack.c.bf16 %v2282, %v2281
        %v2302 = vpack.c.bf16 %v2284, %v2283
        %v2303 = vpack.c.bf16 %v2286, %v2285
        %v2304 = vpack.c.bf16 %v2288, %v2287
        %s2305 = scalar_lea.vmem [#allocation8], 160
        %v2306 = vld [vmem:[%s2305] sm:$0xf]
        %v2307 = vld [vmem:[%s2305 + $0x4] sm:$0xf]
        %v2308 = vld [vmem:[%s2305 + $0x8] sm:$0xf]
        %v2309 = vld [vmem:[%s2305 + $0xc] sm:$0xf]
        %v2310 = vld [vmem:[%s2305 + $0x10] sm:$0xf]
        %v2311 = vld [vmem:[%s2305 + $0x14] sm:$0xf]
        %v2312 = vld [vmem:[%s2305 + $0x18] sm:$0xf]
        %v2313 = vld [vmem:[%s2305 + $0x1c] sm:$0xf]
        %v2322 = vunpack.c.l.b16 %v2306
        %v2323 = vunpack.c.l.b16 %v2307
        %v2324 = vunpack.c.l.b16 %v2308
        %v2325 = vunpack.c.l.b16 %v2309
        %v2326 = vunpack.c.l.b16 %v2310
        %v2327 = vunpack.c.l.b16 %v2311
        %v2328 = vunpack.c.l.b16 %v2312
        %v2329 = vunpack.c.l.b16 %v2313
        %v2330 = vpack.c.b16 %v2323, %v2322
        %v2331 = vpack.c.b16 %v2325, %v2324
        %v2332 = vpack.c.b16 %v2327, %v2326
        %v2333 = vpack.c.b16 %v2329, %v2328
        %v2339 = vsel %vm474, %v2289, 0
        %v2342 = vsel %vm474, %v2290, 0
        %v2345 = vsel %vm474, %v2291, 0
        %v2348 = vsel %vm474, %v2292, 0
        %v2351 = vsel %vm474, %v2293, 0
        %v2354 = vsel %vm474, %v2294, 0
        %v2357 = vsel %vm474, %v2295, 0
        %v2360 = vsel %vm474, %v2296, 0
        %v2363 = vsel %vm474, %v2297, 0
        %v2366 = vsel %vm474, %v2298, 0
        %v2369 = vsel %vm474, %v2299, 0
        %v2372 = vsel %vm474, %v2300, 0
        %v2375 = vsel %vm474, %v2301, 0
        %v2378 = vsel %vm474, %v2302, 0
        %v2381 = vsel %vm474, %v2303, 0
        %v2384 = vsel %vm474, %v2304, 0
        %2386 = vmatprep.subr.bf16.mxu0 0
        %2387 = vmatpush1.bf16.msra.mxu0 0
        %2388 = vmatprep.subr.bf16.mxu0 0
        %2389 = vmatpush1.bf16.msra.mxu0 0
        %2390 = vmatprep.subr.bf16.mxu0 0
        %2391 = vmatpush1.bf16.msra.mxu0 0
        %2392 = vmatprep.subr.bf16.mxu0 0
        %2393 = vmatpush1.bf16.msra.mxu0 0
        %2394 = vmatprep.subr.bf16.mxu0 0
        %2395 = vmatpush1.bf16.msra.mxu0 %v2333
        %2396 = vmatprep.subr.bf16.mxu0 0
        %2397 = vmatpush1.bf16.msra.mxu0 %v2332
        %2398 = vmatprep.subr.bf16.mxu0 0
        %2399 = vmatpush1.bf16.msra.mxu0 %v2331
        %2400 = vmatprep.subr.bf16.mxu0 0
        %2401 = vmatpush1.bf16.msra.mxu0 %v2330
        %2402 = vmatprep.subr.bf16.mxu0 0
        %2403 = vmatpush2.bf16.msra.mxu0 0
        %2404 = vmatprep.subr.bf16.mxu0 0
        %2405 = vmatpush2.bf16.msra.mxu0 0
        %2406 = vmatprep.subr.bf16.mxu0 0
        %2407 = vmatpush2.bf16.msra.mxu0 0
        %2408 = vmatprep.subr.bf16.mxu0 0
        %2409 = vmatpush2.bf16.msra.mxu0 0
        %2410 = vmatprep.subr.bf16.mxu0 0
        %2411 = vmatpush2.bf16.msra.mxu0 0
        %2412 = vmatprep.subr.bf16.mxu0 0
        %2413 = vmatpush2.bf16.msra.mxu0 0
        %2414 = vmatprep.subr.bf16.mxu0 0
        %2415 = vmatpush2.bf16.msra.mxu0 0
        %2416 = vmatprep.subr.bf16.mxu0 0
        %2417 = vmatpush2.bf16.msra.mxu0 0
        %2418 = vmatprep.mubr.bf16.mxu0 0
        %2419 = vmatmul.mubr.bf16.gmra.mxu0 %v2339
        %v2420 = vpop.f32.mrf.mxu0
        %v2421 = vadd.f32 0.0, %v2420
        %v2422 = vpop.f32.mrf.mxu0
        %v2423 = vpop.f32.mrf.mxu0
        %v2424 = vadd.f32 0.0, %v2423
        %v2425 = vpop.f32.mrf.mxu0
        %2426 = vmatprep.mubr.bf16.mxu0 0
        %2427 = vmatmul.mubr.bf16.gmra.mxu0 %v2342
        %v2428 = vpop.f32.mrf.mxu0
        %v2429 = vadd.f32 0.0, %v2428
        %v2430 = vpop.f32.mrf.mxu0
        %v2431 = vpop.f32.mrf.mxu0
        %v2432 = vadd.f32 0.0, %v2431
        %v2433 = vpop.f32.mrf.mxu0
        %2434 = vmatprep.mubr.bf16.mxu0 0
        %2435 = vmatmul.mubr.bf16.gmra.mxu0 %v2345
        %v2436 = vpop.f32.mrf.mxu0
        %v2437 = vadd.f32 0.0, %v2436
        %v2438 = vpop.f32.mrf.mxu0
        %v2439 = vpop.f32.mrf.mxu0
        %v2440 = vadd.f32 0.0, %v2439
        %v2441 = vpop.f32.mrf.mxu0
        %2442 = vmatprep.mubr.bf16.mxu0 0
        %2443 = vmatmul.mubr.bf16.gmra.mxu0 %v2348
        %v2444 = vpop.f32.mrf.mxu0
        %v2445 = vadd.f32 0.0, %v2444
        %v2446 = vpop.f32.mrf.mxu0
        %v2447 = vpop.f32.mrf.mxu0
        %v2448 = vadd.f32 0.0, %v2447
        %v2449 = vpop.f32.mrf.mxu0
        %2450 = vmatprep.mubr.bf16.mxu0 0
        %2451 = vmatmul.mubr.bf16.gmra.mxu0 %v2351
        %v2452 = vpop.f32.mrf.mxu0
        %v2453 = vadd.f32 0.0, %v2452
        %v2454 = vpop.f32.mrf.mxu0
        %v2455 = vpop.f32.mrf.mxu0
        %v2456 = vadd.f32 0.0, %v2455
        %v2457 = vpop.f32.mrf.mxu0
        %2458 = vmatprep.mubr.bf16.mxu0 0
        %2459 = vmatmul.mubr.bf16.gmra.mxu0 %v2354
        %v2460 = vpop.f32.mrf.mxu0
        %v2461 = vadd.f32 0.0, %v2460
        %v2462 = vpop.f32.mrf.mxu0
        %v2463 = vpop.f32.mrf.mxu0
        %v2464 = vadd.f32 0.0, %v2463
        %v2465 = vpop.f32.mrf.mxu0
        %2466 = vmatprep.mubr.bf16.mxu0 0
        %2467 = vmatmul.mubr.bf16.gmra.mxu0 %v2357
        %v2468 = vpop.f32.mrf.mxu0
        %v2469 = vadd.f32 0.0, %v2468
        %v2470 = vpop.f32.mrf.mxu0
        %v2471 = vpop.f32.mrf.mxu0
        %v2472 = vadd.f32 0.0, %v2471
        %v2473 = vpop.f32.mrf.mxu0
        %2474 = vmatprep.mubr.bf16.mxu0 0
        %2475 = vmatmul.mubr.bf16.gmra.mxu0 %v2360
        %v2476 = vpop.f32.mrf.mxu0
        %v2477 = vadd.f32 0.0, %v2476
        %v2478 = vpop.f32.mrf.mxu0
        %v2479 = vpop.f32.mrf.mxu0
        %v2480 = vadd.f32 0.0, %v2479
        %v2481 = vpop.f32.mrf.mxu0
        %2482 = vmatprep.mubr.bf16.mxu0 0
        %2483 = vmatmul.mubr.bf16.gmra.mxu0 %v2363
        %v2484 = vpop.f32.mrf.mxu0
        %v2485 = vadd.f32 0.0, %v2484
        %v2486 = vpop.f32.mrf.mxu0
        %v2487 = vpop.f32.mrf.mxu0
        %v2488 = vadd.f32 0.0, %v2487
        %v2489 = vpop.f32.mrf.mxu0
        %2490 = vmatprep.mubr.bf16.mxu0 0
        %2491 = vmatmul.mubr.bf16.gmra.mxu0 %v2366
        %v2492 = vpop.f32.mrf.mxu0
        %v2493 = vadd.f32 0.0, %v2492
        %v2494 = vpop.f32.mrf.mxu0
        %v2495 = vpop.f32.mrf.mxu0
        %v2496 = vadd.f32 0.0, %v2495
        %v2497 = vpop.f32.mrf.mxu0
        %2498 = vmatprep.mubr.bf16.mxu0 0
        %2499 = vmatmul.mubr.bf16.gmra.mxu0 %v2369
        %v2500 = vpop.f32.mrf.mxu0
        %v2501 = vadd.f32 0.0, %v2500
        %v2502 = vpop.f32.mrf.mxu0
        %v2503 = vpop.f32.mrf.mxu0
        %v2504 = vadd.f32 0.0, %v2503
        %v2505 = vpop.f32.mrf.mxu0
        %2506 = vmatprep.mubr.bf16.mxu0 0
        %2507 = vmatmul.mubr.bf16.gmra.mxu0 %v2372
        %v2508 = vpop.f32.mrf.mxu0
        %v2509 = vadd.f32 0.0, %v2508
        %v2510 = vpop.f32.mrf.mxu0
        %v2511 = vpop.f32.mrf.mxu0
        %v2512 = vadd.f32 0.0, %v2511
        %v2513 = vpop.f32.mrf.mxu0
        %2514 = vmatprep.mubr.bf16.mxu0 0
        %2515 = vmatmul.mubr.bf16.gmra.mxu0 %v2375
        %v2516 = vpop.f32.mrf.mxu0
        %v2517 = vadd.f32 0.0, %v2516
        %v2518 = vpop.f32.mrf.mxu0
        %v2519 = vpop.f32.mrf.mxu0
        %v2520 = vadd.f32 0.0, %v2519
        %v2521 = vpop.f32.mrf.mxu0
        %2522 = vmatprep.mubr.bf16.mxu0 0
        %2523 = vmatmul.mubr.bf16.gmra.mxu0 %v2378
        %v2524 = vpop.f32.mrf.mxu0
        %v2525 = vadd.f32 0.0, %v2524
        %v2526 = vpop.f32.mrf.mxu0
        %v2527 = vpop.f32.mrf.mxu0
        %v2528 = vadd.f32 0.0, %v2527
        %v2529 = vpop.f32.mrf.mxu0
        %2530 = vmatprep.mubr.bf16.mxu0 0
        %2531 = vmatmul.mubr.bf16.gmra.mxu0 %v2381
        %v2532 = vpop.f32.mrf.mxu0
        %v2533 = vadd.f32 0.0, %v2532
        %v2534 = vpop.f32.mrf.mxu0
        %v2535 = vpop.f32.mrf.mxu0
        %v2536 = vadd.f32 0.0, %v2535
        %v2537 = vpop.f32.mrf.mxu0
        %2538 = vmatprep.mubr.bf16.mxu0 0
        %2539 = vmatmul.mubr.bf16.gmra.mxu0 %v2384
        %v2540 = vpop.f32.mrf.mxu0
        %v2541 = vadd.f32 0.0, %v2540
        %v2542 = vpop.f32.mrf.mxu0
        %v2543 = vpop.f32.mrf.mxu0
        %v2544 = vadd.f32 0.0, %v2543
        %v2545 = vpop.f32.mrf.mxu0
        %2546 = vdwg.mxu0
        %v2547 = vadd.f32 %v2225, %v2421
        %v2548 = vadd.f32 %v2226, %v2424
        %v2549 = vadd.f32 %v2227, %v2429
        %v2550 = vadd.f32 %v2228, %v2432
        %v2551 = vadd.f32 %v2229, %v2437
        %v2552 = vadd.f32 %v2230, %v2440
        %v2553 = vadd.f32 %v2231, %v2445
        %v2554 = vadd.f32 %v2232, %v2448
        %v2555 = vadd.f32 %v2233, %v2453
        %v2556 = vadd.f32 %v2234, %v2456
        %v2557 = vadd.f32 %v2235, %v2461
        %v2558 = vadd.f32 %v2236, %v2464
        %v2559 = vadd.f32 %v2237, %v2469
        %v2560 = vadd.f32 %v2238, %v2472
        %v2561 = vadd.f32 %v2239, %v2477
        %v2562 = vadd.f32 %v2240, %v2480
        %v2563 = vadd.f32 %v2241, %v2485
        %v2564 = vadd.f32 %v2242, %v2488
        %v2565 = vadd.f32 %v2243, %v2493
        %v2566 = vadd.f32 %v2244, %v2496
        %v2567 = vadd.f32 %v2245, %v2501
        %v2568 = vadd.f32 %v2246, %v2504
        %v2569 = vadd.f32 %v2247, %v2509
        %v2570 = vadd.f32 %v2248, %v2512
        %v2571 = vadd.f32 %v2249, %v2517
        %v2572 = vadd.f32 %v2250, %v2520
        %v2573 = vadd.f32 %v2251, %v2525
        %v2574 = vadd.f32 %v2252, %v2528
        %v2575 = vadd.f32 %v2253, %v2533
        %v2576 = vadd.f32 %v2254, %v2536
        %v2577 = vadd.f32 %v2255, %v2541
        %v2578 = vadd.f32 %v2256, %v2544
        %v2579 = vtanh.pop %v2547
        %v2580 = vtanh.pop %v2548
        %v2581 = vtanh.pop %v2549
        %v2582 = vtanh.pop %v2550
        %v2583 = vtanh.pop %v2551
        %v2584 = vtanh.pop %v2552
        %v2585 = vtanh.pop %v2553
        %v2586 = vtanh.pop %v2554
        %v2587 = vtanh.pop %v2555
        %v2588 = vtanh.pop %v2556
        %v2589 = vtanh.pop %v2557
        %v2590 = vtanh.pop %v2558
        %v2591 = vtanh.pop %v2559
        %v2592 = vtanh.pop %v2560
        %v2593 = vtanh.pop %v2561
        %v2594 = vtanh.pop %v2562
        %v2595 = vtanh.pop %v2563
        %v2596 = vtanh.pop %v2564
        %v2597 = vtanh.pop %v2565
        %v2598 = vtanh.pop %v2566
        %v2599 = vtanh.pop %v2567
        %v2600 = vtanh.pop %v2568
        %v2601 = vtanh.pop %v2569
        %v2602 = vtanh.pop %v2570
        %v2603 = vtanh.pop %v2571
        %v2604 = vtanh.pop %v2572
        %v2605 = vtanh.pop %v2573
        %v2606 = vtanh.pop %v2574
        %v2607 = vtanh.pop %v2575
        %v2608 = vtanh.pop %v2576
        %v2609 = vtanh.pop %v2577
        %v2610 = vtanh.pop %v2578
        %v2611 = vmul.f32 %v2547, 0.5
        %v2612 = vmul.f32 %v2548, 0.5
        %v2613 = vmul.f32 %v2549, 0.5
        %v2614 = vmul.f32 %v2550, 0.5
        %v2615 = vmul.f32 %v2551, 0.5
        %v2616 = vmul.f32 %v2552, 0.5
        %v2617 = vmul.f32 %v2553, 0.5
        %v2618 = vmul.f32 %v2554, 0.5
        %v2619 = vmul.f32 %v2555, 0.5
        %v2620 = vmul.f32 %v2556, 0.5
        %v2621 = vmul.f32 %v2557, 0.5
        %v2622 = vmul.f32 %v2558, 0.5
        %v2623 = vmul.f32 %v2559, 0.5
        %v2624 = vmul.f32 %v2560, 0.5
        %v2625 = vmul.f32 %v2561, 0.5
        %v2626 = vmul.f32 %v2562, 0.5
        %v2627 = vmul.f32 %v2563, 0.5
        %v2628 = vmul.f32 %v2564, 0.5
        %v2629 = vmul.f32 %v2565, 0.5
        %v2630 = vmul.f32 %v2566, 0.5
        %v2631 = vmul.f32 %v2567, 0.5
        %v2632 = vmul.f32 %v2568, 0.5
        %v2633 = vmul.f32 %v2569, 0.5
        %v2634 = vmul.f32 %v2570, 0.5
        %v2635 = vmul.f32 %v2571, 0.5
        %v2636 = vmul.f32 %v2572, 0.5
        %v2637 = vmul.f32 %v2573, 0.5
        %v2638 = vmul.f32 %v2574, 0.5
        %v2639 = vmul.f32 %v2575, 0.5
        %v2640 = vmul.f32 %v2576, 0.5
        %v2641 = vmul.f32 %v2577, 0.5
        %v2642 = vmul.f32 %v2578, 0.5
        %v2643 = vtanh.pop %v2611
        %v2644 = vtanh.pop %v2612
        %v2645 = vtanh.pop %v2613
        %v2646 = vtanh.pop %v2614
        %v2647 = vtanh.pop %v2615
        %v2648 = vtanh.pop %v2616
        %v2649 = vtanh.pop %v2617
        %v2650 = vtanh.pop %v2618
        %v2651 = vtanh.pop %v2619
        %v2652 = vtanh.pop %v2620
        %v2653 = vtanh.pop %v2621
        %v2654 = vtanh.pop %v2622
        %v2655 = vtanh.pop %v2623
        %v2656 = vtanh.pop %v2624
        %v2657 = vtanh.pop %v2625
        %v2658 = vtanh.pop %v2626
        %v2659 = vtanh.pop %v2627
        %v2660 = vtanh.pop %v2628
        %v2661 = vtanh.pop %v2629
        %v2662 = vtanh.pop %v2630
        %v2663 = vtanh.pop %v2631
        %v2664 = vtanh.pop %v2632
        %v2665 = vtanh.pop %v2633
        %v2666 = vtanh.pop %v2634
        %v2667 = vtanh.pop %v2635
        %v2668 = vtanh.pop %v2636
        %v2669 = vtanh.pop %v2637
        %v2670 = vtanh.pop %v2638
        %v2671 = vtanh.pop %v2639
        %v2672 = vtanh.pop %v2640
        %v2673 = vtanh.pop %v2641
        %v2674 = vtanh.pop %v2642
        %v2675 = vmul.f32 %v2643, 0.5
        %v2676 = vmul.f32 %v2644, 0.5
        %v2677 = vmul.f32 %v2645, 0.5
        %v2678 = vmul.f32 %v2646, 0.5
        %v2679 = vmul.f32 %v2647, 0.5
        %v2680 = vmul.f32 %v2648, 0.5
        %v2681 = vmul.f32 %v2649, 0.5
        %v2682 = vmul.f32 %v2650, 0.5
        %v2683 = vmul.f32 %v2651, 0.5
        %v2684 = vmul.f32 %v2652, 0.5
        %v2685 = vmul.f32 %v2653, 0.5
        %v2686 = vmul.f32 %v2654, 0.5
        %v2687 = vmul.f32 %v2655, 0.5
        %v2688 = vmul.f32 %v2656, 0.5
        %v2689 = vmul.f32 %v2657, 0.5
        %v2690 = vmul.f32 %v2658, 0.5
        %v2691 = vmul.f32 %v2659, 0.5
        %v2692 = vmul.f32 %v2660, 0.5
        %v2693 = vmul.f32 %v2661, 0.5
        %v2694 = vmul.f32 %v2662, 0.5
        %v2695 = vmul.f32 %v2663, 0.5
        %v2696 = vmul.f32 %v2664, 0.5
        %v2697 = vmul.f32 %v2665, 0.5
        %v2698 = vmul.f32 %v2666, 0.5
        %v2699 = vmul.f32 %v2667, 0.5
        %v2700 = vmul.f32 %v2668, 0.5
        %v2701 = vmul.f32 %v2669, 0.5
        %v2702 = vmul.f32 %v2670, 0.5
        %v2703 = vmul.f32 %v2671, 0.5
        %v2704 = vmul.f32 %v2672, 0.5
        %v2705 = vmul.f32 %v2673, 0.5
        %v2706 = vmul.f32 %v2674, 0.5
        %v2707 = vadd.f32 %v2675, 0.5
        %v2708 = vadd.f32 %v2676, 0.5
        %v2709 = vadd.f32 %v2677, 0.5
        %v2710 = vadd.f32 %v2678, 0.5
        %v2711 = vadd.f32 %v2679, 0.5
        %v2712 = vadd.f32 %v2680, 0.5
        %v2713 = vadd.f32 %v2681, 0.5
        %v2714 = vadd.f32 %v2682, 0.5
        %v2715 = vadd.f32 %v2683, 0.5
        %v2716 = vadd.f32 %v2684, 0.5
        %v2717 = vadd.f32 %v2685, 0.5
        %v2718 = vadd.f32 %v2686, 0.5
        %v2719 = vadd.f32 %v2687, 0.5
        %v2720 = vadd.f32 %v2688, 0.5
        %v2721 = vadd.f32 %v2689, 0.5
        %v2722 = vadd.f32 %v2690, 0.5
        %v2723 = vadd.f32 %v2691, 0.5
        %v2724 = vadd.f32 %v2692, 0.5
        %v2725 = vadd.f32 %v2693, 0.5
        %v2726 = vadd.f32 %v2694, 0.5
        %v2727 = vadd.f32 %v2695, 0.5
        %v2728 = vadd.f32 %v2696, 0.5
        %v2729 = vadd.f32 %v2697, 0.5
        %v2730 = vadd.f32 %v2698, 0.5
        %v2731 = vadd.f32 %v2699, 0.5
        %v2732 = vadd.f32 %v2700, 0.5
        %v2733 = vadd.f32 %v2701, 0.5
        %v2734 = vadd.f32 %v2702, 0.5
        %v2735 = vadd.f32 %v2703, 0.5
        %v2736 = vadd.f32 %v2704, 0.5
        %v2737 = vadd.f32 %v2705, 0.5
        %v2738 = vadd.f32 %v2706, 0.5
        %2771 = vrot.lane.b32.xlu0 %v2707, 64
        %v2772 = vpop.permute.xlu0 %2771
        %2773 = vrot.lane.b32.xlu0 %v2708, 64
        %v2774 = vpop.permute.xlu0 %2773
        %2775 = vrot.lane.b32.xlu0 %v2709, 64
        %v2776 = vpop.permute.xlu0 %2775
        %2777 = vrot.lane.b32.xlu0 %v2710, 64
        %v2778 = vpop.permute.xlu0 %2777
        %2779 = vrot.lane.b32.xlu0 %v2711, 64
        %v2780 = vpop.permute.xlu0 %2779
        %2781 = vrot.lane.b32.xlu0 %v2712, 64
        %v2782 = vpop.permute.xlu0 %2781
        %2783 = vrot.lane.b32.xlu0 %v2713, 64
        %v2784 = vpop.permute.xlu0 %2783
        %2785 = vrot.lane.b32.xlu0 %v2714, 64
        %v2786 = vpop.permute.xlu0 %2785
        %2787 = vrot.lane.b32.xlu0 %v2715, 64
        %v2788 = vpop.permute.xlu0 %2787
        %2789 = vrot.lane.b32.xlu0 %v2716, 64
        %v2790 = vpop.permute.xlu0 %2789
        %2791 = vrot.lane.b32.xlu0 %v2717, 64
        %v2792 = vpop.permute.xlu0 %2791
        %2793 = vrot.lane.b32.xlu0 %v2718, 64
        %v2794 = vpop.permute.xlu0 %2793
        %2795 = vrot.lane.b32.xlu0 %v2719, 64
        %v2796 = vpop.permute.xlu0 %2795
        %2797 = vrot.lane.b32.xlu0 %v2720, 64
        %v2798 = vpop.permute.xlu0 %2797
        %2799 = vrot.lane.b32.xlu0 %v2721, 64
        %v2800 = vpop.permute.xlu0 %2799
        %2801 = vrot.lane.b32.xlu0 %v2722, 64
        %v2802 = vpop.permute.xlu0 %2801
        %2803 = vrot.lane.b32.xlu0 %v2723, 64
        %v2804 = vpop.permute.xlu0 %2803
        %2805 = vrot.lane.b32.xlu0 %v2724, 64
        %v2806 = vpop.permute.xlu0 %2805
        %2807 = vrot.lane.b32.xlu0 %v2725, 64
        %v2808 = vpop.permute.xlu0 %2807
        %2809 = vrot.lane.b32.xlu0 %v2726, 64
        %v2810 = vpop.permute.xlu0 %2809
        %2811 = vrot.lane.b32.xlu0 %v2727, 64
        %v2812 = vpop.permute.xlu0 %2811
        %2813 = vrot.lane.b32.xlu0 %v2728, 64
        %v2814 = vpop.permute.xlu0 %2813
        %2815 = vrot.lane.b32.xlu0 %v2729, 64
        %v2816 = vpop.permute.xlu0 %2815
        %2817 = vrot.lane.b32.xlu0 %v2730, 64
        %v2818 = vpop.permute.xlu0 %2817
        %2819 = vrot.lane.b32.xlu0 %v2731, 64
        %v2820 = vpop.permute.xlu0 %2819
        %2821 = vrot.lane.b32.xlu0 %v2732, 64
        %v2822 = vpop.permute.xlu0 %2821
        %2823 = vrot.lane.b32.xlu0 %v2733, 64
        %v2824 = vpop.permute.xlu0 %2823
        %2825 = vrot.lane.b32.xlu0 %v2734, 64
        %v2826 = vpop.permute.xlu0 %2825
        %2827 = vrot.lane.b32.xlu0 %v2735, 64
        %v2828 = vpop.permute.xlu0 %2827
        %2829 = vrot.lane.b32.xlu0 %v2736, 64
        %v2830 = vpop.permute.xlu0 %2829
        %2831 = vrot.lane.b32.xlu0 %v2737, 64
        %v2832 = vpop.permute.xlu0 %2831
        %2833 = vrot.lane.b32.xlu0 %v2738, 64
        %v2834 = vpop.permute.xlu0 %2833
        %v2867 = vmul.f32 %v2579, %v2772
        %v2868 = vmul.f32 %v2580, %v2774
        %v2869 = vmul.f32 %v2581, %v2776
        %v2870 = vmul.f32 %v2582, %v2778
        %v2871 = vmul.f32 %v2583, %v2780
        %v2872 = vmul.f32 %v2584, %v2782
        %v2873 = vmul.f32 %v2585, %v2784
        %v2874 = vmul.f32 %v2586, %v2786
        %v2875 = vmul.f32 %v2587, %v2788
        %v2876 = vmul.f32 %v2588, %v2790
        %v2877 = vmul.f32 %v2589, %v2792
        %v2878 = vmul.f32 %v2590, %v2794
        %v2879 = vmul.f32 %v2591, %v2796
        %v2880 = vmul.f32 %v2592, %v2798
        %v2881 = vmul.f32 %v2593, %v2800
        %v2882 = vmul.f32 %v2594, %v2802
        %v2883 = vmul.f32 %v2595, %v2804
        %v2884 = vmul.f32 %v2596, %v2806
        %v2885 = vmul.f32 %v2597, %v2808
        %v2886 = vmul.f32 %v2598, %v2810
        %v2887 = vmul.f32 %v2599, %v2812
        %v2888 = vmul.f32 %v2600, %v2814
        %v2889 = vmul.f32 %v2601, %v2816
        %v2890 = vmul.f32 %v2602, %v2818
        %v2891 = vmul.f32 %v2603, %v2820
        %v2892 = vmul.f32 %v2604, %v2822
        %v2893 = vmul.f32 %v2605, %v2824
        %v2894 = vmul.f32 %v2606, %v2826
        %v2895 = vmul.f32 %v2607, %v2828
        %v2896 = vmul.f32 %v2608, %v2830
        %v2897 = vmul.f32 %v2609, %v2832
        %v2898 = vmul.f32 %v2610, %v2834
        %v2899 = vld [vmem:[#allocation3] sm:$0xff]
        %v2900 = vld [vmem:[#allocation3 + $0x8] sm:$0xff]
        %v2901 = vld [vmem:[#allocation3 + $0x18] sm:$0xff]
        %v2902 = vld [vmem:[#allocation3 + $0x20] sm:$0xff]
        %v2903 = vld [vmem:[#allocation3 + $0x30] sm:$0xff]
        %v2904 = vld [vmem:[#allocation3 + $0x38] sm:$0xff]
        %v2905 = vld [vmem:[#allocation3 + $0x48] sm:$0xff]
        %v2906 = vld [vmem:[#allocation3 + $0x50] sm:$0xff]
        %v2907 = vld [vmem:[#allocation3 + $0x60] sm:$0xff]
        %v2908 = vld [vmem:[#allocation3 + $0x68] sm:$0xff]
        %v2909 = vld [vmem:[#allocation3 + $0x78] sm:$0xff]
        %v2910 = vld [vmem:[#allocation3 + $0x80] sm:$0xff]
        %v2911 = vld [vmem:[#allocation3 + $0x90] sm:$0xff]
        %v2912 = vld [vmem:[#allocation3 + $0x98] sm:$0xff]
        %v2913 = vld [vmem:[#allocation3 + $0xa8] sm:$0xff]
        %v2914 = vld [vmem:[#allocation3 + $0xb0] sm:$0xff]
        %v2915 = vld [vmem:[#allocation3 + $0xc0] sm:$0xff]
        %v2916 = vld [vmem:[#allocation3 + $0xc8] sm:$0xff]
        %v2917 = vld [vmem:[#allocation3 + $0xd8] sm:$0xff]
        %v2918 = vld [vmem:[#allocation3 + $0xe0] sm:$0xff]
        %v2919 = vld [vmem:[#allocation3 + $0xf0] sm:$0xff]
        %v2920 = vld [vmem:[#allocation3 + $0xf8] sm:$0xff]
        %v2921 = vld [vmem:[#allocation3 + $0x108] sm:$0xff]
        %v2922 = vld [vmem:[#allocation3 + $0x110] sm:$0xff]
        %v2923 = vld [vmem:[#allocation3 + $0x120] sm:$0xff]
        %v2924 = vld [vmem:[#allocation3 + $0x128] sm:$0xff]
        %v2925 = vld [vmem:[#allocation3 + $0x138] sm:$0xff]
        %v2926 = vld [vmem:[#allocation3 + $0x140] sm:$0xff]
        %v2927 = vld [vmem:[#allocation3 + $0x150] sm:$0xff]
        %v2928 = vld [vmem:[#allocation3 + $0x158] sm:$0xff]
        %v2929 = vld [vmem:[#allocation3 + $0x168] sm:$0xff]
        %v2930 = vld [vmem:[#allocation3 + $0x170] sm:$0xff]
        %v2931 = vpack.c.bf16 %v2900, %v2899
        %v2932 = vpack.c.bf16 %v2902, %v2901
        %v2933 = vpack.c.bf16 %v2904, %v2903
        %v2934 = vpack.c.bf16 %v2906, %v2905
        %v2935 = vpack.c.bf16 %v2908, %v2907
        %v2936 = vpack.c.bf16 %v2910, %v2909
        %v2937 = vpack.c.bf16 %v2912, %v2911
        %v2938 = vpack.c.bf16 %v2914, %v2913
        %v2939 = vpack.c.bf16 %v2916, %v2915
        %v2940 = vpack.c.bf16 %v2918, %v2917
        %v2941 = vpack.c.bf16 %v2920, %v2919
        %v2942 = vpack.c.bf16 %v2922, %v2921
        %v2943 = vpack.c.bf16 %v2924, %v2923
        %v2944 = vpack.c.bf16 %v2926, %v2925
        %v2945 = vpack.c.bf16 %v2928, %v2927
        %v2946 = vpack.c.bf16 %v2930, %v2929
        %v2947 = vpack.c.bf16 %v443, %v442
        %v2948 = vpack.c.bf16 %v445, %v444
        %v2949 = vpack.c.bf16 %v447, %v446
        %v2950 = vpack.c.bf16 %v449, %v448
        %v2951 = vpack.c.bf16 %v451, %v450
        %v2952 = vpack.c.bf16 %v453, %v452
        %v2953 = vpack.c.bf16 %v455, %v454
        %v2954 = vpack.c.bf16 %v457, %v456
        %v2955 = vpack.c.bf16 %v459, %v458
        %v2956 = vpack.c.bf16 %v461, %v460
        %v2957 = vpack.c.bf16 %v463, %v462
        %v2958 = vpack.c.bf16 %v465, %v464
        %v2959 = vpack.c.bf16 %v467, %v466
        %v2960 = vpack.c.bf16 %v469, %v468
        %v2961 = vpack.c.bf16 %v471, %v470
        %v2962 = vpack.c.bf16 %v473, %v472
        %v2963 = vpack.c.bf16 %v2548, %v2547
        %v2964 = vpack.c.bf16 %v2550, %v2549
        %v2965 = vpack.c.bf16 %v2552, %v2551
        %v2966 = vpack.c.bf16 %v2554, %v2553
        %v2967 = vpack.c.bf16 %v2556, %v2555
        %v2968 = vpack.c.bf16 %v2558, %v2557
        %v2969 = vpack.c.bf16 %v2560, %v2559
        %v2970 = vpack.c.bf16 %v2562, %v2561
        %v2971 = vpack.c.bf16 %v2564, %v2563
        %v2972 = vpack.c.bf16 %v2566, %v2565
        %v2973 = vpack.c.bf16 %v2568, %v2567
        %v2974 = vpack.c.bf16 %v2570, %v2569
        %v2975 = vpack.c.bf16 %v2572, %v2571
        %v2976 = vpack.c.bf16 %v2574, %v2573
        %v2977 = vpack.c.bf16 %v2576, %v2575
        %v2978 = vpack.c.bf16 %v2578, %v2577
        %2995 = vrot.lane.b32.xlu0 %v2947, 64
        %v2996 = vpop.permute.xlu0 %2995
        %2997 = vrot.lane.b32.xlu0 %v2948, 64
        %v2998 = vpop.permute.xlu0 %2997
        %2999 = vrot.lane.b32.xlu0 %v2949, 64
        %v3000 = vpop.permute.xlu0 %2999
        %3001 = vrot.lane.b32.xlu0 %v2950, 64
        %v3002 = vpop.permute.xlu0 %3001
        %3003 = vrot.lane.b32.xlu0 %v2951, 64
        %v3004 = vpop.permute.xlu0 %3003
        %3005 = vrot.lane.b32.xlu0 %v2952, 64
        %v3006 = vpop.permute.xlu0 %3005
        %3007 = vrot.lane.b32.xlu0 %v2953, 64
        %v3008 = vpop.permute.xlu0 %3007
        %3009 = vrot.lane.b32.xlu0 %v2954, 64
        %v3010 = vpop.permute.xlu0 %3009
        %3011 = vrot.lane.b32.xlu0 %v2955, 64
        %v3012 = vpop.permute.xlu0 %3011
        %3013 = vrot.lane.b32.xlu0 %v2956, 64
        %v3014 = vpop.permute.xlu0 %3013
        %3015 = vrot.lane.b32.xlu0 %v2957, 64
        %v3016 = vpop.permute.xlu0 %3015
        %3017 = vrot.lane.b32.xlu0 %v2958, 64
        %v3018 = vpop.permute.xlu0 %3017
        %3019 = vrot.lane.b32.xlu0 %v2959, 64
        %v3020 = vpop.permute.xlu0 %3019
        %3021 = vrot.lane.b32.xlu0 %v2960, 64
        %v3022 = vpop.permute.xlu0 %3021
        %3023 = vrot.lane.b32.xlu0 %v2961, 64
        %v3024 = vpop.permute.xlu0 %3023
        %3025 = vrot.lane.b32.xlu0 %v2962, 64
        %v3026 = vpop.permute.xlu0 %3025
        %v3029 = vsel %vm474, %v2931, %v2996
        %v3033 = vsel %vm474, %v2932, %v2998
        %v3037 = vsel %vm474, %v2933, %v3000
        %v3041 = vsel %vm474, %v2934, %v3002
        %v3045 = vsel %vm474, %v2935, %v3004
        %v3049 = vsel %vm474, %v2936, %v3006
        %v3053 = vsel %vm474, %v2937, %v3008
        %v3057 = vsel %vm474, %v2938, %v3010
        %v3061 = vsel %vm474, %v2939, %v3012
        %v3065 = vsel %vm474, %v2940, %v3014
        %v3069 = vsel %vm474, %v2941, %v3016
        %v3073 = vsel %vm474, %v2942, %v3018
        %v3077 = vsel %vm474, %v2943, %v3020
        %v3081 = vsel %vm474, %v2944, %v3022
        %v3085 = vsel %vm474, %v2945, %v3024
        %v3089 = vsel %vm474, %v2946, %v3026
        %v3091 = vld [vmem:[#allocation9] sm:$0xf]
        %v3092 = vld [vmem:[#allocation9 + $0x4] sm:$0xf]
        %v3093 = vld [vmem:[#allocation9 + $0x8] sm:$0xf]
        %v3094 = vld [vmem:[#allocation9 + $0xc] sm:$0xf]
        %v3095 = vld [vmem:[#allocation9 + $0x10] sm:$0xf]
        %v3096 = vld [vmem:[#allocation9 + $0x14] sm:$0xf]
        %v3097 = vld [vmem:[#allocation9 + $0x18] sm:$0xf]
        %v3098 = vld [vmem:[#allocation9 + $0x1c] sm:$0xf]
        %v3099 = vld [vmem:[#allocation9 + $0x20] sm:$0xf]
        %v3100 = vld [vmem:[#allocation9 + $0x24] sm:$0xf]
        %v3101 = vld [vmem:[#allocation9 + $0x28] sm:$0xf]
        %v3102 = vld [vmem:[#allocation9 + $0x2c] sm:$0xf]
        %v3103 = vld [vmem:[#allocation9 + $0x30] sm:$0xf]
        %v3104 = vld [vmem:[#allocation9 + $0x34] sm:$0xf]
        %v3105 = vld [vmem:[#allocation9 + $0x38] sm:$0xf]
        %v3106 = vld [vmem:[#allocation9 + $0x3c] sm:$0xf]
        %v3107 = vld [vmem:[#allocation9 + $0x40] sm:$0xf]
        %v3108 = vld [vmem:[#allocation9 + $0x44] sm:$0xf]
        %v3109 = vld [vmem:[#allocation9 + $0x48] sm:$0xf]
        %v3110 = vld [vmem:[#allocation9 + $0x4c] sm:$0xf]
        %v3111 = vld [vmem:[#allocation9 + $0x50] sm:$0xf]
        %v3112 = vld [vmem:[#allocation9 + $0x54] sm:$0xf]
        %v3113 = vld [vmem:[#allocation9 + $0x58] sm:$0xf]
        %v3114 = vld [vmem:[#allocation9 + $0x5c] sm:$0xf]
        %v3115 = vld [vmem:[#allocation9 + $0x60] sm:$0xf]
        %v3116 = vld [vmem:[#allocation9 + $0x64] sm:$0xf]
        %v3117 = vld [vmem:[#allocation9 + $0x68] sm:$0xf]
        %v3118 = vld [vmem:[#allocation9 + $0x6c] sm:$0xf]
        %v3119 = vld [vmem:[#allocation9 + $0x70] sm:$0xf]
        %v3120 = vld [vmem:[#allocation9 + $0x74] sm:$0xf]
        %v3121 = vld [vmem:[#allocation9 + $0x78] sm:$0xf]
        %v3122 = vld [vmem:[#allocation9 + $0x7c] sm:$0xf]
        %v3123 = vld [vmem:[%s5] sm:$0x1]
        %v3125 = vlaneseq
        %v3126 = vshrl.u32 %v3125, 7
        %v3127 = vsub.s32 0, %v3126
        %v3128 = vrot.slane %v3123, %v3127
        %v3162 = vunpack.c.l.b16 %v3091
        %v3163 = vunpack.c.l.b16 %v3092
        %v3164 = vunpack.c.l.b16 %v3093
        %v3165 = vunpack.c.l.b16 %v3094
        %v3166 = vunpack.c.l.b16 %v3095
        %v3167 = vunpack.c.l.b16 %v3096
        %v3168 = vunpack.c.l.b16 %v3097
        %v3169 = vunpack.c.l.b16 %v3098
        %v3170 = vunpack.c.l.b16 %v3099
        %v3171 = vunpack.c.l.b16 %v3100
        %v3172 = vunpack.c.l.b16 %v3101
        %v3173 = vunpack.c.l.b16 %v3102
        %v3174 = vunpack.c.l.b16 %v3103
        %v3175 = vunpack.c.l.b16 %v3104
        %v3176 = vunpack.c.l.b16 %v3105
        %v3177 = vunpack.c.l.b16 %v3106
        %v3178 = vunpack.c.l.b16 %v3107
        %v3179 = vunpack.c.l.b16 %v3108
        %v3180 = vunpack.c.l.b16 %v3109
        %v3181 = vunpack.c.l.b16 %v3110
        %v3182 = vunpack.c.l.b16 %v3111
        %v3183 = vunpack.c.l.b16 %v3112
        %v3184 = vunpack.c.l.b16 %v3113
        %v3185 = vunpack.c.l.b16 %v3114
        %v3186 = vunpack.c.l.b16 %v3115
        %v3187 = vunpack.c.l.b16 %v3116
        %v3188 = vunpack.c.l.b16 %v3117
        %v3189 = vunpack.c.l.b16 %v3118
        %v3190 = vunpack.c.l.b16 %v3119
        %v3191 = vunpack.c.l.b16 %v3120
        %v3192 = vunpack.c.l.b16 %v3121
        %v3193 = vunpack.c.l.b16 %v3122
        %v3194 = vpack.c.b16 %v3163, %v3162
        %v3195 = vpack.c.b16 %v3165, %v3164
        %v3196 = vpack.c.b16 %v3167, %v3166
        %v3197 = vpack.c.b16 %v3169, %v3168
        %v3198 = vpack.c.b16 %v3171, %v3170
        %v3199 = vpack.c.b16 %v3173, %v3172
        %v3200 = vpack.c.b16 %v3175, %v3174
        %v3201 = vpack.c.b16 %v3177, %v3176
        %v3202 = vpack.c.b16 %v3179, %v3178
        %v3203 = vpack.c.b16 %v3181, %v3180
        %v3204 = vpack.c.b16 %v3183, %v3182
        %v3205 = vpack.c.b16 %v3185, %v3184
        %v3206 = vpack.c.b16 %v3187, %v3186
        %v3207 = vpack.c.b16 %v3189, %v3188
        %v3208 = vpack.c.b16 %v3191, %v3190
        %v3209 = vpack.c.b16 %v3193, %v3192
        %3226 = vmatprep.subr.bf16.mxu0 0
        %3227 = vmatpush1.bf16.msra.mxu0 %v3201
        %3228 = vmatprep.subr.bf16.mxu0 0
        %3229 = vmatpush1.bf16.msra.mxu0 %v3200
        %3230 = vmatprep.subr.bf16.mxu0 0
        %3231 = vmatpush1.bf16.msra.mxu0 %v3199
        %3232 = vmatprep.subr.bf16.mxu0 0
        %3233 = vmatpush1.bf16.msra.mxu0 %v3198
        %3234 = vmatprep.subr.bf16.mxu0 0
        %3235 = vmatpush1.bf16.msra.mxu0 %v3197
        %3236 = vmatprep.subr.bf16.mxu0 0
        %3237 = vmatpush1.bf16.msra.mxu0 %v3196
        %3238 = vmatprep.subr.bf16.mxu0 0
        %3239 = vmatpush1.bf16.msra.mxu0 %v3195
        %3240 = vmatprep.subr.bf16.mxu0 0
        %3241 = vmatpush1.bf16.msra.mxu0 %v3194
        %3242 = vmatprep.subr.bf16.mxu0 0
        %3243 = vmatpush2.bf16.msra.mxu0 %v3209
        %3244 = vmatprep.subr.bf16.mxu0 0
        %3245 = vmatpush2.bf16.msra.mxu0 %v3208
        %3246 = vmatprep.subr.bf16.mxu0 0
        %3247 = vmatpush2.bf16.msra.mxu0 %v3207
        %3248 = vmatprep.subr.bf16.mxu0 0
        %3249 = vmatpush2.bf16.msra.mxu0 %v3206
        %3250 = vmatprep.subr.bf16.mxu0 0
        %3251 = vmatpush2.bf16.msra.mxu0 %v3205
        %3252 = vmatprep.subr.bf16.mxu0 0
        %3253 = vmatpush2.bf16.msra.mxu0 %v3204
        %3254 = vmatprep.subr.bf16.mxu0 0
        %3255 = vmatpush2.bf16.msra.mxu0 %v3203
        %3256 = vmatprep.subr.bf16.mxu0 0
        %3257 = vmatpush2.bf16.msra.mxu0 %v3202
        %3258 = vmatprep.mubr.bf16.mxu0 %v2963
        %3259 = vmatmul.mubr.bf16.gmra.mxu0 %v3029
        %v3260 = vpop.f32.mrf.mxu0
        %v3261 = vadd.f32 %v3128, %v3260
        %v3262 = vpop.f32.mrf.mxu0
        %v3263 = vpop.f32.mrf.mxu0
        %v3264 = vadd.f32 %v3128, %v3263
        %v3265 = vpop.f32.mrf.mxu0
        %3266 = vmatprep.mubr.bf16.mxu0 %v2964
        %3267 = vmatmul.mubr.bf16.gmra.mxu0 %v3033
        %v3268 = vpop.f32.mrf.mxu0
        %v3269 = vadd.f32 %v3128, %v3268
        %v3270 = vpop.f32.mrf.mxu0
        %v3271 = vpop.f32.mrf.mxu0
        %v3272 = vadd.f32 %v3128, %v3271
        %v3273 = vpop.f32.mrf.mxu0
        %3274 = vmatprep.mubr.bf16.mxu0 %v2965
        %3275 = vmatmul.mubr.bf16.gmra.mxu0 %v3037
        %v3276 = vpop.f32.mrf.mxu0
        %v3277 = vadd.f32 %v3128, %v3276
        %v3278 = vpop.f32.mrf.mxu0
        %v3279 = vpop.f32.mrf.mxu0
        %v3280 = vadd.f32 %v3128, %v3279
        %v3281 = vpop.f32.mrf.mxu0
        %3282 = vmatprep.mubr.bf16.mxu0 %v2966
        %3283 = vmatmul.mubr.bf16.gmra.mxu0 %v3041
        %v3284 = vpop.f32.mrf.mxu0
        %v3285 = vadd.f32 %v3128, %v3284
        %v3286 = vpop.f32.mrf.mxu0
        %v3287 = vpop.f32.mrf.mxu0
        %v3288 = vadd.f32 %v3128, %v3287
        %v3289 = vpop.f32.mrf.mxu0
        %3290 = vmatprep.mubr.bf16.mxu0 %v2967
        %3291 = vmatmul.mubr.bf16.gmra.mxu0 %v3045
        %v3292 = vpop.f32.mrf.mxu0
        %v3293 = vadd.f32 %v3128, %v3292
        %v3294 = vpop.f32.mrf.mxu0
        %v3295 = vpop.f32.mrf.mxu0
        %v3296 = vadd.f32 %v3128, %v3295
        %v3297 = vpop.f32.mrf.mxu0
        %3298 = vmatprep.mubr.bf16.mxu0 %v2968
        %3299 = vmatmul.mubr.bf16.gmra.mxu0 %v3049
        %v3300 = vpop.f32.mrf.mxu0
        %v3301 = vadd.f32 %v3128, %v3300
        %v3302 = vpop.f32.mrf.mxu0
        %v3303 = vpop.f32.mrf.mxu0
        %v3304 = vadd.f32 %v3128, %v3303
        %v3305 = vpop.f32.mrf.mxu0
        %3306 = vmatprep.mubr.bf16.mxu0 %v2969
        %3307 = vmatmul.mubr.bf16.gmra.mxu0 %v3053
        %v3308 = vpop.f32.mrf.mxu0
        %v3309 = vadd.f32 %v3128, %v3308
        %v3310 = vpop.f32.mrf.mxu0
        %v3311 = vpop.f32.mrf.mxu0
        %v3312 = vadd.f32 %v3128, %v3311
        %v3313 = vpop.f32.mrf.mxu0
        %3314 = vmatprep.mubr.bf16.mxu0 %v2970
        %3315 = vmatmul.mubr.bf16.gmra.mxu0 %v3057
        %v3316 = vpop.f32.mrf.mxu0
        %v3317 = vadd.f32 %v3128, %v3316
        %v3318 = vpop.f32.mrf.mxu0
        %v3319 = vpop.f32.mrf.mxu0
        %v3320 = vadd.f32 %v3128, %v3319
        %v3321 = vpop.f32.mrf.mxu0
        %3322 = vmatprep.mubr.bf16.mxu0 %v2971
        %3323 = vmatmul.mubr.bf16.gmra.mxu0 %v3061
        %v3324 = vpop.f32.mrf.mxu0
        %v3325 = vadd.f32 %v3128, %v3324
        %v3326 = vpop.f32.mrf.mxu0
        %v3327 = vpop.f32.mrf.mxu0
        %v3328 = vadd.f32 %v3128, %v3327
        %v3329 = vpop.f32.mrf.mxu0
        %3330 = vmatprep.mubr.bf16.mxu0 %v2972
        %3331 = vmatmul.mubr.bf16.gmra.mxu0 %v3065
        %v3332 = vpop.f32.mrf.mxu0
        %v3333 = vadd.f32 %v3128, %v3332
        %v3334 = vpop.f32.mrf.mxu0
        %v3335 = vpop.f32.mrf.mxu0
        %v3336 = vadd.f32 %v3128, %v3335
        %v3337 = vpop.f32.mrf.mxu0
        %3338 = vmatprep.mubr.bf16.mxu0 %v2973
        %3339 = vmatmul.mubr.bf16.gmra.mxu0 %v3069
        %v3340 = vpop.f32.mrf.mxu0
        %v3341 = vadd.f32 %v3128, %v3340
        %v3342 = vpop.f32.mrf.mxu0
        %v3343 = vpop.f32.mrf.mxu0
        %v3344 = vadd.f32 %v3128, %v3343
        %v3345 = vpop.f32.mrf.mxu0
        %3346 = vmatprep.mubr.bf16.mxu0 %v2974
        %3347 = vmatmul.mubr.bf16.gmra.mxu0 %v3073
        %v3348 = vpop.f32.mrf.mxu0
        %v3349 = vadd.f32 %v3128, %v3348
        %v3350 = vpop.f32.mrf.mxu0
        %v3351 = vpop.f32.mrf.mxu0
        %v3352 = vadd.f32 %v3128, %v3351
        %v3353 = vpop.f32.mrf.mxu0
        %3354 = vmatprep.mubr.bf16.mxu0 %v2975
        %3355 = vmatmul.mubr.bf16.gmra.mxu0 %v3077
        %v3356 = vpop.f32.mrf.mxu0
        %v3357 = vadd.f32 %v3128, %v3356
        %v3358 = vpop.f32.mrf.mxu0
        %v3359 = vpop.f32.mrf.mxu0
        %v3360 = vadd.f32 %v3128, %v3359
        %v3361 = vpop.f32.mrf.mxu0
        %3362 = vmatprep.mubr.bf16.mxu0 %v2976
        %3363 = vmatmul.mubr.bf16.gmra.mxu0 %v3081
        %v3364 = vpop.f32.mrf.mxu0
        %v3365 = vadd.f32 %v3128, %v3364
        %v3366 = vpop.f32.mrf.mxu0
        %v3367 = vpop.f32.mrf.mxu0
        %v3368 = vadd.f32 %v3128, %v3367
        %v3369 = vpop.f32.mrf.mxu0
        %3370 = vmatprep.mubr.bf16.mxu0 %v2977
        %3371 = vmatmul.mubr.bf16.gmra.mxu0 %v3085
        %v3372 = vpop.f32.mrf.mxu0
        %v3373 = vadd.f32 %v3128, %v3372
        %v3374 = vpop.f32.mrf.mxu0
        %v3375 = vpop.f32.mrf.mxu0
        %v3376 = vadd.f32 %v3128, %v3375
        %v3377 = vpop.f32.mrf.mxu0
        %3378 = vmatprep.mubr.bf16.mxu0 %v2978
        %3379 = vmatmul.mubr.bf16.gmra.mxu0 %v3089
        %v3380 = vpop.f32.mrf.mxu0
        %v3381 = vadd.f32 %v3128, %v3380
        %v3382 = vpop.f32.mrf.mxu0
        %v3383 = vpop.f32.mrf.mxu0
        %v3384 = vadd.f32 %v3128, %v3383
        %v3385 = vpop.f32.mrf.mxu0
        %3386 = vdwg.mxu0
        %v3387 = vtanh.pop %v3261
        %v3388 = vtanh.pop %v3264
        %v3389 = vtanh.pop %v3269
        %v3390 = vtanh.pop %v3272
        %v3391 = vtanh.pop %v3277
        %v3392 = vtanh.pop %v3280
        %v3393 = vtanh.pop %v3285
        %v3394 = vtanh.pop %v3288
        %v3395 = vtanh.pop %v3293
        %v3396 = vtanh.pop %v3296
        %v3397 = vtanh.pop %v3301
        %v3398 = vtanh.pop %v3304
        %v3399 = vtanh.pop %v3309
        %v3400 = vtanh.pop %v3312
        %v3401 = vtanh.pop %v3317
        %v3402 = vtanh.pop %v3320
        %v3403 = vtanh.pop %v3325
        %v3404 = vtanh.pop %v3328
        %v3405 = vtanh.pop %v3333
        %v3406 = vtanh.pop %v3336
        %v3407 = vtanh.pop %v3341
        %v3408 = vtanh.pop %v3344
        %v3409 = vtanh.pop %v3349
        %v3410 = vtanh.pop %v3352
        %v3411 = vtanh.pop %v3357
        %v3412 = vtanh.pop %v3360
        %v3413 = vtanh.pop %v3365
        %v3414 = vtanh.pop %v3368
        %v3415 = vtanh.pop %v3373
        %v3416 = vtanh.pop %v3376
        %v3417 = vtanh.pop %v3381
        %v3418 = vtanh.pop %v3384
        %v3419 = vmul.f32 %v3261, 0.5
        %v3420 = vmul.f32 %v3264, 0.5
        %v3421 = vmul.f32 %v3269, 0.5
        %v3422 = vmul.f32 %v3272, 0.5
        %v3423 = vmul.f32 %v3277, 0.5
        %v3424 = vmul.f32 %v3280, 0.5
        %v3425 = vmul.f32 %v3285, 0.5
        %v3426 = vmul.f32 %v3288, 0.5
        %v3427 = vmul.f32 %v3293, 0.5
        %v3428 = vmul.f32 %v3296, 0.5
        %v3429 = vmul.f32 %v3301, 0.5
        %v3430 = vmul.f32 %v3304, 0.5
        %v3431 = vmul.f32 %v3309, 0.5
        %v3432 = vmul.f32 %v3312, 0.5
        %v3433 = vmul.f32 %v3317, 0.5
        %v3434 = vmul.f32 %v3320, 0.5
        %v3435 = vmul.f32 %v3325, 0.5
        %v3436 = vmul.f32 %v3328, 0.5
        %v3437 = vmul.f32 %v3333, 0.5
        %v3438 = vmul.f32 %v3336, 0.5
        %v3439 = vmul.f32 %v3341, 0.5
        %v3440 = vmul.f32 %v3344, 0.5
        %v3441 = vmul.f32 %v3349, 0.5
        %v3442 = vmul.f32 %v3352, 0.5
        %v3443 = vmul.f32 %v3357, 0.5
        %v3444 = vmul.f32 %v3360, 0.5
        %v3445 = vmul.f32 %v3365, 0.5
        %v3446 = vmul.f32 %v3368, 0.5
        %v3447 = vmul.f32 %v3373, 0.5
        %v3448 = vmul.f32 %v3376, 0.5
        %v3449 = vmul.f32 %v3381, 0.5
        %v3450 = vmul.f32 %v3384, 0.5
        %v3451 = vtanh.pop %v3419
        %v3452 = vtanh.pop %v3420
        %v3453 = vtanh.pop %v3421
        %v3454 = vtanh.pop %v3422
        %v3455 = vtanh.pop %v3423
        %v3456 = vtanh.pop %v3424
        %v3457 = vtanh.pop %v3425
        %v3458 = vtanh.pop %v3426
        %v3459 = vtanh.pop %v3427
        %v3460 = vtanh.pop %v3428
        %v3461 = vtanh.pop %v3429
        %v3462 = vtanh.pop %v3430
        %v3463 = vtanh.pop %v3431
        %v3464 = vtanh.pop %v3432
        %v3465 = vtanh.pop %v3433
        %v3466 = vtanh.pop %v3434
        %v3467 = vtanh.pop %v3435
        %v3468 = vtanh.pop %v3436
        %v3469 = vtanh.pop %v3437
        %v3470 = vtanh.pop %v3438
        %v3471 = vtanh.pop %v3439
        %v3472 = vtanh.pop %v3440
        %v3473 = vtanh.pop %v3441
        %v3474 = vtanh.pop %v3442
        %v3475 = vtanh.pop %v3443
        %v3476 = vtanh.pop %v3444
        %v3477 = vtanh.pop %v3445
        %v3478 = vtanh.pop %v3446
        %v3479 = vtanh.pop %v3447
        %v3480 = vtanh.pop %v3448
        %v3481 = vtanh.pop %v3449
        %v3482 = vtanh.pop %v3450
        %v3483 = vmul.f32 %v3451, 0.5
        %v3484 = vmul.f32 %v3452, 0.5
        %v3485 = vmul.f32 %v3453, 0.5
        %v3486 = vmul.f32 %v3454, 0.5
        %v3487 = vmul.f32 %v3455, 0.5
        %v3488 = vmul.f32 %v3456, 0.5
        %v3489 = vmul.f32 %v3457, 0.5
        %v3490 = vmul.f32 %v3458, 0.5
        %v3491 = vmul.f32 %v3459, 0.5
        %v3492 = vmul.f32 %v3460, 0.5
        %v3493 = vmul.f32 %v3461, 0.5
        %v3494 = vmul.f32 %v3462, 0.5
        %v3495 = vmul.f32 %v3463, 0.5
        %v3496 = vmul.f32 %v3464, 0.5
        %v3497 = vmul.f32 %v3465, 0.5
        %v3498 = vmul.f32 %v3466, 0.5
        %v3499 = vmul.f32 %v3467, 0.5
        %v3500 = vmul.f32 %v3468, 0.5
        %v3501 = vmul.f32 %v3469, 0.5
        %v3502 = vmul.f32 %v3470, 0.5
        %v3503 = vmul.f32 %v3471, 0.5
        %v3504 = vmul.f32 %v3472, 0.5
        %v3505 = vmul.f32 %v3473, 0.5
        %v3506 = vmul.f32 %v3474, 0.5
        %v3507 = vmul.f32 %v3475, 0.5
        %v3508 = vmul.f32 %v3476, 0.5
        %v3509 = vmul.f32 %v3477, 0.5
        %v3510 = vmul.f32 %v3478, 0.5
        %v3511 = vmul.f32 %v3479, 0.5
        %v3512 = vmul.f32 %v3480, 0.5
        %v3513 = vmul.f32 %v3481, 0.5
        %v3514 = vmul.f32 %v3482, 0.5
        %v3515 = vadd.f32 %v3483, 0.5
        %v3516 = vadd.f32 %v3484, 0.5
        %v3517 = vadd.f32 %v3485, 0.5
        %v3518 = vadd.f32 %v3486, 0.5
        %v3519 = vadd.f32 %v3487, 0.5
        %v3520 = vadd.f32 %v3488, 0.5
        %v3521 = vadd.f32 %v3489, 0.5
        %v3522 = vadd.f32 %v3490, 0.5
        %v3523 = vadd.f32 %v3491, 0.5
        %v3524 = vadd.f32 %v3492, 0.5
        %v3525 = vadd.f32 %v3493, 0.5
        %v3526 = vadd.f32 %v3494, 0.5
        %v3527 = vadd.f32 %v3495, 0.5
        %v3528 = vadd.f32 %v3496, 0.5
        %v3529 = vadd.f32 %v3497, 0.5
        %v3530 = vadd.f32 %v3498, 0.5
        %v3531 = vadd.f32 %v3499, 0.5
        %v3532 = vadd.f32 %v3500, 0.5
        %v3533 = vadd.f32 %v3501, 0.5
        %v3534 = vadd.f32 %v3502, 0.5
        %v3535 = vadd.f32 %v3503, 0.5
        %v3536 = vadd.f32 %v3504, 0.5
        %v3537 = vadd.f32 %v3505, 0.5
        %v3538 = vadd.f32 %v3506, 0.5
        %v3539 = vadd.f32 %v3507, 0.5
        %v3540 = vadd.f32 %v3508, 0.5
        %v3541 = vadd.f32 %v3509, 0.5
        %v3542 = vadd.f32 %v3510, 0.5
        %v3543 = vadd.f32 %v3511, 0.5
        %v3544 = vadd.f32 %v3512, 0.5
        %v3545 = vadd.f32 %v3513, 0.5
        %v3546 = vadd.f32 %v3514, 0.5
        %3579 = vrot.lane.b32.xlu0 %v3515, 64
        %v3580 = vpop.permute.xlu0 %3579
        %3581 = vrot.lane.b32.xlu0 %v3516, 64
        %v3582 = vpop.permute.xlu0 %3581
        %3583 = vrot.lane.b32.xlu0 %v3517, 64
        %v3584 = vpop.permute.xlu0 %3583
        %3585 = vrot.lane.b32.xlu0 %v3518, 64
        %v3586 = vpop.permute.xlu0 %3585
        %3587 = vrot.lane.b32.xlu0 %v3519, 64
        %v3588 = vpop.permute.xlu0 %3587
        %3589 = vrot.lane.b32.xlu0 %v3520, 64
        %v3590 = vpop.permute.xlu0 %3589
        %3591 = vrot.lane.b32.xlu0 %v3521, 64
        %v3592 = vpop.permute.xlu0 %3591
        %3593 = vrot.lane.b32.xlu0 %v3522, 64
        %v3594 = vpop.permute.xlu0 %3593
        %3595 = vrot.lane.b32.xlu0 %v3523, 64
        %v3596 = vpop.permute.xlu0 %3595
        %3597 = vrot.lane.b32.xlu0 %v3524, 64
        %v3598 = vpop.permute.xlu0 %3597
        %3599 = vrot.lane.b32.xlu0 %v3525, 64
        %v3600 = vpop.permute.xlu0 %3599
        %3601 = vrot.lane.b32.xlu0 %v3526, 64
        %v3602 = vpop.permute.xlu0 %3601
        %3603 = vrot.lane.b32.xlu0 %v3527, 64
        %v3604 = vpop.permute.xlu0 %3603
        %3605 = vrot.lane.b32.xlu0 %v3528, 64
        %v3606 = vpop.permute.xlu0 %3605
        %3607 = vrot.lane.b32.xlu0 %v3529, 64
        %v3608 = vpop.permute.xlu0 %3607
        %3609 = vrot.lane.b32.xlu0 %v3530, 64
        %v3610 = vpop.permute.xlu0 %3609
        %3611 = vrot.lane.b32.xlu0 %v3531, 64
        %v3612 = vpop.permute.xlu0 %3611
        %3613 = vrot.lane.b32.xlu0 %v3532, 64
        %v3614 = vpop.permute.xlu0 %3613
        %3615 = vrot.lane.b32.xlu0 %v3533, 64
        %v3616 = vpop.permute.xlu0 %3615
        %3617 = vrot.lane.b32.xlu0 %v3534, 64
        %v3618 = vpop.permute.xlu0 %3617
        %3619 = vrot.lane.b32.xlu0 %v3535, 64
        %v3620 = vpop.permute.xlu0 %3619
        %3621 = vrot.lane.b32.xlu0 %v3536, 64
        %v3622 = vpop.permute.xlu0 %3621
        %3623 = vrot.lane.b32.xlu0 %v3537, 64
        %v3624 = vpop.permute.xlu0 %3623
        %3625 = vrot.lane.b32.xlu0 %v3538, 64
        %v3626 = vpop.permute.xlu0 %3625
        %3627 = vrot.lane.b32.xlu0 %v3539, 64
        %v3628 = vpop.permute.xlu0 %3627
        %3629 = vrot.lane.b32.xlu0 %v3540, 64
        %v3630 = vpop.permute.xlu0 %3629
        %3631 = vrot.lane.b32.xlu0 %v3541, 64
        %v3632 = vpop.permute.xlu0 %3631
        %3633 = vrot.lane.b32.xlu0 %v3542, 64
        %v3634 = vpop.permute.xlu0 %3633
        %3635 = vrot.lane.b32.xlu0 %v3543, 64
        %v3636 = vpop.permute.xlu0 %3635
        %3637 = vrot.lane.b32.xlu0 %v3544, 64
        %v3638 = vpop.permute.xlu0 %3637
        %3639 = vrot.lane.b32.xlu0 %v3545, 64
        %v3640 = vpop.permute.xlu0 %3639
        %3641 = vrot.lane.b32.xlu0 %v3546, 64
        %v3642 = vpop.permute.xlu0 %3641
        %v3675 = vmul.f32 %v3387, %v3580
        %v3676 = vmul.f32 %v3388, %v3582
        %v3677 = vmul.f32 %v3389, %v3584
        %v3678 = vmul.f32 %v3390, %v3586
        %v3679 = vmul.f32 %v3391, %v3588
        %v3680 = vmul.f32 %v3392, %v3590
        %v3681 = vmul.f32 %v3393, %v3592
        %v3682 = vmul.f32 %v3394, %v3594
        %v3683 = vmul.f32 %v3395, %v3596
        %v3684 = vmul.f32 %v3396, %v3598
        %v3685 = vmul.f32 %v3397, %v3600
        %v3686 = vmul.f32 %v3398, %v3602
        %v3687 = vmul.f32 %v3399, %v3604
        %v3688 = vmul.f32 %v3400, %v3606
        %v3689 = vmul.f32 %v3401, %v3608
        %v3690 = vmul.f32 %v3402, %v3610
        %v3691 = vmul.f32 %v3403, %v3612
        %v3692 = vmul.f32 %v3404, %v3614
        %v3693 = vmul.f32 %v3405, %v3616
        %v3694 = vmul.f32 %v3406, %v3618
        %v3695 = vmul.f32 %v3407, %v3620
        %v3696 = vmul.f32 %v3408, %v3622
        %v3697 = vmul.f32 %v3409, %v3624
        %v3698 = vmul.f32 %v3410, %v3626
        %v3699 = vmul.f32 %v3411, %v3628
        %v3700 = vmul.f32 %v3412, %v3630
        %v3701 = vmul.f32 %v3413, %v3632
        %v3702 = vmul.f32 %v3414, %v3634
        %v3703 = vmul.f32 %v3415, %v3636
        %v3704 = vmul.f32 %v3416, %v3638
        %v3705 = vmul.f32 %v3417, %v3640
        %v3706 = vmul.f32 %v3418, %v3642
        %v3707 = vpack.c.bf16 %v3676, %v3675
        %v3708 = vpack.c.bf16 %v3678, %v3677
        %v3709 = vpack.c.bf16 %v3680, %v3679
        %v3710 = vpack.c.bf16 %v3682, %v3681
        %v3711 = vpack.c.bf16 %v3684, %v3683
        %v3712 = vpack.c.bf16 %v3686, %v3685
        %v3713 = vpack.c.bf16 %v3688, %v3687
        %v3714 = vpack.c.bf16 %v3690, %v3689
        %v3715 = vpack.c.bf16 %v3692, %v3691
        %v3716 = vpack.c.bf16 %v3694, %v3693
        %v3717 = vpack.c.bf16 %v3696, %v3695
        %v3718 = vpack.c.bf16 %v3698, %v3697
        %v3719 = vpack.c.bf16 %v3700, %v3699
        %v3720 = vpack.c.bf16 %v3702, %v3701
        %v3721 = vpack.c.bf16 %v3704, %v3703
        %v3722 = vpack.c.bf16 %v3706, %v3705
        %v3723 = vld [vmem:[#allocation11] sm:$0xf]
        %v3724 = vld [vmem:[#allocation11 + $0x4] sm:$0xf]
        %v3725 = vld [vmem:[#allocation11 + $0x8] sm:$0xf]
        %v3726 = vld [vmem:[#allocation11 + $0xc] sm:$0xf]
        %v3727 = vld [vmem:[#allocation11 + $0x10] sm:$0xf]
        %v3728 = vld [vmem:[#allocation11 + $0x14] sm:$0xf]
        %v3729 = vld [vmem:[#allocation11 + $0x18] sm:$0xf]
        %v3730 = vld [vmem:[#allocation11 + $0x1c] sm:$0xf]
        %v3731 = vld [vmem:[%s7] sm:$0x1]
        %v3733 = vlaneseq
        %v3734 = vshrl.u32 %v3733, 7
        %v3735 = vsub.s32 0, %v3734
        %v3736 = vrot.slane %v3731, %v3735
        %v3746 = vunpack.c.l.b16 %v3723
        %v3747 = vunpack.c.l.b16 %v3724
        %v3748 = vunpack.c.l.b16 %v3725
        %v3749 = vunpack.c.l.b16 %v3726
        %v3750 = vunpack.c.l.b16 %v3727
        %v3751 = vunpack.c.l.b16 %v3728
        %v3752 = vunpack.c.l.b16 %v3729
        %v3753 = vunpack.c.l.b16 %v3730
        %v3754 = vpack.c.b16 %v3747, %v3746
        %v3755 = vpack.c.b16 %v3749, %v3748
        %v3756 = vpack.c.b16 %v3751, %v3750
        %v3757 = vpack.c.b16 %v3753, %v3752
        %v3763 = vsel %vm474, %v3707, 0
        %v3766 = vsel %vm474, %v3708, 0
        %v3769 = vsel %vm474, %v3709, 0
        %v3772 = vsel %vm474, %v3710, 0
        %v3775 = vsel %vm474, %v3711, 0
        %v3778 = vsel %vm474, %v3712, 0
        %v3781 = vsel %vm474, %v3713, 0
        %v3784 = vsel %vm474, %v3714, 0
        %v3787 = vsel %vm474, %v3715, 0
        %v3790 = vsel %vm474, %v3716, 0
        %v3793 = vsel %vm474, %v3717, 0
        %v3796 = vsel %vm474, %v3718, 0
        %v3799 = vsel %vm474, %v3719, 0
        %v3802 = vsel %vm474, %v3720, 0
        %v3805 = vsel %vm474, %v3721, 0
        %v3808 = vsel %vm474, %v3722, 0
        %3810 = vmatprep.subr.bf16.mxu0 0
        %3811 = vmatpush1.bf16.msra.mxu0 0
        %3812 = vmatprep.subr.bf16.mxu0 0
        %3813 = vmatpush1.bf16.msra.mxu0 0
        %3814 = vmatprep.subr.bf16.mxu0 0
        %3815 = vmatpush1.bf16.msra.mxu0 0
        %3816 = vmatprep.subr.bf16.mxu0 0
        %3817 = vmatpush1.bf16.msra.mxu0 0
        %3818 = vmatprep.subr.bf16.mxu0 0
        %3819 = vmatpush1.bf16.msra.mxu0 %v3757
        %3820 = vmatprep.subr.bf16.mxu0 0
        %3821 = vmatpush1.bf16.msra.mxu0 %v3756
        %3822 = vmatprep.subr.bf16.mxu0 0
        %3823 = vmatpush1.bf16.msra.mxu0 %v3755
        %3824 = vmatprep.subr.bf16.mxu0 0
        %3825 = vmatpush1.bf16.msra.mxu0 %v3754
        %3826 = vmatprep.subr.bf16.mxu0 0
        %3827 = vmatpush2.bf16.msra.mxu0 0
        %3828 = vmatprep.subr.bf16.mxu0 0
        %3829 = vmatpush2.bf16.msra.mxu0 0
        %3830 = vmatprep.subr.bf16.mxu0 0
        %3831 = vmatpush2.bf16.msra.mxu0 0
        %3832 = vmatprep.subr.bf16.mxu0 0
        %3833 = vmatpush2.bf16.msra.mxu0 0
        %3834 = vmatprep.subr.bf16.mxu0 0
        %3835 = vmatpush2.bf16.msra.mxu0 0
        %3836 = vmatprep.subr.bf16.mxu0 0
        %3837 = vmatpush2.bf16.msra.mxu0 0
        %3838 = vmatprep.subr.bf16.mxu0 0
        %3839 = vmatpush2.bf16.msra.mxu0 0
        %3840 = vmatprep.subr.bf16.mxu0 0
        %3841 = vmatpush2.bf16.msra.mxu0 0
        %3842 = vmatprep.mubr.bf16.mxu0 0
        %3843 = vmatmul.mubr.bf16.gmra.mxu0 %v3763
        %v3844 = vpop.f32.mrf.mxu0
        %v3845 = vadd.f32 %v3736, %v3844
        %v3846 = vpop.f32.mrf.mxu0
        %v3847 = vpop.f32.mrf.mxu0
        %v3848 = vadd.f32 %v3736, %v3847
        %v3849 = vpop.f32.mrf.mxu0
        %3850 = vmatprep.mubr.bf16.mxu0 0
        %3851 = vmatmul.mubr.bf16.gmra.mxu0 %v3766
        %v3852 = vpop.f32.mrf.mxu0
        %v3853 = vadd.f32 %v3736, %v3852
        %v3854 = vpop.f32.mrf.mxu0
        %v3855 = vpop.f32.mrf.mxu0
        %v3856 = vadd.f32 %v3736, %v3855
        %v3857 = vpop.f32.mrf.mxu0
        %3858 = vmatprep.mubr.bf16.mxu0 0
        %3859 = vmatmul.mubr.bf16.gmra.mxu0 %v3769
        %v3860 = vpop.f32.mrf.mxu0
        %v3861 = vadd.f32 %v3736, %v3860
        %v3862 = vpop.f32.mrf.mxu0
        %v3863 = vpop.f32.mrf.mxu0
        %v3864 = vadd.f32 %v3736, %v3863
        %v3865 = vpop.f32.mrf.mxu0
        %3866 = vmatprep.mubr.bf16.mxu0 0
        %3867 = vmatmul.mubr.bf16.gmra.mxu0 %v3772
        %v3868 = vpop.f32.mrf.mxu0
        %v3869 = vadd.f32 %v3736, %v3868
        %v3870 = vpop.f32.mrf.mxu0
        %v3871 = vpop.f32.mrf.mxu0
        %v3872 = vadd.f32 %v3736, %v3871
        %v3873 = vpop.f32.mrf.mxu0
        %3874 = vmatprep.mubr.bf16.mxu0 0
        %3875 = vmatmul.mubr.bf16.gmra.mxu0 %v3775
        %v3876 = vpop.f32.mrf.mxu0
        %v3877 = vadd.f32 %v3736, %v3876
        %v3878 = vpop.f32.mrf.mxu0
        %v3879 = vpop.f32.mrf.mxu0
        %v3880 = vadd.f32 %v3736, %v3879
        %v3881 = vpop.f32.mrf.mxu0
        %3882 = vmatprep.mubr.bf16.mxu0 0
        %3883 = vmatmul.mubr.bf16.gmra.mxu0 %v3778
        %v3884 = vpop.f32.mrf.mxu0
        %v3885 = vadd.f32 %v3736, %v3884
        %v3886 = vpop.f32.mrf.mxu0
        %v3887 = vpop.f32.mrf.mxu0
        %v3888 = vadd.f32 %v3736, %v3887
        %v3889 = vpop.f32.mrf.mxu0
        %3890 = vmatprep.mubr.bf16.mxu0 0
        %3891 = vmatmul.mubr.bf16.gmra.mxu0 %v3781
        %v3892 = vpop.f32.mrf.mxu0
        %v3893 = vadd.f32 %v3736, %v3892
        %v3894 = vpop.f32.mrf.mxu0
        %v3895 = vpop.f32.mrf.mxu0
        %v3896 = vadd.f32 %v3736, %v3895
        %v3897 = vpop.f32.mrf.mxu0
        %3898 = vmatprep.mubr.bf16.mxu0 0
        %3899 = vmatmul.mubr.bf16.gmra.mxu0 %v3784
        %v3900 = vpop.f32.mrf.mxu0
        %v3901 = vadd.f32 %v3736, %v3900
        %v3902 = vpop.f32.mrf.mxu0
        %v3903 = vpop.f32.mrf.mxu0
        %v3904 = vadd.f32 %v3736, %v3903
        %v3905 = vpop.f32.mrf.mxu0
        %3906 = vmatprep.mubr.bf16.mxu0 0
        %3907 = vmatmul.mubr.bf16.gmra.mxu0 %v3787
        %v3908 = vpop.f32.mrf.mxu0
        %v3909 = vadd.f32 %v3736, %v3908
        %v3910 = vpop.f32.mrf.mxu0
        %v3911 = vpop.f32.mrf.mxu0
        %v3912 = vadd.f32 %v3736, %v3911
        %v3913 = vpop.f32.mrf.mxu0
        %3914 = vmatprep.mubr.bf16.mxu0 0
        %3915 = vmatmul.mubr.bf16.gmra.mxu0 %v3790
        %v3916 = vpop.f32.mrf.mxu0
        %v3917 = vadd.f32 %v3736, %v3916
        %v3918 = vpop.f32.mrf.mxu0
        %v3919 = vpop.f32.mrf.mxu0
        %v3920 = vadd.f32 %v3736, %v3919
        %v3921 = vpop.f32.mrf.mxu0
        %3922 = vmatprep.mubr.bf16.mxu0 0
        %3923 = vmatmul.mubr.bf16.gmra.mxu0 %v3793
        %v3924 = vpop.f32.mrf.mxu0
        %v3925 = vadd.f32 %v3736, %v3924
        %v3926 = vpop.f32.mrf.mxu0
        %v3927 = vpop.f32.mrf.mxu0
        %v3928 = vadd.f32 %v3736, %v3927
        %v3929 = vpop.f32.mrf.mxu0
        %3930 = vmatprep.mubr.bf16.mxu0 0
        %3931 = vmatmul.mubr.bf16.gmra.mxu0 %v3796
        %v3932 = vpop.f32.mrf.mxu0
        %v3933 = vadd.f32 %v3736, %v3932
        %v3934 = vpop.f32.mrf.mxu0
        %v3935 = vpop.f32.mrf.mxu0
        %v3936 = vadd.f32 %v3736, %v3935
        %v3937 = vpop.f32.mrf.mxu0
        %3938 = vmatprep.mubr.bf16.mxu0 0
        %3939 = vmatmul.mubr.bf16.gmra.mxu0 %v3799
        %v3940 = vpop.f32.mrf.mxu0
        %v3941 = vadd.f32 %v3736, %v3940
        %v3942 = vpop.f32.mrf.mxu0
        %v3943 = vpop.f32.mrf.mxu0
        %v3944 = vadd.f32 %v3736, %v3943
        %v3945 = vpop.f32.mrf.mxu0
        %3946 = vmatprep.mubr.bf16.mxu0 0
        %3947 = vmatmul.mubr.bf16.gmra.mxu0 %v3802
        %v3948 = vpop.f32.mrf.mxu0
        %v3949 = vadd.f32 %v3736, %v3948
        %v3950 = vpop.f32.mrf.mxu0
        %v3951 = vpop.f32.mrf.mxu0
        %v3952 = vadd.f32 %v3736, %v3951
        %v3953 = vpop.f32.mrf.mxu0
        %3954 = vmatprep.mubr.bf16.mxu0 0
        %3955 = vmatmul.mubr.bf16.gmra.mxu0 %v3805
        %v3956 = vpop.f32.mrf.mxu0
        %v3957 = vadd.f32 %v3736, %v3956
        %v3958 = vpop.f32.mrf.mxu0
        %v3959 = vpop.f32.mrf.mxu0
        %v3960 = vadd.f32 %v3736, %v3959
        %v3961 = vpop.f32.mrf.mxu0
        %3962 = vmatprep.mubr.bf16.mxu0 0
        %3963 = vmatmul.mubr.bf16.gmra.mxu0 %v3808
        %v3964 = vpop.f32.mrf.mxu0
        %v3965 = vadd.f32 %v3736, %v3964
        %v3966 = vpop.f32.mrf.mxu0
        %v3967 = vpop.f32.mrf.mxu0
        %v3968 = vadd.f32 %v3736, %v3967
        %v3969 = vpop.f32.mrf.mxu0
        %3970 = vdwg.mxu0
        %v3971 = vadd.f32 %v3845, %v442
        %v3972 = vadd.f32 %v3848, %v443
        %v3973 = vadd.f32 %v3853, %v444
        %v3974 = vadd.f32 %v3856, %v445
        %v3975 = vadd.f32 %v3861, %v446
        %v3976 = vadd.f32 %v3864, %v447
        %v3977 = vadd.f32 %v3869, %v448
        %v3978 = vadd.f32 %v3872, %v449
        %v3979 = vadd.f32 %v3877, %v450
        %v3980 = vadd.f32 %v3880, %v451
        %v3981 = vadd.f32 %v3885, %v452
        %v3982 = vadd.f32 %v3888, %v453
        %v3983 = vadd.f32 %v3893, %v454
        %v3984 = vadd.f32 %v3896, %v455
        %v3985 = vadd.f32 %v3901, %v456
        %v3986 = vadd.f32 %v3904, %v457
        %v3987 = vadd.f32 %v3909, %v458
        %v3988 = vadd.f32 %v3912, %v459
        %v3989 = vadd.f32 %v3917, %v460
        %v3990 = vadd.f32 %v3920, %v461
        %v3991 = vadd.f32 %v3925, %v462
        %v3992 = vadd.f32 %v3928, %v463
        %v3993 = vadd.f32 %v3933, %v464
        %v3994 = vadd.f32 %v3936, %v465
        %v3995 = vadd.f32 %v3941, %v466
        %v3996 = vadd.f32 %v3944, %v467
        %v3997 = vadd.f32 %v3949, %v468
        %v3998 = vadd.f32 %v3952, %v469
        %v3999 = vadd.f32 %v3957, %v470
        %v4000 = vadd.f32 %v3960, %v471
        %v4001 = vadd.f32 %v3965, %v472
        %v4002 = vadd.f32 %v3968, %v473
        %4035 = vrot.lane.b32.xlu0 %v3971, 64
        %v4036 = vpop.permute.xlu0 %4035
        %4037 = vrot.lane.b32.xlu0 %v3972, 64
        %v4038 = vpop.permute.xlu0 %4037
        %4039 = vrot.lane.b32.xlu0 %v3973, 64
        %v4040 = vpop.permute.xlu0 %4039
        %4041 = vrot.lane.b32.xlu0 %v3974, 64
        %v4042 = vpop.permute.xlu0 %4041
        %4043 = vrot.lane.b32.xlu0 %v3975, 64
        %v4044 = vpop.permute.xlu0 %4043
        %4045 = vrot.lane.b32.xlu0 %v3976, 64
        %v4046 = vpop.permute.xlu0 %4045
        %4047 = vrot.lane.b32.xlu0 %v3977, 64
        %v4048 = vpop.permute.xlu0 %4047
        %4049 = vrot.lane.b32.xlu0 %v3978, 64
        %v4050 = vpop.permute.xlu0 %4049
        %4051 = vrot.lane.b32.xlu0 %v3979, 64
        %v4052 = vpop.permute.xlu0 %4051
        %4053 = vrot.lane.b32.xlu0 %v3980, 64
        %v4054 = vpop.permute.xlu0 %4053
        %4055 = vrot.lane.b32.xlu0 %v3981, 64
        %v4056 = vpop.permute.xlu0 %4055
        %4057 = vrot.lane.b32.xlu0 %v3982, 64
        %v4058 = vpop.permute.xlu0 %4057
        %4059 = vrot.lane.b32.xlu0 %v3983, 64
        %v4060 = vpop.permute.xlu0 %4059
        %4061 = vrot.lane.b32.xlu0 %v3984, 64
        %v4062 = vpop.permute.xlu0 %4061
        %4063 = vrot.lane.b32.xlu0 %v3985, 64
        %v4064 = vpop.permute.xlu0 %4063
        %4065 = vrot.lane.b32.xlu0 %v3986, 64
        %v4066 = vpop.permute.xlu0 %4065
        %4067 = vrot.lane.b32.xlu0 %v3987, 64
        %v4068 = vpop.permute.xlu0 %4067
        %4069 = vrot.lane.b32.xlu0 %v3988, 64
        %v4070 = vpop.permute.xlu0 %4069
        %4071 = vrot.lane.b32.xlu0 %v3989, 64
        %v4072 = vpop.permute.xlu0 %4071
        %4073 = vrot.lane.b32.xlu0 %v3990, 64
        %v4074 = vpop.permute.xlu0 %4073
        %4075 = vrot.lane.b32.xlu0 %v3991, 64
        %v4076 = vpop.permute.xlu0 %4075
        %4077 = vrot.lane.b32.xlu0 %v3992, 64
        %v4078 = vpop.permute.xlu0 %4077
        %4079 = vrot.lane.b32.xlu0 %v3993, 64
        %v4080 = vpop.permute.xlu0 %4079
        %4081 = vrot.lane.b32.xlu0 %v3994, 64
        %v4082 = vpop.permute.xlu0 %4081
        %4083 = vrot.lane.b32.xlu0 %v3995, 64
        %v4084 = vpop.permute.xlu0 %4083
        %4085 = vrot.lane.b32.xlu0 %v3996, 64
        %v4086 = vpop.permute.xlu0 %4085
        %4087 = vrot.lane.b32.xlu0 %v3997, 64
        %v4088 = vpop.permute.xlu0 %4087
        %4089 = vrot.lane.b32.xlu0 %v3998, 64
        %v4090 = vpop.permute.xlu0 %4089
        %4091 = vrot.lane.b32.xlu0 %v3999, 64
        %v4092 = vpop.permute.xlu0 %4091
        %4093 = vrot.lane.b32.xlu0 %v4000, 64
        %v4094 = vpop.permute.xlu0 %4093
        %4095 = vrot.lane.b32.xlu0 %v4001, 64
        %v4096 = vpop.permute.xlu0 %4095
        %4097 = vrot.lane.b32.xlu0 %v4002, 64
        %v4098 = vpop.permute.xlu0 %4097
        %v4131 = vsel %vm474, %v2867, %v4036
        %v4132 = vsel %vm474, %v2868, %v4038
        %v4133 = vsel %vm474, %v2869, %v4040
        %v4134 = vsel %vm474, %v2870, %v4042
        %v4135 = vsel %vm474, %v2871, %v4044
        %v4136 = vsel %vm474, %v2872, %v4046
        %v4137 = vsel %vm474, %v2873, %v4048
        %v4138 = vsel %vm474, %v2874, %v4050
        %v4139 = vsel %vm474, %v2875, %v4052
        %v4140 = vsel %vm474, %v2876, %v4054
        %v4141 = vsel %vm474, %v2877, %v4056
        %v4142 = vsel %vm474, %v2878, %v4058
        %v4143 = vsel %vm474, %v2879, %v4060
        %v4144 = vsel %vm474, %v2880, %v4062
        %v4145 = vsel %vm474, %v2881, %v4064
        %v4146 = vsel %vm474, %v2882, %v4066
        %v4147 = vsel %vm474, %v2883, %v4068
        %v4148 = vsel %vm474, %v2884, %v4070
        %v4149 = vsel %vm474, %v2885, %v4072
        %v4150 = vsel %vm474, %v2886, %v4074
        %v4151 = vsel %vm474, %v2887, %v4076
        %v4152 = vsel %vm474, %v2888, %v4078
        %v4153 = vsel %vm474, %v2889, %v4080
        %v4154 = vsel %vm474, %v2890, %v4082
        %v4155 = vsel %vm474, %v2891, %v4084
        %v4156 = vsel %vm474, %v2892, %v4086
        %v4157 = vsel %vm474, %v2893, %v4088
        %v4158 = vsel %vm474, %v2894, %v4090
        %v4159 = vsel %vm474, %v2895, %v4092
        %v4160 = vsel %vm474, %v2896, %v4094
        %v4161 = vsel %vm474, %v2897, %v4096
        %v4162 = vsel %vm474, %v2898, %v4098
        %4163 = vst [vmem:[%s408] sm:$0xff] %v4131
        %4164 = vst [vmem:[%s408 + $0x8] sm:$0xff] %v4132
        %4165 = vst [vmem:[%s408 + $0x10] sm:$0xff] %v4133
        %4166 = vst [vmem:[%s408 + $0x18] sm:$0xff] %v4134
        %4167 = vst [vmem:[%s408 + $0x20] sm:$0xff] %v4135
        %4168 = vst [vmem:[%s408 + $0x28] sm:$0xff] %v4136
        %4169 = vst [vmem:[%s408 + $0x30] sm:$0xff] %v4137
        %4170 = vst [vmem:[%s408 + $0x38] sm:$0xff] %v4138
        %4171 = vst [vmem:[%s408 + $0x40] sm:$0xff] %v4139
        %4172 = vst [vmem:[%s408 + $0x48] sm:$0xff] %v4140
        %4173 = vst [vmem:[%s408 + $0x50] sm:$0xff] %v4141
        %4174 = vst [vmem:[%s408 + $0x58] sm:$0xff] %v4142
        %4175 = vst [vmem:[%s408 + $0x60] sm:$0xff] %v4143
        %4176 = vst [vmem:[%s408 + $0x68] sm:$0xff] %v4144
        %4177 = vst [vmem:[%s408 + $0x70] sm:$0xff] %v4145
        %4178 = vst [vmem:[%s408 + $0x78] sm:$0xff] %v4146
        %4179 = vst [vmem:[%s408 + $0x80] sm:$0xff] %v4147
        %4180 = vst [vmem:[%s408 + $0x88] sm:$0xff] %v4148
        %4181 = vst [vmem:[%s408 + $0x90] sm:$0xff] %v4149
        %4182 = vst [vmem:[%s408 + $0x98] sm:$0xff] %v4150
        %4183 = vst [vmem:[%s408 + $0xa0] sm:$0xff] %v4151
        %4184 = vst [vmem:[%s408 + $0xa8] sm:$0xff] %v4152
        %4185 = vst [vmem:[%s408 + $0xb0] sm:$0xff] %v4153
        %4186 = vst [vmem:[%s408 + $0xb8] sm:$0xff] %v4154
        %4187 = vst [vmem:[%s408 + $0xc0] sm:$0xff] %v4155
        %4188 = vst [vmem:[%s408 + $0xc8] sm:$0xff] %v4156
        %4189 = vst [vmem:[%s408 + $0xd0] sm:$0xff] %v4157
        %4190 = vst [vmem:[%s408 + $0xd8] sm:$0xff] %v4158
        %4191 = vst [vmem:[%s408 + $0xe0] sm:$0xff] %v4159
        %4192 = vst [vmem:[%s408 + $0xe8] sm:$0xff] %v4160
        %4193 = vst [vmem:[%s408 + $0xf0] sm:$0xff] %v4161
        %4194 = vst [vmem:[%s408 + $0xf8] sm:$0xff] %v4162
        %p4195 = scmp.lt.s32.totalorder %s26, 1
        %s4196 = scalar_select %p4195, %s26, 1
        %s4197 = smul.addr %s4196, 32
        %s4198 = smul.addr %s4197, 8
        %s4199 = scalar_lea.vmem %s8, %s4198
        // Predicated region
        $region73: #{gated_masked_conv_forward.1} parent=51 // pred_check
          %p4200 = pneg %p222
        $region74: #{gated_masked_conv_forward.1} parent=51 // pred_check_branch
          %4202 = sbr.rel (%p4200) target = $region76
        $region75: #{gated_masked_conv_forward.1} parent=51 // pred_region
          _
        $region76: #{gated_masked_conv_forward.1} parent=51 // pred_fallthru
          _
      $region52: #{gated_masked_conv_forward.1} parent=5 // pred_fallthru
        _
      %p4203 = scmp.le.s32.totalorder 2, %s21
      // Predicated region
      $region77: #{gated_masked_conv_forward.1} parent=5 // pred_check
        %p4204 = pneg %p4203
      $region78: #{gated_masked_conv_forward.1} parent=5 // pred_check_branch
        %4206 = sbr.rel (%p4204) target = $region80
      $region79: #{gated_masked_conv_forward.1} parent=5 // pred_region
        %s4207 = ssub.s32 %s21, 2
        // Predicated region
        $region81: #{gated_masked_conv_forward.1} parent=79 // pred_check
          %p4208 = pneg %p228
        $region82: #{gated_masked_conv_forward.1} parent=79 // pred_check_branch
          %4210 = sbr.rel (%p4208) target = $region84
        $region83: #{gated_masked_conv_forward.1} parent=79 // pred_region
          %p4211 = scmp.lt.s32.totalorder %s27, 1
          %s4212 = scalar_select %p4211, %s27, 1
          %s4213 = smul.addr %s4212, 32
          %s4214 = smul.addr %s4213, 8
          %s4215 = scalar_lea.vmem %s8, %s4214
        $region84: #{gated_masked_conv_forward.1} parent=79 // pred_fallthru
          _
      $region80: #{gated_masked_conv_forward.1} parent=5 // pred_fallthru
        _
    $region6: #{gated_masked_conv_forward.1} parent=1 // loop_footer
      %s25 = sadd.s32 1, %s21
    $region7: #{gated_masked_conv_forward.1} parent=1 // loop_footer_branch
      %20 = sbr.rel target = $region3
    $region8: #{gated_masked_conv_forward.1} parent=1 // loop_exit
      _
    %4216 = vsyncpa [#allocation5], 1
    %s4217 = scalar_lea.sflag [#allocation5], 1
    %4218 = vsyncpa %s4217, 1
    %4219 = vsyncpa [#allocation7], 1
    %s4220 = scalar_lea.sflag [#allocation7], 1
    %4221 = vsyncpa %s4220, 1
    %4222 = vsyncpa [#allocation10], 1

</llo_original>
